<compile_context>
chip_gen: v7x
topology: tpu7x:2x2x1
jax: 0.10.0
libtpu: 0.0.40
codegen_flags: <defaults>
</compile_context>

<pallas_src>
import functools

import jax
import jax.numpy as jnp
from jax.experimental import pallas as pl
from jax.experimental.pallas import tpu as pltpu

N_NODES = 4
N_OPS = 5          # none, skip, linear, linear_relu, linear_tanh
N_LIN_OPS = 3      # the three linear-based primitives carry weights
BN_EPS = 1e-5
SLAB_ALIGN = 256   # pad per-state weight slabs to a multiple of 256 lanes (MXU width)


def _n_edges(n_nodes):
    return n_nodes * (n_nodes + 3) // 2   # sum_{i=0}^{n-1} (2 + i)


def _edge_id(i, j):
    # flat index of edge (node i, input state j) in the original nested ordering
    return i * (i + 3) // 2 + j


def _state_layout(n_nodes, C):
    """Column offset / padded width of each state's weight slab inside wcat."""
    cols, widths = [], []
    total = 0
    for j in range(n_nodes + 1):
        n_consumers = n_nodes - max(0, j - 1)
        real = n_consumers * N_LIN_OPS * C
        padded = -(-real // SLAB_ALIGN) * SLAB_ALIGN
        cols.append(total)
        widths.append(padded)
        total += padded
    return tuple(cols), tuple(widths), total


def _search_cell_kernel(wdag_ref,      # SMEM (n_edges * N_OPS,) f32  edge/op mixing weights
                        s0_ref,        # VMEM (B, C) f32
                        s1_ref,        # VMEM (B, C) f32
                        w0_ref,        # VMEM (C, C) bf16   preproc0 linear weight
                        w1_ref,        # VMEM (C, C) bf16   preproc1 linear weight
                        bcat_ref,      # VMEM (1, total_cols) f32  packed biases (state-major)
                        wcat_hbm,      # ANY/HBM (C, total_cols) bf16  packed edge weights
                        out_ref,       # VMEM (B, n_nodes * C) f32
                        wbuf,          # VMEM scratch (2, C, max_width) bf16  double buffer
                        sem,           # DMA semaphores (2,)
                        *, n_nodes, C, cols, widths):
    n_states = n_nodes + 1

    def slab_copy(j, slot):
        w = widths[j]
        return pltpu.make_async_copy(
            wcat_hbm.at[:, cols[j]:cols[j] + w],
            wbuf.at[slot, :, :w],
            sem.at[slot])

    # Kick off state-0's weight slab DMA immediately; it lands under the preproc.
    slab_copy(0, 0).start()

    def mlp_preproc(x, w_ref):
        # Linear(bias=False) -> BatchNorm1d(affine=False, batch stats) -> ReLU
        y = jnp.dot(x.astype(jnp.bfloat16), w_ref[...],
                    preferred_element_type=jnp.float32)
        mean = jnp.mean(y, axis=0, keepdims=True)
        var = jnp.mean(y * y, axis=0, keepdims=True) - mean * mean   # single pass
        y = (y - mean) * jax.lax.rsqrt(var + BN_EPS)
        return jnp.maximum(y, 0.0)

    s0 = mlp_preproc(s0_ref[...], w0_ref)
    s1 = mlp_preproc(s1_ref[...], w1_ref)

    acts = (lambda z: z,                      # linear
            lambda z: jnp.maximum(z, 0.0),    # linear + relu
            jnp.tanh)                         # linear + tanh

    states = [s0, s1]
    node_acc = [None] * n_nodes

    # Process producer states in order; state j feeds every node i with i >= max(0, j-1).
    for j in range(n_states):
        slot = j & 1
        consumers = list(range(max(0, j - 1), n_nodes))

        # Read this state's SMEM mixing scalars BEFORE the DMA wait.
        wmix = []
        for i in consumers:
            base = _edge_id(i, j) * N_OPS
            wmix.append(tuple(wdag_ref[base + 1 + t] for t in range(1 + N_LIN_OPS)))

        # Wait for this state's weight slab, then prefetch the next slab into the
        # other slot so its DMA hides under this state's wide dot.
        slab_copy(j, slot).wait()
        if j + 1 < n_states:
            slab_copy(j + 1, 1 - slot).start()

        x = states[j]
        w = widths[j]
        # One wide, lane-dense MXU matmul for every (edge, op) consuming state j,
        # with the packed bias row added once. Pad columns (zero W, zero b) are
        # computed but never read back.
        y_all = jnp.dot(x.astype(jnp.bfloat16), wbuf[slot, :, :w],
                        preferred_element_type=jnp.float32) \
            + bcat_ref[:, cols[j]:cols[j] + w]

        for ci, i in enumerate(consumers):
            w_skip = wmix[ci][0]
            mixed = w_skip * x                       # op1: skip_connect (op0 'none' is zero)
            for k in range(N_LIN_OPS):
                off = (ci * N_LIN_OPS + k) * C
                mixed = mixed + wmix[ci][1 + k] * acts[k](y_all[:, off:off + C])
            node_acc[i] = mixed if node_acc[i] is None else node_acc[i] + mixed

        # After consuming state j, node (j-1) has seen all of its inputs:
        # write its slice of the output immediately and expose it as a state.
        done = j - 1
        if 0 <= done < n_nodes:
            s_new = node_acc[done]
            out_ref[:, done * C:(done + 1) * C] = s_new
            states.append(s_new)


def pack_search_cell_params(w0, w1, we, be, *, n_nodes=N_NODES):
    """One-time parameter packing (call when weights change, NOT every forward).

    we: (n_edges, N_LIN_OPS, C, C), be: (n_edges, N_LIN_OPS, C).
    Returns (w0_bf16, w1_bf16, wcat_bf16 (C, total_cols), bcat_f32 (1, total_cols)),
    columns ordered state-major by (state j, consuming node i, op k), each state's
    slab zero-padded to a multiple of SLAB_ALIGN columns.
    """
    C = w0.shape[0]
    _, widths, _ = _state_layout(n_nodes, C)
    w_blocks, b_blocks = [], []
    for j in range(n_nodes + 1):
        ws, bs = [], []
        for i in range(max(0, j - 1), n_nodes):
            e = _edge_id(i, j)
            for k in range(N_LIN_OPS):
                ws.append(we[e, k])          # (C, C)
                bs.append(be[e, k])          # (C,)
        pad = widths[j] - len(ws) * C
        if pad:
            ws.append(jnp.zeros((C, pad), we.dtype))
            bs.append(jnp.zeros((pad,), be.dtype))
        w_blocks.extend(ws)
        b_blocks.extend(bs)
    wcat = jnp.concatenate(w_blocks, axis=1).astype(jnp.bfloat16)
    bcat = jnp.concatenate(b_blocks, axis=0)[None, :].astype(jnp.float32)
    return w0.astype(jnp.bfloat16), w1.astype(jnp.bfloat16), wcat, bcat


@functools.partial(jax.jit, static_argnames=("n_nodes",))
def search_cell_forward(s0, s1, w_dag, w0b, w1b, wcat, bcat, *, n_nodes=N_NODES):
    """s0, s1: (B, C); w_dag: (n_edges, N_OPS); packed params from pack_search_cell_params.

    Returns (B, n_nodes * C) float32.
    """
    B, C = s0.shape
    n_edges = _n_edges(n_nodes)
    cols, widths, total_cols = _state_layout(n_nodes, C)
    max_w = max(widths)

    wdag_flat = jnp.reshape(w_dag.astype(jnp.float32), (n_edges * N_OPS,))  # 1D -> cheap SMEM

    kernel = functools.partial(_search_cell_kernel, n_nodes=n_nodes, C=C,
                               cols=cols, widths=widths)
    vmem = pl.BlockSpec(memory_space=pltpu.MemorySpace.VMEM)
    smem = pl.BlockSpec(memory_space=pltpu.MemorySpace.SMEM)
    hbm = pl.BlockSpec(memory_space=pl.ANY)

    flops = 2 * B * C * (2 * C + total_cols)
    transcendentals = n_edges * B * C + 2 * C
    bytes_accessed = (2 * B * C * 4                 # s0, s1
                      + 2 * C * C * 2               # w0, w1 (bf16)
                      + C * total_cols * 2          # wcat (bf16)
                      + total_cols * 4              # bcat
                      + n_edges * N_OPS * 4         # wdag
                      + B * n_nodes * C * 4)        # out

    return pl.pallas_call(
        kernel,
        out_shape=jax.ShapeDtypeStruct((B, n_nodes * C), jnp.float32),
        in_specs=[smem, vmem, vmem, vmem, vmem, vmem, hbm],
        out_specs=vmem,
        scratch_shapes=[pltpu.VMEM((2, C, max_w), jnp.bfloat16),
                        pltpu.SemaphoreType.DMA((2,))],
        cost_estimate=pl.CostEstimate(flops=flops,
                                      transcendentals=transcendentals,
                                      bytes_accessed=bytes_accessed),
    )(wdag_flat, s0, s1, w0b, w1b, bcat, wcat)


if __name__ == "__main__":
    B, C = 8, 128
    n_edges = _n_edges(N_NODES)

    key = jax.random.PRNGKey(0)
    k_s0, k_s1, k_w0, k_w1, k_we, k_be, k_alpha = jax.random.split(key, 7)

    # Inputs (previous-cell outputs), both already at C features (reduction_p=False).
    s0 = jax.random.normal(k_s0, (B, C), jnp.float32)
    s1 = jax.random.normal(k_s1, (B, C), jnp.float32)

    # Deterministic parameter init (PyTorch-Linear-style uniform bound 1/sqrt(C)).
    bound = 1.0 / jnp.sqrt(jnp.float32(C))
    w0 = jax.random.uniform(k_w0, (C, C), jnp.float32, -bound, bound)
    w1 = jax.random.uniform(k_w1, (C, C), jnp.float32, -bound, bound)
    we = jax.random.uniform(k_we, (n_edges, N_LIN_OPS, C, C), jnp.float32, -bound, bound)
    be = jax.random.uniform(k_be, (n_edges, N_LIN_OPS, C), jnp.float32, -bound, bound)

    # Architecture weights: softmax over ops per edge (flattened list-of-lists).
    alphas = jax.random.normal(k_alpha, (n_edges, N_OPS), jnp.float32)
    w_dag = jax.nn.softmax(alphas, axis=-1)

    # One-time packing: NOT part of the per-forward path.
    params = jax.block_until_ready(pack_search_cell_params(w0, w1, we, be, n_nodes=N_NODES))

    out = search_cell_forward(s0, s1, w_dag, *params, n_nodes=N_NODES)
    jax.block_until_ready(out)
    assert out.shape == (B, N_NODES * C)
    print("KERNEL_OK")
</pallas_src>

<mosaic_0001>
module attributes {stable_mosaic.version = 11 : i64} {
  func.func @_search_cell_kernel(%arg0: memref<70xf32, #tpu.memory_space<smem>>, %arg1: memref<8x128xf32, #tpu.memory_space<vmem>>, %arg2: memref<8x128xf32, #tpu.memory_space<vmem>>, %arg3: memref<128x128xbf16, #tpu.memory_space<vmem>>, %arg4: memref<128x128xbf16, #tpu.memory_space<vmem>>, %arg5: memref<1x5632xf32, #tpu.memory_space<vmem>>, %arg6: memref<128x5632xbf16, #tpu.memory_space<any>>, %arg7: memref<8x512xf32, #tpu.memory_space<vmem>>, %arg8: memref<2x128x1536xbf16, #tpu.memory_space<vmem>>, %arg9: memref<2x!tpu.dma_semaphore, #tpu.memory_space<semaphore_mem>>) attributes {dimension_semantics = [], scalar_prefetch = 0 : i64, scratch_operands = 2 : i64, tpu.core_type = #tpu.core_type<tc>} {
    %c0_i32 = arith.constant 0 : i32
    %c0_i32_0 = arith.constant 0 : i32
    %c0_i32_1 = arith.constant 0 : i32
    %c0_i32_2 = arith.constant 0 : i32
    %0 = tpu.memref_slice %arg6[%c0_i32_1, %c0_i32_2] : memref<128x5632xbf16, #tpu.memory_space<any>> -> memref<128x1536xbf16, #tpu.memory_space<any>>
    %c0_i32_3 = arith.constant 0 : i32
    %c0_i32_4 = arith.constant 0 : i32
    %1 = tpu.memref_slice %arg8[%c0_i32, %c0_i32_3, %c0_i32_4] : memref<2x128x1536xbf16, #tpu.memory_space<vmem>> -> memref<1x128x1536xbf16, #tpu.memory_space<vmem>>
    %2 = tpu.memref_squeeze %1 : memref<1x128x1536xbf16, #tpu.memory_space<vmem>> -> memref<128x1536xbf16, #tpu.memory_space<vmem>>
    %3 = tpu.memref_slice %arg9[%c0_i32_0] : memref<2x!tpu.dma_semaphore, #tpu.memory_space<semaphore_mem>> -> memref<1x!tpu.dma_semaphore, #tpu.memory_space<semaphore_mem>>
    %4 = tpu.memref_squeeze %3 : memref<1x!tpu.dma_semaphore, #tpu.memory_space<semaphore_mem>> -> memref<!tpu.dma_semaphore, #tpu.memory_space<semaphore_mem>>
    tpu.enqueue_dma source(%0 : memref<128x1536xbf16, #tpu.memory_space<any>>) target(%2 : memref<128x1536xbf16, #tpu.memory_space<vmem>>) target_semaphore(%4 : memref<!tpu.dma_semaphore, #tpu.memory_space<semaphore_mem>>)
    %c0 = arith.constant 0 : index
    %c0_5 = arith.constant 0 : index
    %5 = vector.load %arg1[%c0, %c0_5] : memref<8x128xf32, #tpu.memory_space<vmem>>, vector<8x128xf32>
    %6 = arith.truncf %5 : vector<8x128xf32> to vector<8x128xbf16>
    %c0_6 = arith.constant 0 : index
    %c0_7 = arith.constant 0 : index
    %7 = vector.load %arg3[%c0_6, %c0_7] : memref<128x128xbf16, #tpu.memory_space<vmem>>, vector<128x128xbf16>
    %cst = arith.constant dense<0.000000e+00> : vector<8x128xf32>
    %8 = tpu.matmul %6, %7, %cst {dimension_numbers = #tpu.dot_dimension_numbers<[1], [0], [0], [1], [0, 0, 1, 1], [], []>} : vector<8x128xbf16>, vector<128x128xbf16>, vector<8x128xf32> -> vector<8x128xf32>
    %cst_8 = arith.constant dense<0.000000e+00> : vector<128xf32>
    %9 = vector.multi_reduction <add>, %8, %cst_8 [0] : vector<8x128xf32> to vector<128xf32>
    %10 = vector.shape_cast %9 : vector<128xf32> to vector<1x128xf32>
    %cst_9 = arith.constant 8.000000e+00 : f32
    %11 = vector.broadcast %cst_9 : f32 to vector<1x128xf32>
    %12 = arith.divf %10, %11 : vector<1x128xf32>
    %13 = arith.mulf %8, %8 : vector<8x128xf32>
    %cst_10 = arith.constant dense<0.000000e+00> : vector<128xf32>
    %14 = vector.multi_reduction <add>, %13, %cst_10 [0] : vector<8x128xf32> to vector<128xf32>
    %15 = vector.shape_cast %14 : vector<128xf32> to vector<1x128xf32>
    %cst_11 = arith.constant 8.000000e+00 : f32
    %16 = vector.broadcast %cst_11 : f32 to vector<1x128xf32>
    %17 = arith.divf %15, %16 : vector<1x128xf32>
    %18 = arith.mulf %12, %12 : vector<1x128xf32>
    %19 = arith.subf %17, %18 : vector<1x128xf32>
    %20 = vector.broadcast %12 : vector<1x128xf32> to vector<8x128xf32>
    %21 = arith.subf %8, %20 : vector<8x128xf32>
    %cst_12 = arith.constant 9.99999974E-6 : f32
    %22 = vector.broadcast %cst_12 : f32 to vector<1x128xf32>
    %23 = arith.addf %19, %22 : vector<1x128xf32>
    %24 = math.rsqrt %23 : vector<1x128xf32>
    %25 = vector.broadcast %24 : vector<1x128xf32> to vector<8x128xf32>
    %26 = arith.mulf %21, %25 : vector<8x128xf32>
    %cst_13 = arith.constant 0.000000e+00 : f32
    %27 = vector.broadcast %cst_13 : f32 to vector<8x128xf32>
    %28 = arith.maximumf %26, %27 : vector<8x128xf32>
    %c0_14 = arith.constant 0 : index
    %c0_15 = arith.constant 0 : index
    %29 = vector.load %arg2[%c0_14, %c0_15] : memref<8x128xf32, #tpu.memory_space<vmem>>, vector<8x128xf32>
    %30 = arith.truncf %29 : vector<8x128xf32> to vector<8x128xbf16>
    %c0_16 = arith.constant 0 : index
    %c0_17 = arith.constant 0 : index
    %31 = vector.load %arg4[%c0_16, %c0_17] : memref<128x128xbf16, #tpu.memory_space<vmem>>, vector<128x128xbf16>
    %cst_18 = arith.constant dense<0.000000e+00> : vector<8x128xf32>
    %32 = tpu.matmul %30, %31, %cst_18 {dimension_numbers = #tpu.dot_dimension_numbers<[1], [0], [0], [1], [0, 0, 1, 1], [], []>} : vector<8x128xbf16>, vector<128x128xbf16>, vector<8x128xf32> -> vector<8x128xf32>
    %cst_19 = arith.constant dense<0.000000e+00> : vector<128xf32>
    %33 = vector.multi_reduction <add>, %32, %cst_19 [0] : vector<8x128xf32> to vector<128xf32>
    %34 = vector.shape_cast %33 : vector<128xf32> to vector<1x128xf32>
    %cst_20 = arith.constant 8.000000e+00 : f32
    %35 = vector.broadcast %cst_20 : f32 to vector<1x128xf32>
    %36 = arith.divf %34, %35 : vector<1x128xf32>
    %37 = arith.mulf %32, %32 : vector<8x128xf32>
    %cst_21 = arith.constant dense<0.000000e+00> : vector<128xf32>
    %38 = vector.multi_reduction <add>, %37, %cst_21 [0] : vector<8x128xf32> to vector<128xf32>
    %39 = vector.shape_cast %38 : vector<128xf32> to vector<1x128xf32>
    %cst_22 = arith.constant 8.000000e+00 : f32
    %40 = vector.broadcast %cst_22 : f32 to vector<1x128xf32>
    %41 = arith.divf %39, %40 : vector<1x128xf32>
    %42 = arith.mulf %36, %36 : vector<1x128xf32>
    %43 = arith.subf %41, %42 : vector<1x128xf32>
    %44 = vector.broadcast %36 : vector<1x128xf32> to vector<8x128xf32>
    %45 = arith.subf %32, %44 : vector<8x128xf32>
    %cst_23 = arith.constant 9.99999974E-6 : f32
    %46 = vector.broadcast %cst_23 : f32 to vector<1x128xf32>
    %47 = arith.addf %43, %46 : vector<1x128xf32>
    %48 = math.rsqrt %47 : vector<1x128xf32>
    %49 = vector.broadcast %48 : vector<1x128xf32> to vector<8x128xf32>
    %50 = arith.mulf %45, %49 : vector<8x128xf32>
    %cst_24 = arith.constant 0.000000e+00 : f32
    %51 = vector.broadcast %cst_24 : f32 to vector<8x128xf32>
    %52 = arith.maximumf %50, %51 : vector<8x128xf32>
    %c1 = arith.constant 1 : index
    %53 = memref.load %arg0[%c1] : memref<70xf32, #tpu.memory_space<smem>>
    %c2 = arith.constant 2 : index
    %54 = memref.load %arg0[%c2] : memref<70xf32, #tpu.memory_space<smem>>
    %c3 = arith.constant 3 : index
    %55 = memref.load %arg0[%c3] : memref<70xf32, #tpu.memory_space<smem>>
    %c4 = arith.constant 4 : index
    %56 = memref.load %arg0[%c4] : memref<70xf32, #tpu.memory_space<smem>>
    %c11 = arith.constant 11 : index
    %57 = memref.load %arg0[%c11] : memref<70xf32, #tpu.memory_space<smem>>
    %c12 = arith.constant 12 : index
    %58 = memref.load %arg0[%c12] : memref<70xf32, #tpu.memory_space<smem>>
    %c13 = arith.constant 13 : index
    %59 = memref.load %arg0[%c13] : memref<70xf32, #tpu.memory_space<smem>>
    %c14 = arith.constant 14 : index
    %60 = memref.load %arg0[%c14] : memref<70xf32, #tpu.memory_space<smem>>
    %c26 = arith.constant 26 : index
    %61 = memref.load %arg0[%c26] : memref<70xf32, #tpu.memory_space<smem>>
    %c27 = arith.constant 27 : index
    %62 = memref.load %arg0[%c27] : memref<70xf32, #tpu.memory_space<smem>>
    %c28 = arith.constant 28 : index
    %63 = memref.load %arg0[%c28] : memref<70xf32, #tpu.memory_space<smem>>
    %c29 = arith.constant 29 : index
    %64 = memref.load %arg0[%c29] : memref<70xf32, #tpu.memory_space<smem>>
    %c46 = arith.constant 46 : index
    %65 = memref.load %arg0[%c46] : memref<70xf32, #tpu.memory_space<smem>>
    %c47 = arith.constant 47 : index
    %66 = memref.load %arg0[%c47] : memref<70xf32, #tpu.memory_space<smem>>
    %c48 = arith.constant 48 : index
    %67 = memref.load %arg0[%c48] : memref<70xf32, #tpu.memory_space<smem>>
    %c49 = arith.constant 49 : index
    %68 = memref.load %arg0[%c49] : memref<70xf32, #tpu.memory_space<smem>>
    %c0_i32_25 = arith.constant 0 : i32
    %c0_i32_26 = arith.constant 0 : i32
    %c0_i32_27 = arith.constant 0 : i32
    %c0_i32_28 = arith.constant 0 : i32
    %69 = tpu.memref_slice %arg6[%c0_i32_27, %c0_i32_28] : memref<128x5632xbf16, #tpu.memory_space<any>> -> memref<128x1536xbf16, #tpu.memory_space<any>>
    %c0_i32_29 = arith.constant 0 : i32
    %c0_i32_30 = arith.constant 0 : i32
    %70 = tpu.memref_slice %arg8[%c0_i32_25, %c0_i32_29, %c0_i32_30] : memref<2x128x1536xbf16, #tpu.memory_space<vmem>> -> memref<1x128x1536xbf16, #tpu.memory_space<vmem>>
    %71 = tpu.memref_squeeze %70 : memref<1x128x1536xbf16, #tpu.memory_space<vmem>> -> memref<128x1536xbf16, #tpu.memory_space<vmem>>
    %72 = tpu.memref_slice %arg9[%c0_i32_26] : memref<2x!tpu.dma_semaphore, #tpu.memory_space<semaphore_mem>> -> memref<1x!tpu.dma_semaphore, #tpu.memory_space<semaphore_mem>>
    %73 = tpu.memref_squeeze %72 : memref<1x!tpu.dma_semaphore, #tpu.memory_space<semaphore_mem>> -> memref<!tpu.dma_semaphore, #tpu.memory_space<semaphore_mem>>
    tpu.wait_dma2 semaphore(%73 : memref<!tpu.dma_semaphore, #tpu.memory_space<semaphore_mem>>) src(%69 : memref<128x1536xbf16, #tpu.memory_space<any>>) dst(%71 : memref<128x1536xbf16, #tpu.memory_space<vmem>>)
    %c1_i32 = arith.constant 1 : i32
    %c1_i32_31 = arith.constant 1 : i32
    %c0_i32_32 = arith.constant 0 : i32
    %c1536_i32 = arith.constant 1536 : i32
    %74 = tpu.memref_slice %arg6[%c0_i32_32, %c1536_i32] : memref<128x5632xbf16, #tpu.memory_space<any>> -> memref<128x1536xbf16, #tpu.memory_space<any>>
    %c0_i32_33 = arith.constant 0 : i32
    %c0_i32_34 = arith.constant 0 : i32
    %75 = tpu.memref_slice %arg8[%c1_i32, %c0_i32_33, %c0_i32_34] : memref<2x128x1536xbf16, #tpu.memory_space<vmem>> -> memref<1x128x1536xbf16, #tpu.memory_space<vmem>>
    %76 = tpu.memref_squeeze %75 : memref<1x128x1536xbf16, #tpu.memory_space<vmem>> -> memref<128x1536xbf16, #tpu.memory_space<vmem>>
    %77 = tpu.memref_slice %arg9[%c1_i32_31] : memref<2x!tpu.dma_semaphore, #tpu.memory_space<semaphore_mem>> -> memref<1x!tpu.dma_semaphore, #tpu.memory_space<semaphore_mem>>
    %78 = tpu.memref_squeeze %77 : memref<1x!tpu.dma_semaphore, #tpu.memory_space<semaphore_mem>> -> memref<!tpu.dma_semaphore, #tpu.memory_space<semaphore_mem>>
    tpu.enqueue_dma source(%74 : memref<128x1536xbf16, #tpu.memory_space<any>>) target(%76 : memref<128x1536xbf16, #tpu.memory_space<vmem>>) target_semaphore(%78 : memref<!tpu.dma_semaphore, #tpu.memory_space<semaphore_mem>>)
    %79 = arith.truncf %28 : vector<8x128xf32> to vector<8x128xbf16>
    %c0_35 = arith.constant 0 : index
    %c0_36 = arith.constant 0 : index
    %c0_37 = arith.constant 0 : index
    %80 = vector.load %arg8[%c0_35, %c0_36, %c0_37] : memref<2x128x1536xbf16, #tpu.memory_space<vmem>>, vector<1x128x1536xbf16>
    %81 = vector.shape_cast %80 : vector<1x128x1536xbf16> to vector<128x1536xbf16>
    %cst_38 = arith.constant dense<0.000000e+00> : vector<8x1536xf32>
    %82 = tpu.matmul %79, %81, %cst_38 {dimension_numbers = #tpu.dot_dimension_numbers<[1], [0], [0], [1], [0, 0, 1, 1], [], []>} : vector<8x128xbf16>, vector<128x1536xbf16>, vector<8x1536xf32> -> vector<8x1536xf32>
    %c0_39 = arith.constant 0 : index
    %c0_40 = arith.constant 0 : index
    %83 = vector.load %arg5[%c0_39, %c0_40] : memref<1x5632xf32, #tpu.memory_space<vmem>>, vector<1x1536xf32>
    %84 = vector.broadcast %83 : vector<1x1536xf32> to vector<8x1536xf32>
    %85 = arith.addf %82, %84 : vector<8x1536xf32>
    %86 = vector.broadcast %53 : f32 to vector<8x128xf32>
    %87 = arith.mulf %86, %28 : vector<8x128xf32>
    %88 = vector.extract_strided_slice %85 {offsets = [0, 0], sizes = [8, 128], strides = [1, 1]} : vector<8x1536xf32> to vector<8x128xf32>
    %89 = vector.broadcast %54 : f32 to vector<8x128xf32>
    %90 = arith.mulf %89, %88 : vector<8x128xf32>
    %91 = arith.addf %87, %90 : vector<8x128xf32>
    %92 = vector.extract_strided_slice %85 {offsets = [0, 128], sizes = [8, 128], strides = [1, 1]} : vector<8x1536xf32> to vector<8x128xf32>
    %cst_41 = arith.constant 0.000000e+00 : f32
    %93 = vector.broadcast %cst_41 : f32 to vector<8x128xf32>
    %94 = arith.maximumf %92, %93 : vector<8x128xf32>
    %95 = vector.broadcast %55 : f32 to vector<8x128xf32>
    %96 = arith.mulf %95, %94 : vector<8x128xf32>
    %97 = arith.addf %91, %96 : vector<8x128xf32>
    %98 = vector.extract_strided_slice %85 {offsets = [0, 256], sizes = [8, 128], strides = [1, 1]} : vector<8x1536xf32> to vector<8x128xf32>
    %99 = math.tanh %98 : vector<8x128xf32>
    %100 = vector.broadcast %56 : f32 to vector<8x128xf32>
    %101 = arith.mulf %100, %99 : vector<8x128xf32>
    %102 = arith.addf %97, %101 : vector<8x128xf32>
    %103 = vector.broadcast %57 : f32 to vector<8x128xf32>
    %104 = arith.mulf %103, %28 : vector<8x128xf32>
    %105 = vector.extract_strided_slice %85 {offsets = [0, 384], sizes = [8, 128], strides = [1, 1]} : vector<8x1536xf32> to vector<8x128xf32>
    %106 = vector.broadcast %58 : f32 to vector<8x128xf32>
    %107 = arith.mulf %106, %105 : vector<8x128xf32>
    %108 = arith.addf %104, %107 : vector<8x128xf32>
    %109 = vector.extract_strided_slice %85 {offsets = [0, 512], sizes = [8, 128], strides = [1, 1]} : vector<8x1536xf32> to vector<8x128xf32>
    %cst_42 = arith.constant 0.000000e+00 : f32
    %110 = vector.broadcast %cst_42 : f32 to vector<8x128xf32>
    %111 = arith.maximumf %109, %110 : vector<8x128xf32>
    %112 = vector.broadcast %59 : f32 to vector<8x128xf32>
    %113 = arith.mulf %112, %111 : vector<8x128xf32>
    %114 = arith.addf %108, %113 : vector<8x128xf32>
    %115 = vector.extract_strided_slice %85 {offsets = [0, 640], sizes = [8, 128], strides = [1, 1]} : vector<8x1536xf32> to vector<8x128xf32>
    %116 = math.tanh %115 : vector<8x128xf32>
    %117 = vector.broadcast %60 : f32 to vector<8x128xf32>
    %118 = arith.mulf %117, %116 : vector<8x128xf32>
    %119 = arith.addf %114, %118 : vector<8x128xf32>
    %120 = vector.broadcast %61 : f32 to vector<8x128xf32>
    %121 = arith.mulf %120, %28 : vector<8x128xf32>
    %122 = vector.extract_strided_slice %85 {offsets = [0, 768], sizes = [8, 128], strides = [1, 1]} : vector<8x1536xf32> to vector<8x128xf32>
    %123 = vector.broadcast %62 : f32 to vector<8x128xf32>
    %124 = arith.mulf %123, %122 : vector<8x128xf32>
    %125 = arith.addf %121, %124 : vector<8x128xf32>
    %126 = vector.extract_strided_slice %85 {offsets = [0, 896], sizes = [8, 128], strides = [1, 1]} : vector<8x1536xf32> to vector<8x128xf32>
    %cst_43 = arith.constant 0.000000e+00 : f32
    %127 = vector.broadcast %cst_43 : f32 to vector<8x128xf32>
    %128 = arith.maximumf %126, %127 : vector<8x128xf32>
    %129 = vector.broadcast %63 : f32 to vector<8x128xf32>
    %130 = arith.mulf %129, %128 : vector<8x128xf32>
    %131 = arith.addf %125, %130 : vector<8x128xf32>
    %132 = vector.extract_strided_slice %85 {offsets = [0, 1024], sizes = [8, 128], strides = [1, 1]} : vector<8x1536xf32> to vector<8x128xf32>
    %133 = math.tanh %132 : vector<8x128xf32>
    %134 = vector.broadcast %64 : f32 to vector<8x128xf32>
    %135 = arith.mulf %134, %133 : vector<8x128xf32>
    %136 = arith.addf %131, %135 : vector<8x128xf32>
    %137 = vector.broadcast %65 : f32 to vector<8x128xf32>
    %138 = arith.mulf %137, %28 : vector<8x128xf32>
    %139 = vector.extract_strided_slice %85 {offsets = [0, 1152], sizes = [8, 128], strides = [1, 1]} : vector<8x1536xf32> to vector<8x128xf32>
    %140 = vector.broadcast %66 : f32 to vector<8x128xf32>
    %141 = arith.mulf %140, %139 : vector<8x128xf32>
    %142 = arith.addf %138, %141 : vector<8x128xf32>
    %143 = vector.extract_strided_slice %85 {offsets = [0, 1280], sizes = [8, 128], strides = [1, 1]} : vector<8x1536xf32> to vector<8x128xf32>
    %cst_44 = arith.constant 0.000000e+00 : f32
    %144 = vector.broadcast %cst_44 : f32 to vector<8x128xf32>
    %145 = arith.maximumf %143, %144 : vector<8x128xf32>
    %146 = vector.broadcast %67 : f32 to vector<8x128xf32>
    %147 = arith.mulf %146, %145 : vector<8x128xf32>
    %148 = arith.addf %142, %147 : vector<8x128xf32>
    %149 = vector.extract_strided_slice %85 {offsets = [0, 1408], sizes = [8, 128], strides = [1, 1]} : vector<8x1536xf32> to vector<8x128xf32>
    %150 = math.tanh %149 : vector<8x128xf32>
    %151 = vector.broadcast %68 : f32 to vector<8x128xf32>
    %152 = arith.mulf %151, %150 : vector<8x128xf32>
    %153 = arith.addf %148, %152 : vector<8x128xf32>
    %c6 = arith.constant 6 : index
    %154 = memref.load %arg0[%c6] : memref<70xf32, #tpu.memory_space<smem>>
    %c7 = arith.constant 7 : index
    %155 = memref.load %arg0[%c7] : memref<70xf32, #tpu.memory_space<smem>>
    %c8 = arith.constant 8 : index
    %156 = memref.load %arg0[%c8] : memref<70xf32, #tpu.memory_space<smem>>
    %c9 = arith.constant 9 : index
    %157 = memref.load %arg0[%c9] : memref<70xf32, #tpu.memory_space<smem>>
    %c16 = arith.constant 16 : index
    %158 = memref.load %arg0[%c16] : memref<70xf32, #tpu.memory_space<smem>>
    %c17 = arith.constant 17 : index
    %159 = memref.load %arg0[%c17] : memref<70xf32, #tpu.memory_space<smem>>
    %c18 = arith.constant 18 : index
    %160 = memref.load %arg0[%c18] : memref<70xf32, #tpu.memory_space<smem>>
    %c19 = arith.constant 19 : index
    %161 = memref.load %arg0[%c19] : memref<70xf32, #tpu.memory_space<smem>>
    %c31 = arith.constant 31 : index
    %162 = memref.load %arg0[%c31] : memref<70xf32, #tpu.memory_space<smem>>
    %c32 = arith.constant 32 : index
    %163 = memref.load %arg0[%c32] : memref<70xf32, #tpu.memory_space<smem>>
    %c33 = arith.constant 33 : index
    %164 = memref.load %arg0[%c33] : memref<70xf32, #tpu.memory_space<smem>>
    %c34 = arith.constant 34 : index
    %165 = memref.load %arg0[%c34] : memref<70xf32, #tpu.memory_space<smem>>
    %c51 = arith.constant 51 : index
    %166 = memref.load %arg0[%c51] : memref<70xf32, #tpu.memory_space<smem>>
    %c52 = arith.constant 52 : index
    %167 = memref.load %arg0[%c52] : memref<70xf32, #tpu.memory_space<smem>>
    %c53 = arith.constant 53 : index
    %168 = memref.load %arg0[%c53] : memref<70xf32, #tpu.memory_space<smem>>
    %c54 = arith.constant 54 : index
    %169 = memref.load %arg0[%c54] : memref<70xf32, #tpu.memory_space<smem>>
    %c1_i32_45 = arith.constant 1 : i32
    %c1_i32_46 = arith.constant 1 : i32
    %c0_i32_47 = arith.constant 0 : i32
    %c1536_i32_48 = arith.constant 1536 : i32
    %170 = tpu.memref_slice %arg6[%c0_i32_47, %c1536_i32_48] : memref<128x5632xbf16, #tpu.memory_space<any>> -> memref<128x1536xbf16, #tpu.memory_space<any>>
    %c0_i32_49 = arith.constant 0 : i32
    %c0_i32_50 = arith.constant 0 : i32
    %171 = tpu.memref_slice %arg8[%c1_i32_45, %c0_i32_49, %c0_i32_50] : memref<2x128x1536xbf16, #tpu.memory_space<vmem>> -> memref<1x128x1536xbf16, #tpu.memory_space<vmem>>
    %172 = tpu.memref_squeeze %171 : memref<1x128x1536xbf16, #tpu.memory_space<vmem>> -> memref<128x1536xbf16, #tpu.memory_space<vmem>>
    %173 = tpu.memref_slice %arg9[%c1_i32_46] : memref<2x!tpu.dma_semaphore, #tpu.memory_space<semaphore_mem>> -> memref<1x!tpu.dma_semaphore, #tpu.memory_space<semaphore_mem>>
    %174 = tpu.memref_squeeze %173 : memref<1x!tpu.dma_semaphore, #tpu.memory_space<semaphore_mem>> -> memref<!tpu.dma_semaphore, #tpu.memory_space<semaphore_mem>>
    tpu.wait_dma2 semaphore(%174 : memref<!tpu.dma_semaphore, #tpu.memory_space<semaphore_mem>>) src(%170 : memref<128x1536xbf16, #tpu.memory_space<any>>) dst(%172 : memref<128x1536xbf16, #tpu.memory_space<vmem>>)
    %c0_i32_51 = arith.constant 0 : i32
    %c0_i32_52 = arith.constant 0 : i32
    %c0_i32_53 = arith.constant 0 : i32
    %c3072_i32 = arith.constant 3072 : i32
    %175 = tpu.memref_slice %arg6[%c0_i32_53, %c3072_i32] : memref<128x5632xbf16, #tpu.memory_space<any>> -> memref<128x1280xbf16, #tpu.memory_space<any>>
    %c0_i32_54 = arith.constant 0 : i32
    %c0_i32_55 = arith.constant 0 : i32
    %176 = tpu.memref_slice %arg8[%c0_i32_51, %c0_i32_54, %c0_i32_55] : memref<2x128x1536xbf16, #tpu.memory_space<vmem>> -> memref<1x128x1280xbf16, #tpu.memory_space<vmem>>
    %177 = tpu.memref_squeeze %176 : memref<1x128x1280xbf16, #tpu.memory_space<vmem>> -> memref<128x1280xbf16, #tpu.memory_space<vmem>>
    %178 = tpu.memref_slice %arg9[%c0_i32_52] : memref<2x!tpu.dma_semaphore, #tpu.memory_space<semaphore_mem>> -> memref<1x!tpu.dma_semaphore, #tpu.memory_space<semaphore_mem>>
    %179 = tpu.memref_squeeze %178 : memref<1x!tpu.dma_semaphore, #tpu.memory_space<semaphore_mem>> -> memref<!tpu.dma_semaphore, #tpu.memory_space<semaphore_mem>>
    tpu.enqueue_dma source(%175 : memref<128x1280xbf16, #tpu.memory_space<any>>) target(%177 : memref<128x1280xbf16, #tpu.memory_space<vmem>>) target_semaphore(%179 : memref<!tpu.dma_semaphore, #tpu.memory_space<semaphore_mem>>)
    %180 = arith.truncf %52 : vector<8x128xf32> to vector<8x128xbf16>
    %c1_56 = arith.constant 1 : index
    %c0_57 = arith.constant 0 : index
    %c0_58 = arith.constant 0 : index
    %181 = vector.load %arg8[%c1_56, %c0_57, %c0_58] : memref<2x128x1536xbf16, #tpu.memory_space<vmem>>, vector<1x128x1536xbf16>
    %182 = vector.shape_cast %181 : vector<1x128x1536xbf16> to vector<128x1536xbf16>
    %cst_59 = arith.constant dense<0.000000e+00> : vector<8x1536xf32>
    %183 = tpu.matmul %180, %182, %cst_59 {dimension_numbers = #tpu.dot_dimension_numbers<[1], [0], [0], [1], [0, 0, 1, 1], [], []>} : vector<8x128xbf16>, vector<128x1536xbf16>, vector<8x1536xf32> -> vector<8x1536xf32>
    %c0_60 = arith.constant 0 : index
    %c1536 = arith.constant 1536 : index
    %184 = vector.load %arg5[%c0_60, %c1536] : memref<1x5632xf32, #tpu.memory_space<vmem>>, vector<1x1536xf32>
    %185 = vector.broadcast %184 : vector<1x1536xf32> to vector<8x1536xf32>
    %186 = arith.addf %183, %185 : vector<8x1536xf32>
    %187 = vector.broadcast %154 : f32 to vector<8x128xf32>
    %188 = arith.mulf %187, %52 : vector<8x128xf32>
    %189 = vector.extract_strided_slice %186 {offsets = [0, 0], sizes = [8, 128], strides = [1, 1]} : vector<8x1536xf32> to vector<8x128xf32>
    %190 = vector.broadcast %155 : f32 to vector<8x128xf32>
    %191 = arith.mulf %190, %189 : vector<8x128xf32>
    %192 = arith.addf %188, %191 : vector<8x128xf32>
    %193 = vector.extract_strided_slice %186 {offsets = [0, 128], sizes = [8, 128], strides = [1, 1]} : vector<8x1536xf32> to vector<8x128xf32>
    %cst_61 = arith.constant 0.000000e+00 : f32
    %194 = vector.broadcast %cst_61 : f32 to vector<8x128xf32>
    %195 = arith.maximumf %193, %194 : vector<8x128xf32>
    %196 = vector.broadcast %156 : f32 to vector<8x128xf32>
    %197 = arith.mulf %196, %195 : vector<8x128xf32>
    %198 = arith.addf %192, %197 : vector<8x128xf32>
    %199 = vector.extract_strided_slice %186 {offsets = [0, 256], sizes = [8, 128], strides = [1, 1]} : vector<8x1536xf32> to vector<8x128xf32>
    %200 = math.tanh %199 : vector<8x128xf32>
    %201 = vector.broadcast %157 : f32 to vector<8x128xf32>
    %202 = arith.mulf %201, %200 : vector<8x128xf32>
    %203 = arith.addf %198, %202 : vector<8x128xf32>
    %204 = arith.addf %102, %203 : vector<8x128xf32>
    %205 = vector.broadcast %158 : f32 to vector<8x128xf32>
    %206 = arith.mulf %205, %52 : vector<8x128xf32>
    %207 = vector.extract_strided_slice %186 {offsets = [0, 384], sizes = [8, 128], strides = [1, 1]} : vector<8x1536xf32> to vector<8x128xf32>
    %208 = vector.broadcast %159 : f32 to vector<8x128xf32>
    %209 = arith.mulf %208, %207 : vector<8x128xf32>
    %210 = arith.addf %206, %209 : vector<8x128xf32>
    %211 = vector.extract_strided_slice %186 {offsets = [0, 512], sizes = [8, 128], strides = [1, 1]} : vector<8x1536xf32> to vector<8x128xf32>
    %cst_62 = arith.constant 0.000000e+00 : f32
    %212 = vector.broadcast %cst_62 : f32 to vector<8x128xf32>
    %213 = arith.maximumf %211, %212 : vector<8x128xf32>
    %214 = vector.broadcast %160 : f32 to vector<8x128xf32>
    %215 = arith.mulf %214, %213 : vector<8x128xf32>
    %216 = arith.addf %210, %215 : vector<8x128xf32>
    %217 = vector.extract_strided_slice %186 {offsets = [0, 640], sizes = [8, 128], strides = [1, 1]} : vector<8x1536xf32> to vector<8x128xf32>
    %218 = math.tanh %217 : vector<8x128xf32>
    %219 = vector.broadcast %161 : f32 to vector<8x128xf32>
    %220 = arith.mulf %219, %218 : vector<8x128xf32>
    %221 = arith.addf %216, %220 : vector<8x128xf32>
    %222 = arith.addf %119, %221 : vector<8x128xf32>
    %223 = vector.broadcast %162 : f32 to vector<8x128xf32>
    %224 = arith.mulf %223, %52 : vector<8x128xf32>
    %225 = vector.extract_strided_slice %186 {offsets = [0, 768], sizes = [8, 128], strides = [1, 1]} : vector<8x1536xf32> to vector<8x128xf32>
    %226 = vector.broadcast %163 : f32 to vector<8x128xf32>
    %227 = arith.mulf %226, %225 : vector<8x128xf32>
    %228 = arith.addf %224, %227 : vector<8x128xf32>
    %229 = vector.extract_strided_slice %186 {offsets = [0, 896], sizes = [8, 128], strides = [1, 1]} : vector<8x1536xf32> to vector<8x128xf32>
    %cst_63 = arith.constant 0.000000e+00 : f32
    %230 = vector.broadcast %cst_63 : f32 to vector<8x128xf32>
    %231 = arith.maximumf %229, %230 : vector<8x128xf32>
    %232 = vector.broadcast %164 : f32 to vector<8x128xf32>
    %233 = arith.mulf %232, %231 : vector<8x128xf32>
    %234 = arith.addf %228, %233 : vector<8x128xf32>
    %235 = vector.extract_strided_slice %186 {offsets = [0, 1024], sizes = [8, 128], strides = [1, 1]} : vector<8x1536xf32> to vector<8x128xf32>
    %236 = math.tanh %235 : vector<8x128xf32>
    %237 = vector.broadcast %165 : f32 to vector<8x128xf32>
    %238 = arith.mulf %237, %236 : vector<8x128xf32>
    %239 = arith.addf %234, %238 : vector<8x128xf32>
    %240 = arith.addf %136, %239 : vector<8x128xf32>
    %241 = vector.broadcast %166 : f32 to vector<8x128xf32>
    %242 = arith.mulf %241, %52 : vector<8x128xf32>
    %243 = vector.extract_strided_slice %186 {offsets = [0, 1152], sizes = [8, 128], strides = [1, 1]} : vector<8x1536xf32> to vector<8x128xf32>
    %244 = vector.broadcast %167 : f32 to vector<8x128xf32>
    %245 = arith.mulf %244, %243 : vector<8x128xf32>
    %246 = arith.addf %242, %245 : vector<8x128xf32>
    %247 = vector.extract_strided_slice %186 {offsets = [0, 1280], sizes = [8, 128], strides = [1, 1]} : vector<8x1536xf32> to vector<8x128xf32>
    %cst_64 = arith.constant 0.000000e+00 : f32
    %248 = vector.broadcast %cst_64 : f32 to vector<8x128xf32>
    %249 = arith.maximumf %247, %248 : vector<8x128xf32>
    %250 = vector.broadcast %168 : f32 to vector<8x128xf32>
    %251 = arith.mulf %250, %249 : vector<8x128xf32>
    %252 = arith.addf %246, %251 : vector<8x128xf32>
    %253 = vector.extract_strided_slice %186 {offsets = [0, 1408], sizes = [8, 128], strides = [1, 1]} : vector<8x1536xf32> to vector<8x128xf32>
    %254 = math.tanh %253 : vector<8x128xf32>
    %255 = vector.broadcast %169 : f32 to vector<8x128xf32>
    %256 = arith.mulf %255, %254 : vector<8x128xf32>
    %257 = arith.addf %252, %256 : vector<8x128xf32>
    %258 = arith.addf %153, %257 : vector<8x128xf32>
    %c0_65 = arith.constant 0 : index
    %c0_66 = arith.constant 0 : index
    %259 = vector.load %arg7[%c0_65, %c0_66] : memref<8x512xf32, #tpu.memory_space<vmem>>, vector<8x128xf32>
    tpu.vector_store %arg7[%c0_65, %c0_66], %204 {strides = array<i32>} : memref<8x512xf32, #tpu.memory_space<vmem>>, vector<8x128xf32>,
    %c21 = arith.constant 21 : index
    %260 = memref.load %arg0[%c21] : memref<70xf32, #tpu.memory_space<smem>>
    %c22 = arith.constant 22 : index
    %261 = memref.load %arg0[%c22] : memref<70xf32, #tpu.memory_space<smem>>
    %c23 = arith.constant 23 : index
    %262 = memref.load %arg0[%c23] : memref<70xf32, #tpu.memory_space<smem>>
    %c24 = arith.constant 24 : index
    %263 = memref.load %arg0[%c24] : memref<70xf32, #tpu.memory_space<smem>>
    %c36 = arith.constant 36 : index
    %264 = memref.load %arg0[%c36] : memref<70xf32, #tpu.memory_space<smem>>
    %c37 = arith.constant 37 : index
    %265 = memref.load %arg0[%c37] : memref<70xf32, #tpu.memory_space<smem>>
    %c38 = arith.constant 38 : index
    %266 = memref.load %arg0[%c38] : memref<70xf32, #tpu.memory_space<smem>>
    %c39 = arith.constant 39 : index
    %267 = memref.load %arg0[%c39] : memref<70xf32, #tpu.memory_space<smem>>
    %c56 = arith.constant 56 : index
    %268 = memref.load %arg0[%c56] : memref<70xf32, #tpu.memory_space<smem>>
    %c57 = arith.constant 57 : index
    %269 = memref.load %arg0[%c57] : memref<70xf32, #tpu.memory_space<smem>>
    %c58 = arith.constant 58 : index
    %270 = memref.load %arg0[%c58] : memref<70xf32, #tpu.memory_space<smem>>
    %c59 = arith.constant 59 : index
    %271 = memref.load %arg0[%c59] : memref<70xf32, #tpu.memory_space<smem>>
    %c0_i32_67 = arith.constant 0 : i32
    %c0_i32_68 = arith.constant 0 : i32
    %c0_i32_69 = arith.constant 0 : i32
    %c3072_i32_70 = arith.constant 3072 : i32
    %272 = tpu.memref_slice %arg6[%c0_i32_69, %c3072_i32_70] : memref<128x5632xbf16, #tpu.memory_space<any>> -> memref<128x1280xbf16, #tpu.memory_space<any>>
    %c0_i32_71 = arith.constant 0 : i32
    %c0_i32_72 = arith.constant 0 : i32
    %273 = tpu.memref_slice %arg8[%c0_i32_67, %c0_i32_71, %c0_i32_72] : memref<2x128x1536xbf16, #tpu.memory_space<vmem>> -> memref<1x128x1280xbf16, #tpu.memory_space<vmem>>
    %274 = tpu.memref_squeeze %273 : memref<1x128x1280xbf16, #tpu.memory_space<vmem>> -> memref<128x1280xbf16, #tpu.memory_space<vmem>>
    %275 = tpu.memref_slice %arg9[%c0_i32_68] : memref<2x!tpu.dma_semaphore, #tpu.memory_space<semaphore_mem>> -> memref<1x!tpu.dma_semaphore, #tpu.memory_space<semaphore_mem>>
    %276 = tpu.memref_squeeze %275 : memref<1x!tpu.dma_semaphore, #tpu.memory_space<semaphore_mem>> -> memref<!tpu.dma_semaphore, #tpu.memory_space<semaphore_mem>>
    tpu.wait_dma2 semaphore(%276 : memref<!tpu.dma_semaphore, #tpu.memory_space<semaphore_mem>>) src(%272 : memref<128x1280xbf16, #tpu.memory_space<any>>) dst(%274 : memref<128x1280xbf16, #tpu.memory_space<vmem>>)
    %c1_i32_73 = arith.constant 1 : i32
    %c1_i32_74 = arith.constant 1 : i32
    %c0_i32_75 = arith.constant 0 : i32
    %c4352_i32 = arith.constant 4352 : i32
    %277 = tpu.memref_slice %arg6[%c0_i32_75, %c4352_i32] : memref<128x5632xbf16, #tpu.memory_space<any>> -> memref<128x768xbf16, #tpu.memory_space<any>>
    %c0_i32_76 = arith.constant 0 : i32
    %c0_i32_77 = arith.constant 0 : i32
    %278 = tpu.memref_slice %arg8[%c1_i32_73, %c0_i32_76, %c0_i32_77] : memref<2x128x1536xbf16, #tpu.memory_space<vmem>> -> memref<1x128x768xbf16, #tpu.memory_space<vmem>>
    %279 = tpu.memref_squeeze %278 : memref<1x128x768xbf16, #tpu.memory_space<vmem>> -> memref<128x768xbf16, #tpu.memory_space<vmem>>
    %280 = tpu.memref_slice %arg9[%c1_i32_74] : memref<2x!tpu.dma_semaphore, #tpu.memory_space<semaphore_mem>> -> memref<1x!tpu.dma_semaphore, #tpu.memory_space<semaphore_mem>>
    %281 = tpu.memref_squeeze %280 : memref<1x!tpu.dma_semaphore, #tpu.memory_space<semaphore_mem>> -> memref<!tpu.dma_semaphore, #tpu.memory_space<semaphore_mem>>
    tpu.enqueue_dma source(%277 : memref<128x768xbf16, #tpu.memory_space<any>>) target(%279 : memref<128x768xbf16, #tpu.memory_space<vmem>>) target_semaphore(%281 : memref<!tpu.dma_semaphore, #tpu.memory_space<semaphore_mem>>)
    %282 = arith.truncf %204 : vector<8x128xf32> to vector<8x128xbf16>
    %c0_78 = arith.constant 0 : index
    %c0_79 = arith.constant 0 : index
    %c0_80 = arith.constant 0 : index
    %283 = vector.load %arg8[%c0_78, %c0_79, %c0_80] : memref<2x128x1536xbf16, #tpu.memory_space<vmem>>, vector<1x128x1280xbf16>
    %284 = vector.shape_cast %283 : vector<1x128x1280xbf16> to vector<128x1280xbf16>
    %cst_81 = arith.constant dense<0.000000e+00> : vector<8x1280xf32>
    %285 = tpu.matmul %282, %284, %cst_81 {dimension_numbers = #tpu.dot_dimension_numbers<[1], [0], [0], [1], [0, 0, 1, 1], [], []>} : vector<8x128xbf16>, vector<128x1280xbf16>, vector<8x1280xf32> -> vector<8x1280xf32>
    %c0_82 = arith.constant 0 : index
    %c3072 = arith.constant 3072 : index
    %286 = vector.load %arg5[%c0_82, %c3072] : memref<1x5632xf32, #tpu.memory_space<vmem>>, vector<1x1280xf32>
    %287 = vector.broadcast %286 : vector<1x1280xf32> to vector<8x1280xf32>
    %288 = arith.addf %285, %287 : vector<8x1280xf32>
    %289 = vector.broadcast %260 : f32 to vector<8x128xf32>
    %290 = arith.mulf %289, %204 : vector<8x128xf32>
    %291 = vector.extract_strided_slice %288 {offsets = [0, 0], sizes = [8, 128], strides = [1, 1]} : vector<8x1280xf32> to vector<8x128xf32>
    %292 = vector.broadcast %261 : f32 to vector<8x128xf32>
    %293 = arith.mulf %292, %291 : vector<8x128xf32>
    %294 = arith.addf %290, %293 : vector<8x128xf32>
    %295 = vector.extract_strided_slice %288 {offsets = [0, 128], sizes = [8, 128], strides = [1, 1]} : vector<8x1280xf32> to vector<8x128xf32>
    %cst_83 = arith.constant 0.000000e+00 : f32
    %296 = vector.broadcast %cst_83 : f32 to vector<8x128xf32>
    %297 = arith.maximumf %295, %296 : vector<8x128xf32>
    %298 = vector.broadcast %262 : f32 to vector<8x128xf32>
    %299 = arith.mulf %298, %297 : vector<8x128xf32>
    %300 = arith.addf %294, %299 : vector<8x128xf32>
    %301 = vector.extract_strided_slice %288 {offsets = [0, 256], sizes = [8, 128], strides = [1, 1]} : vector<8x1280xf32> to vector<8x128xf32>
    %302 = math.tanh %301 : vector<8x128xf32>
    %303 = vector.broadcast %263 : f32 to vector<8x128xf32>
    %304 = arith.mulf %303, %302 : vector<8x128xf32>
    %305 = arith.addf %300, %304 : vector<8x128xf32>
    %306 = arith.addf %222, %305 : vector<8x128xf32>
    %307 = vector.broadcast %264 : f32 to vector<8x128xf32>
    %308 = arith.mulf %307, %204 : vector<8x128xf32>
    %309 = vector.extract_strided_slice %288 {offsets = [0, 384], sizes = [8, 128], strides = [1, 1]} : vector<8x1280xf32> to vector<8x128xf32>
    %310 = vector.broadcast %265 : f32 to vector<8x128xf32>
    %311 = arith.mulf %310, %309 : vector<8x128xf32>
    %312 = arith.addf %308, %311 : vector<8x128xf32>
    %313 = vector.extract_strided_slice %288 {offsets = [0, 512], sizes = [8, 128], strides = [1, 1]} : vector<8x1280xf32> to vector<8x128xf32>
    %cst_84 = arith.constant 0.000000e+00 : f32
    %314 = vector.broadcast %cst_84 : f32 to vector<8x128xf32>
    %315 = arith.maximumf %313, %314 : vector<8x128xf32>
    %316 = vector.broadcast %266 : f32 to vector<8x128xf32>
    %317 = arith.mulf %316, %315 : vector<8x128xf32>
    %318 = arith.addf %312, %317 : vector<8x128xf32>
    %319 = vector.extract_strided_slice %288 {offsets = [0, 640], sizes = [8, 128], strides = [1, 1]} : vector<8x1280xf32> to vector<8x128xf32>
    %320 = math.tanh %319 : vector<8x128xf32>
    %321 = vector.broadcast %267 : f32 to vector<8x128xf32>
    %322 = arith.mulf %321, %320 : vector<8x128xf32>
    %323 = arith.addf %318, %322 : vector<8x128xf32>
    %324 = arith.addf %240, %323 : vector<8x128xf32>
    %325 = vector.broadcast %268 : f32 to vector<8x128xf32>
    %326 = arith.mulf %325, %204 : vector<8x128xf32>
    %327 = vector.extract_strided_slice %288 {offsets = [0, 768], sizes = [8, 128], strides = [1, 1]} : vector<8x1280xf32> to vector<8x128xf32>
    %328 = vector.broadcast %269 : f32 to vector<8x128xf32>
    %329 = arith.mulf %328, %327 : vector<8x128xf32>
    %330 = arith.addf %326, %329 : vector<8x128xf32>
    %331 = vector.extract_strided_slice %288 {offsets = [0, 896], sizes = [8, 128], strides = [1, 1]} : vector<8x1280xf32> to vector<8x128xf32>
    %cst_85 = arith.constant 0.000000e+00 : f32
    %332 = vector.broadcast %cst_85 : f32 to vector<8x128xf32>
    %333 = arith.maximumf %331, %332 : vector<8x128xf32>
    %334 = vector.broadcast %270 : f32 to vector<8x128xf32>
    %335 = arith.mulf %334, %333 : vector<8x128xf32>
    %336 = arith.addf %330, %335 : vector<8x128xf32>
    %337 = vector.extract_strided_slice %288 {offsets = [0, 1024], sizes = [8, 128], strides = [1, 1]} : vector<8x1280xf32> to vector<8x128xf32>
    %338 = math.tanh %337 : vector<8x128xf32>
    %339 = vector.broadcast %271 : f32 to vector<8x128xf32>
    %340 = arith.mulf %339, %338 : vector<8x128xf32>
    %341 = arith.addf %336, %340 : vector<8x128xf32>
    %342 = arith.addf %258, %341 : vector<8x128xf32>
    %c0_86 = arith.constant 0 : index
    %c128 = arith.constant 128 : index
    %343 = vector.load %arg7[%c0_86, %c128] : memref<8x512xf32, #tpu.memory_space<vmem>>, vector<8x128xf32>
    tpu.vector_store %arg7[%c0_86, %c128], %306 {strides = array<i32>} : memref<8x512xf32, #tpu.memory_space<vmem>>, vector<8x128xf32>,
    %c41 = arith.constant 41 : index
    %344 = memref.load %arg0[%c41] : memref<70xf32, #tpu.memory_space<smem>>
    %c42 = arith.constant 42 : index
    %345 = memref.load %arg0[%c42] : memref<70xf32, #tpu.memory_space<smem>>
    %c43 = arith.constant 43 : index
    %346 = memref.load %arg0[%c43] : memref<70xf32, #tpu.memory_space<smem>>
    %c44 = arith.constant 44 : index
    %347 = memref.load %arg0[%c44] : memref<70xf32, #tpu.memory_space<smem>>
    %c61 = arith.constant 61 : index
    %348 = memref.load %arg0[%c61] : memref<70xf32, #tpu.memory_space<smem>>
    %c62 = arith.constant 62 : index
    %349 = memref.load %arg0[%c62] : memref<70xf32, #tpu.memory_space<smem>>
    %c63 = arith.constant 63 : index
    %350 = memref.load %arg0[%c63] : memref<70xf32, #tpu.memory_space<smem>>
    %c64 = arith.constant 64 : index
    %351 = memref.load %arg0[%c64] : memref<70xf32, #tpu.memory_space<smem>>
    %c1_i32_87 = arith.constant 1 : i32
    %c1_i32_88 = arith.constant 1 : i32
    %c0_i32_89 = arith.constant 0 : i32
    %c4352_i32_90 = arith.constant 4352 : i32
    %352 = tpu.memref_slice %arg6[%c0_i32_89, %c4352_i32_90] : memref<128x5632xbf16, #tpu.memory_space<any>> -> memref<128x768xbf16, #tpu.memory_space<any>>
    %c0_i32_91 = arith.constant 0 : i32
    %c0_i32_92 = arith.constant 0 : i32
    %353 = tpu.memref_slice %arg8[%c1_i32_87, %c0_i32_91, %c0_i32_92] : memref<2x128x1536xbf16, #tpu.memory_space<vmem>> -> memref<1x128x768xbf16, #tpu.memory_space<vmem>>
    %354 = tpu.memref_squeeze %353 : memref<1x128x768xbf16, #tpu.memory_space<vmem>> -> memref<128x768xbf16, #tpu.memory_space<vmem>>
    %355 = tpu.memref_slice %arg9[%c1_i32_88] : memref<2x!tpu.dma_semaphore, #tpu.memory_space<semaphore_mem>> -> memref<1x!tpu.dma_semaphore, #tpu.memory_space<semaphore_mem>>
    %356 = tpu.memref_squeeze %355 : memref<1x!tpu.dma_semaphore, #tpu.memory_space<semaphore_mem>> -> memref<!tpu.dma_semaphore, #tpu.memory_space<semaphore_mem>>
    tpu.wait_dma2 semaphore(%356 : memref<!tpu.dma_semaphore, #tpu.memory_space<semaphore_mem>>) src(%352 : memref<128x768xbf16, #tpu.memory_space<any>>) dst(%354 : memref<128x768xbf16, #tpu.memory_space<vmem>>)
    %c0_i32_93 = arith.constant 0 : i32
    %c0_i32_94 = arith.constant 0 : i32
    %c0_i32_95 = arith.constant 0 : i32
    %c5120_i32 = arith.constant 5120 : i32
    %357 = tpu.memref_slice %arg6[%c0_i32_95, %c5120_i32] : memref<128x5632xbf16, #tpu.memory_space<any>> -> memref<128x512xbf16, #tpu.memory_space<any>>
    %c0_i32_96 = arith.constant 0 : i32
    %c0_i32_97 = arith.constant 0 : i32
    %358 = tpu.memref_slice %arg8[%c0_i32_93, %c0_i32_96, %c0_i32_97] : memref<2x128x1536xbf16, #tpu.memory_space<vmem>> -> memref<1x128x512xbf16, #tpu.memory_space<vmem>>
    %359 = tpu.memref_squeeze %358 : memref<1x128x512xbf16, #tpu.memory_space<vmem>> -> memref<128x512xbf16, #tpu.memory_space<vmem>>
    %360 = tpu.memref_slice %arg9[%c0_i32_94] : memref<2x!tpu.dma_semaphore, #tpu.memory_space<semaphore_mem>> -> memref<1x!tpu.dma_semaphore, #tpu.memory_space<semaphore_mem>>
    %361 = tpu.memref_squeeze %360 : memref<1x!tpu.dma_semaphore, #tpu.memory_space<semaphore_mem>> -> memref<!tpu.dma_semaphore, #tpu.memory_space<semaphore_mem>>
    tpu.enqueue_dma source(%357 : memref<128x512xbf16, #tpu.memory_space<any>>) target(%359 : memref<128x512xbf16, #tpu.memory_space<vmem>>) target_semaphore(%361 : memref<!tpu.dma_semaphore, #tpu.memory_space<semaphore_mem>>)
    %362 = arith.truncf %306 : vector<8x128xf32> to vector<8x128xbf16>
    %c1_98 = arith.constant 1 : index
    %c0_99 = arith.constant 0 : index
    %c0_100 = arith.constant 0 : index
    %363 = vector.load %arg8[%c1_98, %c0_99, %c0_100] : memref<2x128x1536xbf16, #tpu.memory_space<vmem>>, vector<1x128x768xbf16>
    %364 = vector.shape_cast %363 : vector<1x128x768xbf16> to vector<128x768xbf16>
    %cst_101 = arith.constant dense<0.000000e+00> : vector<8x768xf32>
    %365 = tpu.matmul %362, %364, %cst_101 {dimension_numbers = #tpu.dot_dimension_numbers<[1], [0], [0], [1], [0, 0, 1, 1], [], []>} : vector<8x128xbf16>, vector<128x768xbf16>, vector<8x768xf32> -> vector<8x768xf32>
    %c0_102 = arith.constant 0 : index
    %c4352 = arith.constant 4352 : index
    %366 = vector.load %arg5[%c0_102, %c4352] : memref<1x5632xf32, #tpu.memory_space<vmem>>, vector<1x768xf32>
    %367 = vector.broadcast %366 : vector<1x768xf32> to vector<8x768xf32>
    %368 = arith.addf %365, %367 : vector<8x768xf32>
    %369 = vector.broadcast %344 : f32 to vector<8x128xf32>
    %370 = arith.mulf %369, %306 : vector<8x128xf32>
    %371 = vector.extract_strided_slice %368 {offsets = [0, 0], sizes = [8, 128], strides = [1, 1]} : vector<8x768xf32> to vector<8x128xf32>
    %372 = vector.broadcast %345 : f32 to vector<8x128xf32>
    %373 = arith.mulf %372, %371 : vector<8x128xf32>
    %374 = arith.addf %370, %373 : vector<8x128xf32>
    %375 = vector.extract_strided_slice %368 {offsets = [0, 128], sizes = [8, 128], strides = [1, 1]} : vector<8x768xf32> to vector<8x128xf32>
    %cst_103 = arith.constant 0.000000e+00 : f32
    %376 = vector.broadcast %cst_103 : f32 to vector<8x128xf32>
    %377 = arith.maximumf %375, %376 : vector<8x128xf32>
    %378 = vector.broadcast %346 : f32 to vector<8x128xf32>
    %379 = arith.mulf %378, %377 : vector<8x128xf32>
    %380 = arith.addf %374, %379 : vector<8x128xf32>
    %381 = vector.extract_strided_slice %368 {offsets = [0, 256], sizes = [8, 128], strides = [1, 1]} : vector<8x768xf32> to vector<8x128xf32>
    %382 = math.tanh %381 : vector<8x128xf32>
    %383 = vector.broadcast %347 : f32 to vector<8x128xf32>
    %384 = arith.mulf %383, %382 : vector<8x128xf32>
    %385 = arith.addf %380, %384 : vector<8x128xf32>
    %386 = arith.addf %324, %385 : vector<8x128xf32>
    %387 = vector.broadcast %348 : f32 to vector<8x128xf32>
    %388 = arith.mulf %387, %306 : vector<8x128xf32>
    %389 = vector.extract_strided_slice %368 {offsets = [0, 384], sizes = [8, 128], strides = [1, 1]} : vector<8x768xf32> to vector<8x128xf32>
    %390 = vector.broadcast %349 : f32 to vector<8x128xf32>
    %391 = arith.mulf %390, %389 : vector<8x128xf32>
    %392 = arith.addf %388, %391 : vector<8x128xf32>
    %393 = vector.extract_strided_slice %368 {offsets = [0, 512], sizes = [8, 128], strides = [1, 1]} : vector<8x768xf32> to vector<8x128xf32>
    %cst_104 = arith.constant 0.000000e+00 : f32
    %394 = vector.broadcast %cst_104 : f32 to vector<8x128xf32>
    %395 = arith.maximumf %393, %394 : vector<8x128xf32>
    %396 = vector.broadcast %350 : f32 to vector<8x128xf32>
    %397 = arith.mulf %396, %395 : vector<8x128xf32>
    %398 = arith.addf %392, %397 : vector<8x128xf32>
    %399 = vector.extract_strided_slice %368 {offsets = [0, 640], sizes = [8, 128], strides = [1, 1]} : vector<8x768xf32> to vector<8x128xf32>
    %400 = math.tanh %399 : vector<8x128xf32>
    %401 = vector.broadcast %351 : f32 to vector<8x128xf32>
    %402 = arith.mulf %401, %400 : vector<8x128xf32>
    %403 = arith.addf %398, %402 : vector<8x128xf32>
    %404 = arith.addf %342, %403 : vector<8x128xf32>
    %c0_105 = arith.constant 0 : index
    %c256 = arith.constant 256 : index
    %405 = vector.load %arg7[%c0_105, %c256] : memref<8x512xf32, #tpu.memory_space<vmem>>, vector<8x128xf32>
    tpu.vector_store %arg7[%c0_105, %c256], %386 {strides = array<i32>} : memref<8x512xf32, #tpu.memory_space<vmem>>, vector<8x128xf32>,
    %c66 = arith.constant 66 : index
    %406 = memref.load %arg0[%c66] : memref<70xf32, #tpu.memory_space<smem>>
    %c67 = arith.constant 67 : index
    %407 = memref.load %arg0[%c67] : memref<70xf32, #tpu.memory_space<smem>>
    %c68 = arith.constant 68 : index
    %408 = memref.load %arg0[%c68] : memref<70xf32, #tpu.memory_space<smem>>
    %c69 = arith.constant 69 : index
    %409 = memref.load %arg0[%c69] : memref<70xf32, #tpu.memory_space<smem>>
    %c0_i32_106 = arith.constant 0 : i32
    %c0_i32_107 = arith.constant 0 : i32
    %c0_i32_108 = arith.constant 0 : i32
    %c5120_i32_109 = arith.constant 5120 : i32
    %410 = tpu.memref_slice %arg6[%c0_i32_108, %c5120_i32_109] : memref<128x5632xbf16, #tpu.memory_space<any>> -> memref<128x512xbf16, #tpu.memory_space<any>>
    %c0_i32_110 = arith.constant 0 : i32
    %c0_i32_111 = arith.constant 0 : i32
    %411 = tpu.memref_slice %arg8[%c0_i32_106, %c0_i32_110, %c0_i32_111] : memref<2x128x1536xbf16, #tpu.memory_space<vmem>> -> memref<1x128x512xbf16, #tpu.memory_space<vmem>>
    %412 = tpu.memref_squeeze %411 : memref<1x128x512xbf16, #tpu.memory_space<vmem>> -> memref<128x512xbf16, #tpu.memory_space<vmem>>
    %413 = tpu.memref_slice %arg9[%c0_i32_107] : memref<2x!tpu.dma_semaphore, #tpu.memory_space<semaphore_mem>> -> memref<1x!tpu.dma_semaphore, #tpu.memory_space<semaphore_mem>>
    %414 = tpu.memref_squeeze %413 : memref<1x!tpu.dma_semaphore, #tpu.memory_space<semaphore_mem>> -> memref<!tpu.dma_semaphore, #tpu.memory_space<semaphore_mem>>
    tpu.wait_dma2 semaphore(%414 : memref<!tpu.dma_semaphore, #tpu.memory_space<semaphore_mem>>) src(%410 : memref<128x512xbf16, #tpu.memory_space<any>>) dst(%412 : memref<128x512xbf16, #tpu.memory_space<vmem>>)
    %415 = arith.truncf %386 : vector<8x128xf32> to vector<8x128xbf16>
    %c0_112 = arith.constant 0 : index
    %c0_113 = arith.constant 0 : index
    %c0_114 = arith.constant 0 : index
    %416 = vector.load %arg8[%c0_112, %c0_113, %c0_114] : memref<2x128x1536xbf16, #tpu.memory_space<vmem>>, vector<1x128x512xbf16>
    %417 = vector.shape_cast %416 : vector<1x128x512xbf16> to vector<128x512xbf16>
    %cst_115 = arith.constant dense<0.000000e+00> : vector<8x512xf32>
    %418 = tpu.matmul %415, %417, %cst_115 {dimension_numbers = #tpu.dot_dimension_numbers<[1], [0], [0], [1], [0, 0, 1, 1], [], []>} : vector<8x128xbf16>, vector<128x512xbf16>, vector<8x512xf32> -> vector<8x512xf32>
    %c0_116 = arith.constant 0 : index
    %c5120 = arith.constant 5120 : index
    %419 = vector.load %arg5[%c0_116, %c5120] : memref<1x5632xf32, #tpu.memory_space<vmem>>, vector<1x512xf32>
    %420 = vector.broadcast %419 : vector<1x512xf32> to vector<8x512xf32>
    %421 = arith.addf %418, %420 : vector<8x512xf32>
    %422 = vector.broadcast %406 : f32 to vector<8x128xf32>
    %423 = arith.mulf %422, %386 : vector<8x128xf32>
    %424 = vector.extract_strided_slice %421 {offsets = [0, 0], sizes = [8, 128], strides = [1, 1]} : vector<8x512xf32> to vector<8x128xf32>
    %425 = vector.broadcast %407 : f32 to vector<8x128xf32>
    %426 = arith.mulf %425, %424 : vector<8x128xf32>
    %427 = arith.addf %423, %426 : vector<8x128xf32>
    %428 = vector.extract_strided_slice %421 {offsets = [0, 128], sizes = [8, 128], strides = [1, 1]} : vector<8x512xf32> to vector<8x128xf32>
    %cst_117 = arith.constant 0.000000e+00 : f32
    %429 = vector.broadcast %cst_117 : f32 to vector<8x128xf32>
    %430 = arith.maximumf %428, %429 : vector<8x128xf32>
    %431 = vector.broadcast %408 : f32 to vector<8x128xf32>
    %432 = arith.mulf %431, %430 : vector<8x128xf32>
    %433 = arith.addf %427, %432 : vector<8x128xf32>
    %434 = vector.extract_strided_slice %421 {offsets = [0, 256], sizes = [8, 128], strides = [1, 1]} : vector<8x512xf32> to vector<8x128xf32>
    %435 = math.tanh %434 : vector<8x128xf32>
    %436 = vector.broadcast %409 : f32 to vector<8x128xf32>
    %437 = arith.mulf %436, %435 : vector<8x128xf32>
    %438 = arith.addf %433, %437 : vector<8x128xf32>
    %439 = arith.addf %404, %438 : vector<8x128xf32>
    %c0_118 = arith.constant 0 : index
    %c384 = arith.constant 384 : index
    %440 = vector.load %arg7[%c0_118, %c384] : memref<8x512xf32, #tpu.memory_space<vmem>>, vector<8x128xf32>
    tpu.vector_store %arg7[%c0_118, %c384], %439 {strides = array<i32>} : memref<8x512xf32, #tpu.memory_space<vmem>>, vector<8x128xf32>,
    return
  }
}

</mosaic_0001>

<llo_original>
// kernel: search_cell_forward.1
$region0: #{search_cell_forward.1}
  #allocation0 [shape = 'u32[]', space=smem, size = 0x4, offset = 0x4, fixed_abs, tag = 'smem constant byte address 0x4 - core index']
  #allocation1 [shape = 'u32[144,128]{1,0:T(1,128)}', space=vmem, size = 0x12000, scoped, tag = 'internal scratch']
  #allocation2 [shape = 'bf16[2,128,1536]{2,1,0:T(16,128)(2,1)}', space=vmem, size = 0xc0000, scoped, tag = 'scratch operand']
  #allocation3 [shape = 's32[2]{0}', space=sflag, size = 0x8, scoped, tag = 'scratch operand']
  #allocation16 [shape = 's32[]', space=sflag, size = 0x4, offset = 0, fixed_abs, tag = 'sflag constant byte address 0x0 - dummy sync flag']
  #allocation18 [shape = 's32[]', space=sflag, size = 0x4, offset = 0, fixed_abs, tag = 'sflag constant byte address 0x0 - dummy sync flag']
  #allocation20 [shape = 's32[]', space=sflag, size = 0x4, offset = 0, fixed_abs, tag = 'sflag constant byte address 0x0 - dummy sync flag']
  #allocation22 [shape = 's32[]', space=sflag, size = 0x4, offset = 0, fixed_abs, tag = 'sflag constant byte address 0x0 - dummy sync flag']
  #allocation24 [shape = 's32[]', space=sflag, size = 0x4, offset = 0, fixed_abs, tag = 'sflag constant byte address 0x0 - dummy sync flag']
  %s0 = inlined_call_operand.vmem [shape: f32[70], index: 0, kind: input, shape index: {}]
  %s1 = inlined_call_operand.hbm [shape: f32[8,128], index: 1, kind: input, shape index: {}]
  %s2 = inlined_call_operand.hbm [shape: f32[8,128], index: 2, kind: input, shape index: {}]
  %s3 = inlined_call_operand.hbm [shape: bf16[128,128], index: 3, kind: input, shape index: {}]
  %s4 = inlined_call_operand.hbm [shape: bf16[128,128], index: 4, kind: input, shape index: {}]
  %s5 = inlined_call_operand.hbm [shape: f32[1,5632], index: 5, kind: input, shape index: {}]
  %s6 = inlined_call_operand.hbm [shape: bf16[128,5632], index: 6, kind: input, shape index: {}]
  %s7 = inlined_call_operand.hbm [shape: f32[8,512], index: 7, kind: output, shape index: {}]
  %s8 = sld [smem:[#allocation0]]
  $region58: #{search_cell_forward.1} parent=0
    _
  %s10 = ssub.s32 1, %s8
  %s11 = scalar_select 0, %s10, %s8
  $region1: #{search_cell_forward.1} parent=0
    #allocation4 [shape = 'u8[512]{0}', space=smem, size = 0x200, scoped, tag = 'input window, operand 0, single buffered']
    #allocation5 [shape = 's32[1]{0}', space=sflag, size = 0x4, scoped, tag = 'scoped memory for search_cell_forward.1']
    #allocation6 [shape = 's32[1]{0}', space=sflag, size = 0x4, scoped, tag = 'scoped memory for search_cell_forward.1']
    #allocation7 [shape = 's32[1]{0}', space=sflag, size = 0x4, scoped, tag = 'scoped memory for search_cell_forward.1']
    #allocation8 [shape = 'u8[4096]{0}', space=vmem, size = 0x1000, scoped, tag = 'input window, operand 1, single buffered']
    #allocation9 [shape = 'u8[4096]{0}', space=vmem, size = 0x1000, scoped, tag = 'input window, operand 2, single buffered']
    #allocation10 [shape = 's32[1]{0}', space=sflag, size = 0x4, scoped, tag = 'scoped memory for search_cell_forward.1']
    #allocation11 [shape = 'u8[32768]{0}', space=vmem, size = 0x8000, scoped, tag = 'input window, operand 3, single buffered']
    #allocation12 [shape = 'u8[32768]{0}', space=vmem, size = 0x8000, scoped, tag = 'input window, operand 4, single buffered']
    #allocation13 [shape = 's32[1]{0}', space=sflag, size = 0x4, scoped, tag = 'scoped memory for search_cell_forward.1']
    #allocation14 [shape = 'u8[22528]{0}', space=vmem, size = 0x5800, scoped, tag = 'input window, operand 5, single buffered']
    #allocation15 [shape = 'u8[16384]{0}', space=vmem, size = 0x4000, scoped, tag = 'output window, operand 0, single buffered']
    #allocation17 [shape = 'u32[9]{0}', space=smem, size = 0x24, scoped, tag = 'DMA stride descriptor']
    #allocation19 [shape = 'u32[9]{0}', space=smem, size = 0x24, scoped, tag = 'DMA stride descriptor']
    #allocation21 [shape = 'u32[9]{0}', space=smem, size = 0x24, scoped, tag = 'DMA stride descriptor']
    #allocation23 [shape = 'u32[9]{0}', space=smem, size = 0x24, scoped, tag = 'DMA stride descriptor']
    #allocation25 [shape = 'u32[9]{0}', space=smem, size = 0x24, scoped, tag = 'DMA stride descriptor']
    %12 = vsyncpa [#allocation7], 0
    %13 = vsyncpa [#allocation5], 0
    %14 = vsyncpa [#allocation10], 0
    %15 = vsyncpa [#allocation13], 0
    %16 = vsyncpa [#allocation6], 0
    // Predicated region
    $region2: #{search_cell_forward.1} parent=1 // pred_check
      _
    $region3: #{search_cell_forward.1} parent=1 // pred_check_branch
      %18 = sbr.rel (0) target = $region5
    $region4: #{search_cell_forward.1} parent=1 // pred_region
      %s20 = ssub.s32 16, 16
      %21 = vsyncadd [#allocation7], %s20
      %s23 = sshll.u32 %s0, 4
      %s24 = int_to_ptr.vmem [resolvable:$true] %s23
      %26 = dma.vmem_to_smem %s24, 16, [#allocation4], [#allocation7]
    $region5: #{search_cell_forward.1} parent=1 // pred_fallthru
      _
    // Predicated region
    $region6: #{search_cell_forward.1} parent=1 // pred_check
      _
    $region7: #{search_cell_forward.1} parent=1 // pred_check_branch
      %28 = sbr.rel (0) target = $region9
    $region8: #{search_cell_forward.1} parent=1 // pred_region
      %s30 = ssub.s32 128, 128
      %31 = vsyncadd [#allocation5], %s30
      %s33 = sshll.u32 [#allocation8], 4
      %s34 = int_to_ptr.vmem [resolvable:$true] %s33
      %36 = dma.hbm_to_vmem [thread:$0]  %s1, 128, %s34, [#allocation5]
    $region9: #{search_cell_forward.1} parent=1 // pred_fallthru
      _
    // Predicated region
    $region10: #{search_cell_forward.1} parent=1 // pred_check
      _
    $region11: #{search_cell_forward.1} parent=1 // pred_check_branch
      %38 = sbr.rel (0) target = $region13
    $region12: #{search_cell_forward.1} parent=1 // pred_region
      %s40 = ssub.s32 128, 128
      %41 = vsyncadd [#allocation10], %s40
      %s43 = sshll.u32 [#allocation9], 4
      %s44 = int_to_ptr.vmem [resolvable:$true] %s43
      %46 = dma.hbm_to_vmem [thread:$0]  %s2, 128, %s44, [#allocation10]
    $region13: #{search_cell_forward.1} parent=1 // pred_fallthru
      _
    // Predicated region
    $region14: #{search_cell_forward.1} parent=1 // pred_check
      _
    $region15: #{search_cell_forward.1} parent=1 // pred_check_branch
      %48 = sbr.rel (0) target = $region17
    $region16: #{search_cell_forward.1} parent=1 // pred_region
      %s50 = ssub.s32 1024, 1024
      %51 = vsyncadd [#allocation10], %s50
      %s52 = sshll.u32 [#allocation11], 4
      %s53 = int_to_ptr.vmem [resolvable:$true] %s52
      %58 = dma.hbm_to_vmem [thread:$0]  %s3, 1024, %s53, [#allocation10], 64, 64, 4
    $region17: #{search_cell_forward.1} parent=1 // pred_fallthru
      _
    // Predicated region
    $region18: #{search_cell_forward.1} parent=1 // pred_check
      _
    $region19: #{search_cell_forward.1} parent=1 // pred_check_branch
      %60 = sbr.rel (0) target = $region21
    $region20: #{search_cell_forward.1} parent=1 // pred_region
      %s62 = ssub.s32 1024, 1024
      %63 = vsyncadd [#allocation13], %s62
      %s64 = sshll.u32 [#allocation12], 4
      %s65 = int_to_ptr.vmem [resolvable:$true] %s64
      %70 = dma.hbm_to_vmem [thread:$0]  %s4, 1024, %s65, [#allocation13], 64, 64, 4
    $region21: #{search_cell_forward.1} parent=1 // pred_fallthru
      _
    // Predicated region
    $region22: #{search_cell_forward.1} parent=1 // pred_check
      _
    $region23: #{search_cell_forward.1} parent=1 // pred_check_branch
      %72 = sbr.rel (0) target = $region25
    $region24: #{search_cell_forward.1} parent=1 // pred_region
      %s74 = ssub.s32 704, 704
      %75 = vsyncadd [#allocation13], %s74
      %s77 = sshll.u32 [#allocation14], 4
      %s78 = int_to_ptr.vmem [resolvable:$true] %s77
      %80 = dma.hbm_to_vmem [thread:$0]  %s5, 704, %s78, [#allocation13]
    $region25: #{search_cell_forward.1} parent=1 // pred_fallthru
      _
    // Predicated region
    $region26: #{search_cell_forward.1} parent=1 // pred_check
      _
    $region27: #{search_cell_forward.1} parent=1 // pred_check_branch
      %82 = sbr.rel (0) target = $region29
    $region28: #{search_cell_forward.1} parent=1 // pred_region
      %83 = dma.done [#allocation7], 16
    $region29: #{search_cell_forward.1} parent=1 // pred_fallthru
      _
    // Predicated region
    $region30: #{search_cell_forward.1} parent=1 // pred_check
      _
    $region31: #{search_cell_forward.1} parent=1 // pred_check_branch
      %85 = sbr.rel (0) target = $region33
    $region32: #{search_cell_forward.1} parent=1 // pred_region
      %86 = dma.done [#allocation5], 128
    $region33: #{search_cell_forward.1} parent=1 // pred_fallthru
      _
    // Predicated region
    $region34: #{search_cell_forward.1} parent=1 // pred_check
      _
    $region35: #{search_cell_forward.1} parent=1 // pred_check_branch
      %88 = sbr.rel (0) target = $region37
    $region36: #{search_cell_forward.1} parent=1 // pred_region
      %89 = dma.done [#allocation10], 128
    $region37: #{search_cell_forward.1} parent=1 // pred_fallthru
      _
    // Predicated region
    $region38: #{search_cell_forward.1} parent=1 // pred_check
      _
    $region39: #{search_cell_forward.1} parent=1 // pred_check_branch
      %91 = sbr.rel (0) target = $region41
    $region40: #{search_cell_forward.1} parent=1 // pred_region
      %92 = dma.done [#allocation10], 1024
    $region41: #{search_cell_forward.1} parent=1 // pred_fallthru
      _
    // Predicated region
    $region42: #{search_cell_forward.1} parent=1 // pred_check
      _
    $region43: #{search_cell_forward.1} parent=1 // pred_check_branch
      %94 = sbr.rel (0) target = $region45
    $region44: #{search_cell_forward.1} parent=1 // pred_region
      %95 = dma.done [#allocation13], 1024
    $region45: #{search_cell_forward.1} parent=1 // pred_fallthru
      _
    // Predicated region
    $region46: #{search_cell_forward.1} parent=1 // pred_check
      _
    $region47: #{search_cell_forward.1} parent=1 // pred_check_branch
      %97 = sbr.rel (0) target = $region49
    $region48: #{search_cell_forward.1} parent=1 // pred_region
      %98 = dma.done [#allocation13], 704
    $region49: #{search_cell_forward.1} parent=1 // pred_fallthru
      _
    %99 = sfence
    %s102 = sshll.u32 1, 14
    %s103 = sxor.u32 4294967295, %s102
    %s105 = sld [smem:[#allocation0]]
    %s106 = sadd.s32 2, %s105
    %s108 = sshll.u32 7, 26
    %s109 = sxor.u32 4294967295, %s108
    %s110 = sand.u32 0, %s109
    %s111 = sshll.u32 %s106, 26
    %s112 = sor.u32 %s110, %s111
    %s113 = sshll.u32 [#allocation2], 4
    %s114 = int_to_ptr.vmem [resolvable:$true] %s113
    %117 = sst [smem:[#allocation17]] 5632
    %s118 = scalar_lea.smem [#allocation17], 1
    %119 = sst [smem:[%s118]] 1536
    %s120 = scalar_lea.smem [#allocation17], 2
    %121 = sst [smem:[%s120]] 12
    %s122 = scalar_lea.smem [#allocation17], 3
    %123 = sst [smem:[%s122]] 64
    %s124 = scalar_lea.smem [#allocation17], 4
    %125 = sst [smem:[%s124]] 128
    %s126 = scalar_lea.smem [#allocation17], 5
    %127 = sst [smem:[%s126]] 2
    %s128 = scalar_lea.smem [#allocation17], 6
    %129 = sst [smem:[%s128]] 2816
    %s130 = scalar_lea.smem [#allocation17], 7
    %131 = sst [smem:[%s130]] 64
    %s132 = scalar_lea.smem [#allocation17], 8
    %133 = sst [smem:[%s132]] 4
    %135 = dma.general %s6, 12288, %s114, [#allocation3], [#allocation16], [#allocation17], %s112, 0
    %v136 = vld [vmem:[#allocation8] sm:$0xff]
    %v137 = vpack.c.bf16 %v136, %v136
    %v138 = vld [vmem:[#allocation11] sm:$0xf]
    %v139 = vld [vmem:[#allocation11 + $0x4] sm:$0xf]
    %v140 = vld [vmem:[#allocation11 + $0x8] sm:$0xf]
    %v141 = vld [vmem:[#allocation11 + $0xc] sm:$0xf]
    %v142 = vld [vmem:[#allocation11 + $0x10] sm:$0xf]
    %v143 = vld [vmem:[#allocation11 + $0x14] sm:$0xf]
    %v144 = vld [vmem:[#allocation11 + $0x18] sm:$0xf]
    %v145 = vld [vmem:[#allocation11 + $0x1c] sm:$0xf]
    %v146 = vld [vmem:[#allocation11 + $0x20] sm:$0xf]
    %v147 = vld [vmem:[#allocation11 + $0x24] sm:$0xf]
    %v148 = vld [vmem:[#allocation11 + $0x28] sm:$0xf]
    %v149 = vld [vmem:[#allocation11 + $0x2c] sm:$0xf]
    %v150 = vld [vmem:[#allocation11 + $0x30] sm:$0xf]
    %v151 = vld [vmem:[#allocation11 + $0x34] sm:$0xf]
    %v152 = vld [vmem:[#allocation11 + $0x38] sm:$0xf]
    %v153 = vld [vmem:[#allocation11 + $0x3c] sm:$0xf]
    %v170 = vunpack.c.l.b16 %v138
    %v171 = vunpack.c.l.b16 %v139
    %v172 = vunpack.c.l.b16 %v140
    %v173 = vunpack.c.l.b16 %v141
    %v174 = vunpack.c.l.b16 %v142
    %v175 = vunpack.c.l.b16 %v143
    %v176 = vunpack.c.l.b16 %v144
    %v177 = vunpack.c.l.b16 %v145
    %v178 = vunpack.c.l.b16 %v146
    %v179 = vunpack.c.l.b16 %v147
    %v180 = vunpack.c.l.b16 %v148
    %v181 = vunpack.c.l.b16 %v149
    %v182 = vunpack.c.l.b16 %v150
    %v183 = vunpack.c.l.b16 %v151
    %v184 = vunpack.c.l.b16 %v152
    %v185 = vunpack.c.l.b16 %v153
    %v186 = vpack.c.b16 %v171, %v170
    %v187 = vpack.c.b16 %v173, %v172
    %v188 = vpack.c.b16 %v175, %v174
    %v189 = vpack.c.b16 %v177, %v176
    %v190 = vpack.c.b16 %v179, %v178
    %v191 = vpack.c.b16 %v181, %v180
    %v192 = vpack.c.b16 %v183, %v182
    %v193 = vpack.c.b16 %v185, %v184
    %202 = vmatprep.subr.bf16.mxu0 0
    %203 = vmatpush1.bf16.msra.mxu0 %v186
    %204 = vmatprep.subr.bf16.mxu0 0
    %205 = vmatpush1.bf16.msra.mxu0 %v187
    %206 = vmatprep.subr.bf16.mxu0 0
    %207 = vmatpush1.bf16.msra.mxu0 %v188
    %208 = vmatprep.subr.bf16.mxu0 0
    %209 = vmatpush1.bf16.msra.mxu0 %v189
    %210 = vmatprep.subr.bf16.mxu0 0
    %211 = vmatpush1.bf16.msra.mxu0 %v190
    %212 = vmatprep.subr.bf16.mxu0 0
    %213 = vmatpush1.bf16.msra.mxu0 %v191
    %214 = vmatprep.subr.bf16.mxu0 0
    %215 = vmatpush1.bf16.msra.mxu0 %v192
    %216 = vmatprep.subr.bf16.mxu0 0
    %217 = vmatpush1.bf16.msra.mxu0 %v193
    %218 = vmatprep.subr.bf16.mxu0 0
    %219 = vmatpush1.bf16.msra.mxu0 0
    %220 = vmatprep.subr.bf16.mxu0 0
    %221 = vmatpush1.bf16.msra.mxu0 0
    %222 = vmatprep.subr.bf16.mxu0 0
    %223 = vmatpush1.bf16.msra.mxu0 0
    %224 = vmatprep.subr.bf16.mxu0 0
    %225 = vmatpush1.bf16.msra.mxu0 0
    %226 = vmatprep.subr.bf16.mxu0 0
    %227 = vmatpush1.bf16.msra.mxu0 0
    %228 = vmatprep.subr.bf16.mxu0 0
    %229 = vmatpush1.bf16.msra.mxu0 0
    %230 = vmatprep.subr.bf16.mxu0 0
    %231 = vmatpush1.bf16.msra.mxu0 0
    %232 = vmatprep.subr.bf16.mxu0 0
    %233 = vmatpush1.bf16.msra.mxu0 0
    %234 = vmatprep.mubr.bf16.mxu0 0
    %235 = vmatmul.mubr.bf16.gmra.mrb[0].mxu0 %v137
    %v236 = vpop.f32.mrb[0].mxu0
    %v237 = vadd.f32 0.0, %v236
    %v238 = vpop.f32.mrb[0].mxu0
    %v239 = vpop.f32.mrb[0].mxu0
    %v240 = vpop.f32.mrb[0].mxu0
    %241 = vdwg.mxu0
    %v242 = vrot.slane %v237, 4
    %v243 = vadd.f32 %v237, %v242
    %v244 = vrot.slane %v243, 2
    %v245 = vadd.f32 %v243, %v244
    %v246 = vrot.slane %v245, 1
    %v247 = vadd.f32 %v245, %v246
    %v248 = vrcp.pop 8.0
    %v249 = vmul.f32 %v247, %v248
    %v250 = vmul.f32 %v237, %v237
    %v251 = vrot.slane %v250, 4
    %v252 = vadd.f32 %v250, %v251
    %v253 = vrot.slane %v252, 2
    %v254 = vadd.f32 %v252, %v253
    %v255 = vrot.slane %v254, 1
    %v256 = vadd.f32 %v254, %v255
    %v257 = vmul.f32 %v256, %v248
    %v258 = vmul.f32 %v249, %v249
    %v259 = vsub.f32 %v257, %v258
    %v260 = vsub.f32 %v237, %v249
    %v261 = vadd.f32 %v259, 1e-05
    %v262 = vrsqrt.pop %v261
    %v263 = vmul.f32 %v260, %v262
    %v264 = vmax.f32 %v263, 0.0
    %v265 = vld [vmem:[#allocation9] sm:$0xff]
    %v266 = vpack.c.bf16 %v265, %v265
    %v267 = vld [vmem:[#allocation12] sm:$0xf]
    %v268 = vld [vmem:[#allocation12 + $0x4] sm:$0xf]
    %v269 = vld [vmem:[#allocation12 + $0x8] sm:$0xf]
    %v270 = vld [vmem:[#allocation12 + $0xc] sm:$0xf]
    %v271 = vld [vmem:[#allocation12 + $0x10] sm:$0xf]
    %v272 = vld [vmem:[#allocation12 + $0x14] sm:$0xf]
    %v273 = vld [vmem:[#allocation12 + $0x18] sm:$0xf]
    %v274 = vld [vmem:[#allocation12 + $0x1c] sm:$0xf]
    %v275 = vld [vmem:[#allocation12 + $0x20] sm:$0xf]
    %v276 = vld [vmem:[#allocation12 + $0x24] sm:$0xf]
    %v277 = vld [vmem:[#allocation12 + $0x28] sm:$0xf]
    %v278 = vld [vmem:[#allocation12 + $0x2c] sm:$0xf]
    %v279 = vld [vmem:[#allocation12 + $0x30] sm:$0xf]
    %v280 = vld [vmem:[#allocation12 + $0x34] sm:$0xf]
    %v281 = vld [vmem:[#allocation12 + $0x38] sm:$0xf]
    %v282 = vld [vmem:[#allocation12 + $0x3c] sm:$0xf]
    %v299 = vunpack.c.l.b16 %v267
    %v300 = vunpack.c.l.b16 %v268
    %v301 = vunpack.c.l.b16 %v269
    %v302 = vunpack.c.l.b16 %v270
    %v303 = vunpack.c.l.b16 %v271
    %v304 = vunpack.c.l.b16 %v272
    %v305 = vunpack.c.l.b16 %v273
    %v306 = vunpack.c.l.b16 %v274
    %v307 = vunpack.c.l.b16 %v275
    %v308 = vunpack.c.l.b16 %v276
    %v309 = vunpack.c.l.b16 %v277
    %v310 = vunpack.c.l.b16 %v278
    %v311 = vunpack.c.l.b16 %v279
    %v312 = vunpack.c.l.b16 %v280
    %v313 = vunpack.c.l.b16 %v281
    %v314 = vunpack.c.l.b16 %v282
    %v315 = vpack.c.b16 %v300, %v299
    %v316 = vpack.c.b16 %v302, %v301
    %v317 = vpack.c.b16 %v304, %v303
    %v318 = vpack.c.b16 %v306, %v305
    %v319 = vpack.c.b16 %v308, %v307
    %v320 = vpack.c.b16 %v310, %v309
    %v321 = vpack.c.b16 %v312, %v311
    %v322 = vpack.c.b16 %v314, %v313
    %331 = vmatprep.subr.bf16.mxu0 0
    %332 = vmatpush1.bf16.msra.mxu0 %v315
    %333 = vmatprep.subr.bf16.mxu0 0
    %334 = vmatpush1.bf16.msra.mxu0 %v316
    %335 = vmatprep.subr.bf16.mxu0 0
    %336 = vmatpush1.bf16.msra.mxu0 %v317
    %337 = vmatprep.subr.bf16.mxu0 0
    %338 = vmatpush1.bf16.msra.mxu0 %v318
    %339 = vmatprep.subr.bf16.mxu0 0
    %340 = vmatpush1.bf16.msra.mxu0 %v319
    %341 = vmatprep.subr.bf16.mxu0 0
    %342 = vmatpush1.bf16.msra.mxu0 %v320
    %343 = vmatprep.subr.bf16.mxu0 0
    %344 = vmatpush1.bf16.msra.mxu0 %v321
    %345 = vmatprep.subr.bf16.mxu0 0
    %346 = vmatpush1.bf16.msra.mxu0 %v322
    %347 = vmatprep.subr.bf16.mxu0 0
    %348 = vmatpush1.bf16.msra.mxu0 0
    %349 = vmatprep.subr.bf16.mxu0 0
    %350 = vmatpush1.bf16.msra.mxu0 0
    %351 = vmatprep.subr.bf16.mxu0 0
    %352 = vmatpush1.bf16.msra.mxu0 0
    %353 = vmatprep.subr.bf16.mxu0 0
    %354 = vmatpush1.bf16.msra.mxu0 0
    %355 = vmatprep.subr.bf16.mxu0 0
    %356 = vmatpush1.bf16.msra.mxu0 0
    %357 = vmatprep.subr.bf16.mxu0 0
    %358 = vmatpush1.bf16.msra.mxu0 0
    %359 = vmatprep.subr.bf16.mxu0 0
    %360 = vmatpush1.bf16.msra.mxu0 0
    %361 = vmatprep.subr.bf16.mxu0 0
    %362 = vmatpush1.bf16.msra.mxu0 0
    %363 = vmatprep.mubr.bf16.mxu0 0
    %364 = vmatmul.mubr.bf16.gmra.mrb[0].mxu0 %v266
    %v365 = vpop.f32.mrb[0].mxu0
    %v366 = vadd.f32 0.0, %v365
    %v367 = vpop.f32.mrb[0].mxu0
    %v368 = vpop.f32.mrb[0].mxu0
    %v369 = vpop.f32.mrb[0].mxu0
    %370 = vdwg.mxu0
    %v371 = vrot.slane %v366, 4
    %v372 = vadd.f32 %v366, %v371
    %v373 = vrot.slane %v372, 2
    %v374 = vadd.f32 %v372, %v373
    %v375 = vrot.slane %v374, 1
    %v376 = vadd.f32 %v374, %v375
    %v377 = vmul.f32 %v376, %v248
    %v378 = vmul.f32 %v366, %v366
    %v379 = vrot.slane %v378, 4
    %v380 = vadd.f32 %v378, %v379
    %v381 = vrot.slane %v380, 2
    %v382 = vadd.f32 %v380, %v381
    %v383 = vrot.slane %v382, 1
    %v384 = vadd.f32 %v382, %v383
    %v385 = vmul.f32 %v384, %v248
    %v386 = vmul.f32 %v377, %v377
    %v387 = vsub.f32 %v385, %v386
    %v388 = vsub.f32 %v366, %v377
    %v389 = vadd.f32 %v387, 1e-05
    %v390 = vrsqrt.pop %v389
    %v391 = vmul.f32 %v388, %v390
    %v392 = vmax.f32 %v391, 0.0
    %s393 = sld [smem:[#allocation4 + $0x1]]
    %s394 = sld [smem:[#allocation4 + $0x2]]
    %s395 = sld [smem:[#allocation4 + $0x3]]
    %s396 = sld [smem:[#allocation4 + $0x4]]
    %s397 = sld [smem:[#allocation4 + $0xb]]
    %s398 = sld [smem:[#allocation4 + $0xc]]
    %s399 = sld [smem:[#allocation4 + $0xd]]
    %s400 = sld [smem:[#allocation4 + $0xe]]
    %s401 = sld [smem:[#allocation4 + $0x1a]]
    %s402 = sld [smem:[#allocation4 + $0x1b]]
    %s403 = sld [smem:[#allocation4 + $0x1c]]
    %s404 = sld [smem:[#allocation4 + $0x1d]]
    %s405 = sld [smem:[#allocation4 + $0x2e]]
    %s406 = sld [smem:[#allocation4 + $0x2f]]
    %s407 = sld [smem:[#allocation4 + $0x30]]
    %s408 = sld [smem:[#allocation4 + $0x31]]
    %s409 = smul.u32 4, 16
    %s410 = smul.u32 %s409, 12
    %s411 = sshll.u32 %s410, 4
    %412 = dma.done [#allocation3], %s411
    %s413 = scalar_lea.hbm %s6, 768
    %s414 = scalar_lea.vmem [#allocation2], 768
    %s415 = scalar_lea.sflag [#allocation3], 1
    %s417 = sshll.u32 1, 14
    %s418 = sxor.u32 4294967295, %s417
    %s420 = sadd.s32 2, %s105
    %s422 = sshll.u32 7, 26
    %s423 = sxor.u32 4294967295, %s422
    %s424 = sand.u32 0, %s423
    %s425 = sshll.u32 %s420, 26
    %s426 = sor.u32 %s424, %s425
    %s427 = sshll.u32 %s414, 4
    %s428 = int_to_ptr.vmem [resolvable:$true] %s427
    %431 = sst [smem:[#allocation19]] 5632
    %s432 = scalar_lea.smem [#allocation19], 1
    %433 = sst [smem:[%s432]] 1536
    %s434 = scalar_lea.smem [#allocation19], 2
    %435 = sst [smem:[%s434]] 12
    %s436 = scalar_lea.smem [#allocation19], 3
    %437 = sst [smem:[%s436]] 64
    %s438 = scalar_lea.smem [#allocation19], 4
    %439 = sst [smem:[%s438]] 128
    %s440 = scalar_lea.smem [#allocation19], 5
    %441 = sst [smem:[%s440]] 2
    %s442 = scalar_lea.smem [#allocation19], 6
    %443 = sst [smem:[%s442]] 2816
    %s444 = scalar_lea.smem [#allocation19], 7
    %445 = sst [smem:[%s444]] 64
    %s446 = scalar_lea.smem [#allocation19], 8
    %447 = sst [smem:[%s446]] 4
    %449 = dma.general %s413, 12288, %s428, %s415, [#allocation18], [#allocation19], %s426, 0
    %v450 = vpack.c.bf16 %v264, %v264
    %v451 = vld [vmem:[#allocation2] sm:$0xff]
    %v452 = vld [vmem:[#allocation2 + $0x8] sm:$0xff]
    %v453 = vld [vmem:[#allocation2 + $0x10] sm:$0xff]
    %v454 = vld [vmem:[#allocation2 + $0x18] sm:$0xff]
    %v455 = vld [vmem:[#allocation2 + $0x20] sm:$0xff]
    %v456 = vld [vmem:[#allocation2 + $0x28] sm:$0xff]
    %v457 = vld [vmem:[#allocation2 + $0x30] sm:$0xff]
    %v458 = vld [vmem:[#allocation2 + $0x38] sm:$0xff]
    %v459 = vld [vmem:[#allocation2 + $0x40] sm:$0xff]
    %v460 = vld [vmem:[#allocation2 + $0x48] sm:$0xff]
    %v461 = vld [vmem:[#allocation2 + $0x50] sm:$0xff]
    %v462 = vld [vmem:[#allocation2 + $0x58] sm:$0xff]
    %v463 = vld [vmem:[#allocation2 + $0x60] sm:$0xff]
    %v464 = vld [vmem:[#allocation2 + $0x68] sm:$0xff]
    %v465 = vld [vmem:[#allocation2 + $0x70] sm:$0xff]
    %v466 = vld [vmem:[#allocation2 + $0x78] sm:$0xff]
    %v467 = vld [vmem:[#allocation2 + $0x80] sm:$0xff]
    %v468 = vld [vmem:[#allocation2 + $0x88] sm:$0xff]
    %v469 = vld [vmem:[#allocation2 + $0x90] sm:$0xff]
    %v470 = vld [vmem:[#allocation2 + $0x98] sm:$0xff]
    %v471 = vld [vmem:[#allocation2 + $0xa0] sm:$0xff]
    %v472 = vld [vmem:[#allocation2 + $0xa8] sm:$0xff]
    %v473 = vld [vmem:[#allocation2 + $0xb0] sm:$0xff]
    %v474 = vld [vmem:[#allocation2 + $0xb8] sm:$0xff]
    %v475 = vld [vmem:[#allocation2 + $0xc0] sm:$0xff]
    %v476 = vld [vmem:[#allocation2 + $0xc8] sm:$0xff]
    %v477 = vld [vmem:[#allocation2 + $0xd0] sm:$0xff]
    %v478 = vld [vmem:[#allocation2 + $0xd8] sm:$0xff]
    %v479 = vld [vmem:[#allocation2 + $0xe0] sm:$0xff]
    %v480 = vld [vmem:[#allocation2 + $0xe8] sm:$0xff]
    %v481 = vld [vmem:[#allocation2 + $0xf0] sm:$0xff]
    %v482 = vld [vmem:[#allocation2 + $0xf8] sm:$0xff]
    %v483 = vld [vmem:[#allocation2 + $0x100] sm:$0xff]
    %v484 = vld [vmem:[#allocation2 + $0x108] sm:$0xff]
    %v485 = vld [vmem:[#allocation2 + $0x110] sm:$0xff]
    %v486 = vld [vmem:[#allocation2 + $0x118] sm:$0xff]
    %v487 = vld [vmem:[#allocation2 + $0x120] sm:$0xff]
    %v488 = vld [vmem:[#allocation2 + $0x128] sm:$0xff]
    %v489 = vld [vmem:[#allocation2 + $0x130] sm:$0xff]
    %v490 = vld [vmem:[#allocation2 + $0x138] sm:$0xff]
    %v491 = vld [vmem:[#allocation2 + $0x140] sm:$0xff]
    %v492 = vld [vmem:[#allocation2 + $0x148] sm:$0xff]
    %v493 = vld [vmem:[#allocation2 + $0x150] sm:$0xff]
    %v494 = vld [vmem:[#allocation2 + $0x158] sm:$0xff]
    %v495 = vld [vmem:[#allocation2 + $0x160] sm:$0xff]
    %v496 = vld [vmem:[#allocation2 + $0x168] sm:$0xff]
    %v497 = vld [vmem:[#allocation2 + $0x170] sm:$0xff]
    %v498 = vld [vmem:[#allocation2 + $0x178] sm:$0xff]
    %v499 = vld [vmem:[#allocation2 + $0x180] sm:$0xff]
    %v500 = vld [vmem:[#allocation2 + $0x188] sm:$0xff]
    %v501 = vld [vmem:[#allocation2 + $0x190] sm:$0xff]
    %v502 = vld [vmem:[#allocation2 + $0x198] sm:$0xff]
    %v503 = vld [vmem:[#allocation2 + $0x1a0] sm:$0xff]
    %v504 = vld [vmem:[#allocation2 + $0x1a8] sm:$0xff]
    %v505 = vld [vmem:[#allocation2 + $0x1b0] sm:$0xff]
    %v506 = vld [vmem:[#allocation2 + $0x1b8] sm:$0xff]
    %v507 = vld [vmem:[#allocation2 + $0x1c0] sm:$0xff]
    %v508 = vld [vmem:[#allocation2 + $0x1c8] sm:$0xff]
    %v509 = vld [vmem:[#allocation2 + $0x1d0] sm:$0xff]
    %v510 = vld [vmem:[#allocation2 + $0x1d8] sm:$0xff]
    %v511 = vld [vmem:[#allocation2 + $0x1e0] sm:$0xff]
    %v512 = vld [vmem:[#allocation2 + $0x1e8] sm:$0xff]
    %v513 = vld [vmem:[#allocation2 + $0x1f0] sm:$0xff]
    %v514 = vld [vmem:[#allocation2 + $0x1f8] sm:$0xff]
    %v515 = vld [vmem:[#allocation2 + $0x200] sm:$0xff]
    %v516 = vld [vmem:[#allocation2 + $0x208] sm:$0xff]
    %v517 = vld [vmem:[#allocation2 + $0x210] sm:$0xff]
    %v518 = vld [vmem:[#allocation2 + $0x218] sm:$0xff]
    %v519 = vld [vmem:[#allocation2 + $0x220] sm:$0xff]
    %v520 = vld [vmem:[#allocation2 + $0x228] sm:$0xff]
    %v521 = vld [vmem:[#allocation2 + $0x230] sm:$0xff]
    %v522 = vld [vmem:[#allocation2 + $0x238] sm:$0xff]
    %v523 = vld [vmem:[#allocation2 + $0x240] sm:$0xff]
    %v524 = vld [vmem:[#allocation2 + $0x248] sm:$0xff]
    %v525 = vld [vmem:[#allocation2 + $0x250] sm:$0xff]
    %v526 = vld [vmem:[#allocation2 + $0x258] sm:$0xff]
    %v527 = vld [vmem:[#allocation2 + $0x260] sm:$0xff]
    %v528 = vld [vmem:[#allocation2 + $0x268] sm:$0xff]
    %v529 = vld [vmem:[#allocation2 + $0x270] sm:$0xff]
    %v530 = vld [vmem:[#allocation2 + $0x278] sm:$0xff]
    %v531 = vld [vmem:[#allocation2 + $0x280] sm:$0xff]
    %v532 = vld [vmem:[#allocation2 + $0x288] sm:$0xff]
    %v533 = vld [vmem:[#allocation2 + $0x290] sm:$0xff]
    %v534 = vld [vmem:[#allocation2 + $0x298] sm:$0xff]
    %v535 = vld [vmem:[#allocation2 + $0x2a0] sm:$0xff]
    %v536 = vld [vmem:[#allocation2 + $0x2a8] sm:$0xff]
    %v537 = vld [vmem:[#allocation2 + $0x2b0] sm:$0xff]
    %v538 = vld [vmem:[#allocation2 + $0x2b8] sm:$0xff]
    %v539 = vld [vmem:[#allocation2 + $0x2c0] sm:$0xff]
    %v540 = vld [vmem:[#allocation2 + $0x2c8] sm:$0xff]
    %v541 = vld [vmem:[#allocation2 + $0x2d0] sm:$0xff]
    %v542 = vld [vmem:[#allocation2 + $0x2d8] sm:$0xff]
    %v543 = vld [vmem:[#allocation2 + $0x2e0] sm:$0xff]
    %v544 = vld [vmem:[#allocation2 + $0x2e8] sm:$0xff]
    %v545 = vld [vmem:[#allocation2 + $0x2f0] sm:$0xff]
    %v546 = vld [vmem:[#allocation2 + $0x2f8] sm:$0xff]
    %v547 = vld [vmem:[#allocation14] sm:$0xff]
    %v548 = vld [vmem:[#allocation14 + $0x8] sm:$0xf]
    %v551 = vlaneseq
    %v552 = vshrl.u32 %v551, 7
    %v553 = vsub.s32 0, %v552
    %v554 = vrot.slane %v547, %v553
    %v555 = vlaneseq
    %v556 = vshrl.u32 %v555, 7
    %v557 = vsub.s32 1, %v556
    %v558 = vrot.slane %v547, %v557
    %v559 = vlaneseq
    %v560 = vshrl.u32 %v559, 7
    %v561 = vsub.s32 2, %v560
    %v562 = vrot.slane %v547, %v561
    %v563 = vlaneseq
    %v564 = vshrl.u32 %v563, 7
    %v565 = vsub.s32 3, %v564
    %v566 = vrot.slane %v547, %v565
    %v567 = vlaneseq
    %v568 = vshrl.u32 %v567, 7
    %v569 = vsub.s32 4, %v568
    %v570 = vrot.slane %v547, %v569
    %v571 = vlaneseq
    %v572 = vshrl.u32 %v571, 7
    %v573 = vsub.s32 5, %v572
    %v574 = vrot.slane %v547, %v573
    %v575 = vlaneseq
    %v576 = vshrl.u32 %v575, 7
    %v577 = vsub.s32 6, %v576
    %v578 = vrot.slane %v547, %v577
    %v579 = vlaneseq
    %v580 = vshrl.u32 %v579, 7
    %v581 = vsub.s32 7, %v580
    %v582 = vrot.slane %v547, %v581
    %v583 = vlaneseq
    %v584 = vshrl.u32 %v583, 7
    %v585 = vsub.s32 0, %v584
    %v586 = vrot.slane %v548, %v585
    %v587 = vlaneseq
    %v588 = vshrl.u32 %v587, 7
    %v589 = vsub.s32 1, %v588
    %v590 = vrot.slane %v548, %v589
    %v591 = vlaneseq
    %v592 = vshrl.u32 %v591, 7
    %v593 = vsub.s32 2, %v592
    %v594 = vrot.slane %v548, %v593
    %v595 = vlaneseq
    %v596 = vshrl.u32 %v595, 7
    %v597 = vsub.s32 3, %v596
    %v598 = vrot.slane %v548, %v597
    %611 = vmatprep.subr.bf16.mxu0 %v452
    %612 = vmatpush1.bf16.msra.mxu0 %v451
    %613 = vmatprep.subr.bf16.mxu0 %v464
    %614 = vmatpush1.bf16.msra.mxu0 %v463
    %615 = vmatprep.subr.bf16.mxu0 %v476
    %616 = vmatpush1.bf16.msra.mxu0 %v475
    %617 = vmatprep.subr.bf16.mxu0 %v488
    %618 = vmatpush1.bf16.msra.mxu0 %v487
    %619 = vmatprep.subr.bf16.mxu0 %v500
    %620 = vmatpush1.bf16.msra.mxu0 %v499
    %621 = vmatprep.subr.bf16.mxu0 %v512
    %622 = vmatpush1.bf16.msra.mxu0 %v511
    %623 = vmatprep.subr.bf16.mxu0 %v524
    %624 = vmatpush1.bf16.msra.mxu0 %v523
    %625 = vmatprep.subr.bf16.mxu0 %v536
    %626 = vmatpush1.bf16.msra.mxu0 %v535
    %627 = vmatprep.subr.bf16.mxu0 0
    %628 = vmatpush1.bf16.msra.mxu0 0
    %629 = vmatprep.subr.bf16.mxu0 0
    %630 = vmatpush1.bf16.msra.mxu0 0
    %631 = vmatprep.subr.bf16.mxu0 0
    %632 = vmatpush1.bf16.msra.mxu0 0
    %633 = vmatprep.subr.bf16.mxu0 0
    %634 = vmatpush1.bf16.msra.mxu0 0
    %635 = vmatprep.subr.bf16.mxu0 0
    %636 = vmatpush1.bf16.msra.mxu0 0
    %637 = vmatprep.subr.bf16.mxu0 0
    %638 = vmatpush1.bf16.msra.mxu0 0
    %639 = vmatprep.subr.bf16.mxu0 0
    %640 = vmatpush1.bf16.msra.mxu0 0
    %641 = vmatprep.subr.bf16.mxu0 0
    %642 = vmatpush1.bf16.msra.mxu0 0
    %643 = vmatprep.mubr.bf16.mxu0 0
    %644 = vmatmul.mubr.bf16.gmra.mrb[0].mxu0 %v450
    %v645 = vpop.f32.mrb[0].mxu0
    %v646 = vadd.f32 %v554, %v645
    %v647 = vpop.f32.mrb[0].mxu0
    %v648 = vadd.f32 %v558, %v647
    %v649 = vpop.f32.mrb[0].mxu0
    %v650 = vpop.f32.mrb[0].mxu0
    %651 = vdwg.mxu0
    %652 = vmatprep.subr.bf16.mxu0 %v454
    %653 = vmatpush1.bf16.msra.mxu0 %v453
    %654 = vmatprep.subr.bf16.mxu0 %v466
    %655 = vmatpush1.bf16.msra.mxu0 %v465
    %656 = vmatprep.subr.bf16.mxu0 %v478
    %657 = vmatpush1.bf16.msra.mxu0 %v477
    %658 = vmatprep.subr.bf16.mxu0 %v490
    %659 = vmatpush1.bf16.msra.mxu0 %v489
    %660 = vmatprep.subr.bf16.mxu0 %v502
    %661 = vmatpush1.bf16.msra.mxu0 %v501
    %662 = vmatprep.subr.bf16.mxu0 %v514
    %663 = vmatpush1.bf16.msra.mxu0 %v513
    %664 = vmatprep.subr.bf16.mxu0 %v526
    %665 = vmatpush1.bf16.msra.mxu0 %v525
    %666 = vmatprep.subr.bf16.mxu0 %v538
    %667 = vmatpush1.bf16.msra.mxu0 %v537
    %668 = vmatprep.subr.bf16.mxu0 0
    %669 = vmatpush1.bf16.msra.mxu0 0
    %670 = vmatprep.subr.bf16.mxu0 0
    %671 = vmatpush1.bf16.msra.mxu0 0
    %672 = vmatprep.subr.bf16.mxu0 0
    %673 = vmatpush1.bf16.msra.mxu0 0
    %674 = vmatprep.subr.bf16.mxu0 0
    %675 = vmatpush1.bf16.msra.mxu0 0
    %676 = vmatprep.subr.bf16.mxu0 0
    %677 = vmatpush1.bf16.msra.mxu0 0
    %678 = vmatprep.subr.bf16.mxu0 0
    %679 = vmatpush1.bf16.msra.mxu0 0
    %680 = vmatprep.subr.bf16.mxu0 0
    %681 = vmatpush1.bf16.msra.mxu0 0
    %682 = vmatprep.subr.bf16.mxu0 0
    %683 = vmatpush1.bf16.msra.mxu0 0
    %684 = vmatprep.mubr.bf16.mxu0 0
    %685 = vmatmul.mubr.bf16.gmra.mrb[0].mxu0 %v450
    %v686 = vpop.f32.mrb[0].mxu0
    %v687 = vadd.f32 %v562, %v686
    %v688 = vpop.f32.mrb[0].mxu0
    %v689 = vadd.f32 %v566, %v688
    %v690 = vpop.f32.mrb[0].mxu0
    %v691 = vpop.f32.mrb[0].mxu0
    %692 = vdwg.mxu0
    %693 = vmatprep.subr.bf16.mxu0 %v456
    %694 = vmatpush1.bf16.msra.mxu0 %v455
    %695 = vmatprep.subr.bf16.mxu0 %v468
    %696 = vmatpush1.bf16.msra.mxu0 %v467
    %697 = vmatprep.subr.bf16.mxu0 %v480
    %698 = vmatpush1.bf16.msra.mxu0 %v479
    %699 = vmatprep.subr.bf16.mxu0 %v492
    %700 = vmatpush1.bf16.msra.mxu0 %v491
    %701 = vmatprep.subr.bf16.mxu0 %v504
    %702 = vmatpush1.bf16.msra.mxu0 %v503
    %703 = vmatprep.subr.bf16.mxu0 %v516
    %704 = vmatpush1.bf16.msra.mxu0 %v515
    %705 = vmatprep.subr.bf16.mxu0 %v528
    %706 = vmatpush1.bf16.msra.mxu0 %v527
    %707 = vmatprep.subr.bf16.mxu0 %v540
    %708 = vmatpush1.bf16.msra.mxu0 %v539
    %709 = vmatprep.subr.bf16.mxu0 0
    %710 = vmatpush1.bf16.msra.mxu0 0
    %711 = vmatprep.subr.bf16.mxu0 0
    %712 = vmatpush1.bf16.msra.mxu0 0
    %713 = vmatprep.subr.bf16.mxu0 0
    %714 = vmatpush1.bf16.msra.mxu0 0
    %715 = vmatprep.subr.bf16.mxu0 0
    %716 = vmatpush1.bf16.msra.mxu0 0
    %717 = vmatprep.subr.bf16.mxu0 0
    %718 = vmatpush1.bf16.msra.mxu0 0
    %719 = vmatprep.subr.bf16.mxu0 0
    %720 = vmatpush1.bf16.msra.mxu0 0
    %721 = vmatprep.subr.bf16.mxu0 0
    %722 = vmatpush1.bf16.msra.mxu0 0
    %723 = vmatprep.subr.bf16.mxu0 0
    %724 = vmatpush1.bf16.msra.mxu0 0
    %725 = vmatprep.mubr.bf16.mxu0 0
    %726 = vmatmul.mubr.bf16.gmra.mrb[0].mxu0 %v450
    %v727 = vpop.f32.mrb[0].mxu0
    %v728 = vadd.f32 %v570, %v727
    %v729 = vpop.f32.mrb[0].mxu0
    %v730 = vadd.f32 %v574, %v729
    %v731 = vpop.f32.mrb[0].mxu0
    %v732 = vpop.f32.mrb[0].mxu0
    %733 = vdwg.mxu0
    %734 = vmatprep.subr.bf16.mxu0 %v458
    %735 = vmatpush1.bf16.msra.mxu0 %v457
    %736 = vmatprep.subr.bf16.mxu0 %v470
    %737 = vmatpush1.bf16.msra.mxu0 %v469
    %738 = vmatprep.subr.bf16.mxu0 %v482
    %739 = vmatpush1.bf16.msra.mxu0 %v481
    %740 = vmatprep.subr.bf16.mxu0 %v494
    %741 = vmatpush1.bf16.msra.mxu0 %v493
    %742 = vmatprep.subr.bf16.mxu0 %v506
    %743 = vmatpush1.bf16.msra.mxu0 %v505
    %744 = vmatprep.subr.bf16.mxu0 %v518
    %745 = vmatpush1.bf16.msra.mxu0 %v517
    %746 = vmatprep.subr.bf16.mxu0 %v530
    %747 = vmatpush1.bf16.msra.mxu0 %v529
    %748 = vmatprep.subr.bf16.mxu0 %v542
    %749 = vmatpush1.bf16.msra.mxu0 %v541
    %750 = vmatprep.subr.bf16.mxu0 0
    %751 = vmatpush1.bf16.msra.mxu0 0
    %752 = vmatprep.subr.bf16.mxu0 0
    %753 = vmatpush1.bf16.msra.mxu0 0
    %754 = vmatprep.subr.bf16.mxu0 0
    %755 = vmatpush1.bf16.msra.mxu0 0
    %756 = vmatprep.subr.bf16.mxu0 0
    %757 = vmatpush1.bf16.msra.mxu0 0
    %758 = vmatprep.subr.bf16.mxu0 0
    %759 = vmatpush1.bf16.msra.mxu0 0
    %760 = vmatprep.subr.bf16.mxu0 0
    %761 = vmatpush1.bf16.msra.mxu0 0
    %762 = vmatprep.subr.bf16.mxu0 0
    %763 = vmatpush1.bf16.msra.mxu0 0
    %764 = vmatprep.subr.bf16.mxu0 0
    %765 = vmatpush1.bf16.msra.mxu0 0
    %766 = vmatprep.mubr.bf16.mxu0 0
    %767 = vmatmul.mubr.bf16.gmra.mrb[0].mxu0 %v450
    %v768 = vpop.f32.mrb[0].mxu0
    %v769 = vadd.f32 %v578, %v768
    %v770 = vpop.f32.mrb[0].mxu0
    %v771 = vadd.f32 %v582, %v770
    %v772 = vpop.f32.mrb[0].mxu0
    %v773 = vpop.f32.mrb[0].mxu0
    %774 = vdwg.mxu0
    %775 = vmatprep.subr.bf16.mxu0 %v460
    %776 = vmatpush1.bf16.msra.mxu0 %v459
    %777 = vmatprep.subr.bf16.mxu0 %v472
    %778 = vmatpush1.bf16.msra.mxu0 %v471
    %779 = vmatprep.subr.bf16.mxu0 %v484
    %780 = vmatpush1.bf16.msra.mxu0 %v483
    %781 = vmatprep.subr.bf16.mxu0 %v496
    %782 = vmatpush1.bf16.msra.mxu0 %v495
    %783 = vmatprep.subr.bf16.mxu0 %v508
    %784 = vmatpush1.bf16.msra.mxu0 %v507
    %785 = vmatprep.subr.bf16.mxu0 %v520
    %786 = vmatpush1.bf16.msra.mxu0 %v519
    %787 = vmatprep.subr.bf16.mxu0 %v532
    %788 = vmatpush1.bf16.msra.mxu0 %v531
    %789 = vmatprep.subr.bf16.mxu0 %v544
    %790 = vmatpush1.bf16.msra.mxu0 %v543
    %791 = vmatprep.subr.bf16.mxu0 0
    %792 = vmatpush1.bf16.msra.mxu0 0
    %793 = vmatprep.subr.bf16.mxu0 0
    %794 = vmatpush1.bf16.msra.mxu0 0
    %795 = vmatprep.subr.bf16.mxu0 0
    %796 = vmatpush1.bf16.msra.mxu0 0
    %797 = vmatprep.subr.bf16.mxu0 0
    %798 = vmatpush1.bf16.msra.mxu0 0
    %799 = vmatprep.subr.bf16.mxu0 0
    %800 = vmatpush1.bf16.msra.mxu0 0
    %801 = vmatprep.subr.bf16.mxu0 0
    %802 = vmatpush1.bf16.msra.mxu0 0
    %803 = vmatprep.subr.bf16.mxu0 0
    %804 = vmatpush1.bf16.msra.mxu0 0
    %805 = vmatprep.subr.bf16.mxu0 0
    %806 = vmatpush1.bf16.msra.mxu0 0
    %807 = vmatprep.mubr.bf16.mxu0 0
    %808 = vmatmul.mubr.bf16.gmra.mrb[0].mxu0 %v450
    %v809 = vpop.f32.mrb[0].mxu0
    %v810 = vadd.f32 %v586, %v809
    %v811 = vpop.f32.mrb[0].mxu0
    %v812 = vadd.f32 %v590, %v811
    %v813 = vpop.f32.mrb[0].mxu0
    %v814 = vpop.f32.mrb[0].mxu0
    %815 = vdwg.mxu0
    %816 = vmatprep.subr.bf16.mxu0 %v462
    %817 = vmatpush1.bf16.msra.mxu0 %v461
    %818 = vmatprep.subr.bf16.mxu0 %v474
    %819 = vmatpush1.bf16.msra.mxu0 %v473
    %820 = vmatprep.subr.bf16.mxu0 %v486
    %821 = vmatpush1.bf16.msra.mxu0 %v485
    %822 = vmatprep.subr.bf16.mxu0 %v498
    %823 = vmatpush1.bf16.msra.mxu0 %v497
    %824 = vmatprep.subr.bf16.mxu0 %v510
    %825 = vmatpush1.bf16.msra.mxu0 %v509
    %826 = vmatprep.subr.bf16.mxu0 %v522
    %827 = vmatpush1.bf16.msra.mxu0 %v521
    %828 = vmatprep.subr.bf16.mxu0 %v534
    %829 = vmatpush1.bf16.msra.mxu0 %v533
    %830 = vmatprep.subr.bf16.mxu0 %v546
    %831 = vmatpush1.bf16.msra.mxu0 %v545
    %832 = vmatprep.subr.bf16.mxu0 0
    %833 = vmatpush1.bf16.msra.mxu0 0
    %834 = vmatprep.subr.bf16.mxu0 0
    %835 = vmatpush1.bf16.msra.mxu0 0
    %836 = vmatprep.subr.bf16.mxu0 0
    %837 = vmatpush1.bf16.msra.mxu0 0
    %838 = vmatprep.subr.bf16.mxu0 0
    %839 = vmatpush1.bf16.msra.mxu0 0
    %840 = vmatprep.subr.bf16.mxu0 0
    %841 = vmatpush1.bf16.msra.mxu0 0
    %842 = vmatprep.subr.bf16.mxu0 0
    %843 = vmatpush1.bf16.msra.mxu0 0
    %844 = vmatprep.subr.bf16.mxu0 0
    %845 = vmatpush1.bf16.msra.mxu0 0
    %846 = vmatprep.subr.bf16.mxu0 0
    %847 = vmatpush1.bf16.msra.mxu0 0
    %848 = vmatprep.mubr.bf16.mxu0 0
    %849 = vmatmul.mubr.bf16.gmra.mrb[0].mxu0 %v450
    %v850 = vpop.f32.mrb[0].mxu0
    %v851 = vadd.f32 %v594, %v850
    %v852 = vpop.f32.mrb[0].mxu0
    %v853 = vadd.f32 %v598, %v852
    %v854 = vpop.f32.mrb[0].mxu0
    %v855 = vpop.f32.mrb[0].mxu0
    %856 = vdwg.mxu0
    %v857 = vstv %s393
    %v858 = vmul.f32 %v857, %v264
    %v859 = vstv %s394
    %v860 = vmul.f32 %v859, %v646
    %v861 = vadd.f32 %v858, %v860
    %v862 = vmax.f32 %v648, 0.0
    %v863 = vstv %s395
    %v864 = vmul.f32 %v863, %v862
    %v865 = vadd.f32 %v861, %v864
    %v866 = vtanh.pop %v687
    %v867 = vstv %s396
    %v868 = vmul.f32 %v867, %v866
    %v869 = vadd.f32 %v865, %v868
    %v870 = vstv %s397
    %v871 = vmul.f32 %v870, %v264
    %v872 = vstv %s398
    %v873 = vmul.f32 %v872, %v689
    %v874 = vadd.f32 %v871, %v873
    %v875 = vmax.f32 %v728, 0.0
    %v876 = vstv %s399
    %v877 = vmul.f32 %v876, %v875
    %v878 = vadd.f32 %v874, %v877
    %v879 = vtanh.pop %v730
    %v880 = vstv %s400
    %v881 = vmul.f32 %v880, %v879
    %v882 = vadd.f32 %v878, %v881
    %v883 = vstv %s401
    %v884 = vmul.f32 %v883, %v264
    %v885 = vstv %s402
    %v886 = vmul.f32 %v885, %v769
    %v887 = vadd.f32 %v884, %v886
    %v888 = vmax.f32 %v771, 0.0
    %v889 = vstv %s403
    %v890 = vmul.f32 %v889, %v888
    %v891 = vadd.f32 %v887, %v890
    %v892 = vtanh.pop %v810
    %v893 = vstv %s404
    %v894 = vmul.f32 %v893, %v892
    %v895 = vadd.f32 %v891, %v894
    %v896 = vstv %s405
    %v897 = vmul.f32 %v896, %v264
    %v898 = vstv %s406
    %v899 = vmul.f32 %v898, %v812
    %v900 = vadd.f32 %v897, %v899
    %v901 = vmax.f32 %v851, 0.0
    %v902 = vstv %s407
    %v903 = vmul.f32 %v902, %v901
    %v904 = vadd.f32 %v900, %v903
    %v905 = vtanh.pop %v853
    %v906 = vstv %s408
    %v907 = vmul.f32 %v906, %v905
    %v908 = vadd.f32 %v904, %v907
    %s909 = sld [smem:[#allocation4 + $0x6]]
    %s910 = sld [smem:[#allocation4 + $0x7]]
    %s911 = sld [smem:[#allocation4 + $0x8]]
    %s912 = sld [smem:[#allocation4 + $0x9]]
    %s913 = sld [smem:[#allocation4 + $0x10]]
    %s914 = sld [smem:[#allocation4 + $0x11]]
    %s915 = sld [smem:[#allocation4 + $0x12]]
    %s916 = sld [smem:[#allocation4 + $0x13]]
    %s917 = sld [smem:[#allocation4 + $0x1f]]
    %s918 = sld [smem:[#allocation4 + $0x20]]
    %s919 = sld [smem:[#allocation4 + $0x21]]
    %s920 = sld [smem:[#allocation4 + $0x22]]
    %s921 = sld [smem:[#allocation4 + $0x33]]
    %s922 = sld [smem:[#allocation4 + $0x34]]
    %s923 = sld [smem:[#allocation4 + $0x35]]
    %s924 = sld [smem:[#allocation4 + $0x36]]
    %s925 = sshll.u32 %s410, 4
    %926 = dma.done %s415, %s925
    %s927 = scalar_lea.hbm %s6, 1536
    %s929 = sshll.u32 1, 14
    %s930 = sxor.u32 4294967295, %s929
    %s932 = sadd.s32 2, %s105
    %s934 = sshll.u32 7, 26
    %s935 = sxor.u32 4294967295, %s934
    %s936 = sand.u32 0, %s935
    %s937 = sshll.u32 %s932, 26
    %s938 = sor.u32 %s936, %s937
    %s939 = sshll.u32 [#allocation2], 4
    %s940 = int_to_ptr.vmem [resolvable:$true] %s939
    %943 = sst [smem:[#allocation21]] 5632
    %s944 = scalar_lea.smem [#allocation21], 1
    %945 = sst [smem:[%s944]] 1536
    %s946 = scalar_lea.smem [#allocation21], 2
    %947 = sst [smem:[%s946]] 10
    %s948 = scalar_lea.smem [#allocation21], 3
    %949 = sst [smem:[%s948]] 64
    %s950 = scalar_lea.smem [#allocation21], 4
    %951 = sst [smem:[%s950]] 128
    %s952 = scalar_lea.smem [#allocation21], 5
    %953 = sst [smem:[%s952]] 2
    %s954 = scalar_lea.smem [#allocation21], 6
    %955 = sst [smem:[%s954]] 2816
    %s956 = scalar_lea.smem [#allocation21], 7
    %957 = sst [smem:[%s956]] 64
    %s958 = scalar_lea.smem [#allocation21], 8
    %959 = sst [smem:[%s958]] 4
    %961 = dma.general %s927, 10240, %s940, [#allocation3], [#allocation20], [#allocation21], %s938, 0
    %v962 = vpack.c.bf16 %v392, %v392
    %v963 = vld [vmem:[%s414] sm:$0xff]
    %v964 = vld [vmem:[%s414 + $0x8] sm:$0xff]
    %v965 = vld [vmem:[%s414 + $0x10] sm:$0xff]
    %v966 = vld [vmem:[%s414 + $0x18] sm:$0xff]
    %v967 = vld [vmem:[%s414 + $0x20] sm:$0xff]
    %v968 = vld [vmem:[%s414 + $0x28] sm:$0xff]
    %v969 = vld [vmem:[%s414 + $0x30] sm:$0xff]
    %v970 = vld [vmem:[%s414 + $0x38] sm:$0xff]
    %v971 = vld [vmem:[%s414 + $0x40] sm:$0xff]
    %v972 = vld [vmem:[%s414 + $0x48] sm:$0xff]
    %v973 = vld [vmem:[%s414 + $0x50] sm:$0xff]
    %v974 = vld [vmem:[%s414 + $0x58] sm:$0xff]
    %v975 = vld [vmem:[%s414 + $0x60] sm:$0xff]
    %v976 = vld [vmem:[%s414 + $0x68] sm:$0xff]
    %v977 = vld [vmem:[%s414 + $0x70] sm:$0xff]
    %v978 = vld [vmem:[%s414 + $0x78] sm:$0xff]
    %v979 = vld [vmem:[%s414 + $0x80] sm:$0xff]
    %v980 = vld [vmem:[%s414 + $0x88] sm:$0xff]
    %v981 = vld [vmem:[%s414 + $0x90] sm:$0xff]
    %v982 = vld [vmem:[%s414 + $0x98] sm:$0xff]
    %v983 = vld [vmem:[%s414 + $0xa0] sm:$0xff]
    %v984 = vld [vmem:[%s414 + $0xa8] sm:$0xff]
    %v985 = vld [vmem:[%s414 + $0xb0] sm:$0xff]
    %v986 = vld [vmem:[%s414 + $0xb8] sm:$0xff]
    %v987 = vld [vmem:[%s414 + $0xc0] sm:$0xff]
    %v988 = vld [vmem:[%s414 + $0xc8] sm:$0xff]
    %v989 = vld [vmem:[%s414 + $0xd0] sm:$0xff]
    %v990 = vld [vmem:[%s414 + $0xd8] sm:$0xff]
    %v991 = vld [vmem:[%s414 + $0xe0] sm:$0xff]
    %v992 = vld [vmem:[%s414 + $0xe8] sm:$0xff]
    %v993 = vld [vmem:[%s414 + $0xf0] sm:$0xff]
    %v994 = vld [vmem:[%s414 + $0xf8] sm:$0xff]
    %v995 = vld [vmem:[%s414 + $0x100] sm:$0xff]
    %v996 = vld [vmem:[%s414 + $0x108] sm:$0xff]
    %v997 = vld [vmem:[%s414 + $0x110] sm:$0xff]
    %v998 = vld [vmem:[%s414 + $0x118] sm:$0xff]
    %v999 = vld [vmem:[%s414 + $0x120] sm:$0xff]
    %v1000 = vld [vmem:[%s414 + $0x128] sm:$0xff]
    %v1001 = vld [vmem:[%s414 + $0x130] sm:$0xff]
    %v1002 = vld [vmem:[%s414 + $0x138] sm:$0xff]
    %v1003 = vld [vmem:[%s414 + $0x140] sm:$0xff]
    %v1004 = vld [vmem:[%s414 + $0x148] sm:$0xff]
    %v1005 = vld [vmem:[%s414 + $0x150] sm:$0xff]
    %v1006 = vld [vmem:[%s414 + $0x158] sm:$0xff]
    %v1007 = vld [vmem:[%s414 + $0x160] sm:$0xff]
    %v1008 = vld [vmem:[%s414 + $0x168] sm:$0xff]
    %v1009 = vld [vmem:[%s414 + $0x170] sm:$0xff]
    %v1010 = vld [vmem:[%s414 + $0x178] sm:$0xff]
    %v1011 = vld [vmem:[%s414 + $0x180] sm:$0xff]
    %v1012 = vld [vmem:[%s414 + $0x188] sm:$0xff]
    %v1013 = vld [vmem:[%s414 + $0x190] sm:$0xff]
    %v1014 = vld [vmem:[%s414 + $0x198] sm:$0xff]
    %v1015 = vld [vmem:[%s414 + $0x1a0] sm:$0xff]
    %v1016 = vld [vmem:[%s414 + $0x1a8] sm:$0xff]
    %v1017 = vld [vmem:[%s414 + $0x1b0] sm:$0xff]
    %v1018 = vld [vmem:[%s414 + $0x1b8] sm:$0xff]
    %v1019 = vld [vmem:[%s414 + $0x1c0] sm:$0xff]
    %v1020 = vld [vmem:[%s414 + $0x1c8] sm:$0xff]
    %v1021 = vld [vmem:[%s414 + $0x1d0] sm:$0xff]
    %v1022 = vld [vmem:[%s414 + $0x1d8] sm:$0xff]
    %v1023 = vld [vmem:[%s414 + $0x1e0] sm:$0xff]
    %v1024 = vld [vmem:[%s414 + $0x1e8] sm:$0xff]
    %v1025 = vld [vmem:[%s414 + $0x1f0] sm:$0xff]
    %v1026 = vld [vmem:[%s414 + $0x1f8] sm:$0xff]
    %v1027 = vld [vmem:[%s414 + $0x200] sm:$0xff]
    %v1028 = vld [vmem:[%s414 + $0x208] sm:$0xff]
    %v1029 = vld [vmem:[%s414 + $0x210] sm:$0xff]
    %v1030 = vld [vmem:[%s414 + $0x218] sm:$0xff]
    %v1031 = vld [vmem:[%s414 + $0x220] sm:$0xff]
    %v1032 = vld [vmem:[%s414 + $0x228] sm:$0xff]
    %v1033 = vld [vmem:[%s414 + $0x230] sm:$0xff]
    %v1034 = vld [vmem:[%s414 + $0x238] sm:$0xff]
    %v1035 = vld [vmem:[%s414 + $0x240] sm:$0xff]
    %v1036 = vld [vmem:[%s414 + $0x248] sm:$0xff]
    %v1037 = vld [vmem:[%s414 + $0x250] sm:$0xff]
    %v1038 = vld [vmem:[%s414 + $0x258] sm:$0xff]
    %v1039 = vld [vmem:[%s414 + $0x260] sm:$0xff]
    %v1040 = vld [vmem:[%s414 + $0x268] sm:$0xff]
    %v1041 = vld [vmem:[%s414 + $0x270] sm:$0xff]
    %v1042 = vld [vmem:[%s414 + $0x278] sm:$0xff]
    %v1043 = vld [vmem:[%s414 + $0x280] sm:$0xff]
    %v1044 = vld [vmem:[%s414 + $0x288] sm:$0xff]
    %v1045 = vld [vmem:[%s414 + $0x290] sm:$0xff]
    %v1046 = vld [vmem:[%s414 + $0x298] sm:$0xff]
    %v1047 = vld [vmem:[%s414 + $0x2a0] sm:$0xff]
    %v1048 = vld [vmem:[%s414 + $0x2a8] sm:$0xff]
    %v1049 = vld [vmem:[%s414 + $0x2b0] sm:$0xff]
    %v1050 = vld [vmem:[%s414 + $0x2b8] sm:$0xff]
    %v1051 = vld [vmem:[%s414 + $0x2c0] sm:$0xff]
    %v1052 = vld [vmem:[%s414 + $0x2c8] sm:$0xff]
    %v1053 = vld [vmem:[%s414 + $0x2d0] sm:$0xff]
    %v1054 = vld [vmem:[%s414 + $0x2d8] sm:$0xff]
    %v1055 = vld [vmem:[%s414 + $0x2e0] sm:$0xff]
    %v1056 = vld [vmem:[%s414 + $0x2e8] sm:$0xff]
    %v1057 = vld [vmem:[%s414 + $0x2f0] sm:$0xff]
    %v1058 = vld [vmem:[%s414 + $0x2f8] sm:$0xff]
    %v1059 = vld [vmem:[#allocation14 + $0xc] sm:$0xff]
    %v1060 = vld [vmem:[#allocation14 + $0x14] sm:$0xf]
    %v1063 = vlaneseq
    %v1064 = vshrl.u32 %v1063, 7
    %v1065 = vsub.s32 0, %v1064
    %v1066 = vrot.slane %v1059, %v1065
    %v1067 = vlaneseq
    %v1068 = vshrl.u32 %v1067, 7
    %v1069 = vsub.s32 1, %v1068
    %v1070 = vrot.slane %v1059, %v1069
    %v1071 = vlaneseq
    %v1072 = vshrl.u32 %v1071, 7
    %v1073 = vsub.s32 2, %v1072
    %v1074 = vrot.slane %v1059, %v1073
    %v1075 = vlaneseq
    %v1076 = vshrl.u32 %v1075, 7
    %v1077 = vsub.s32 3, %v1076
    %v1078 = vrot.slane %v1059, %v1077
    %v1079 = vlaneseq
    %v1080 = vshrl.u32 %v1079, 7
    %v1081 = vsub.s32 4, %v1080
    %v1082 = vrot.slane %v1059, %v1081
    %v1083 = vlaneseq
    %v1084 = vshrl.u32 %v1083, 7
    %v1085 = vsub.s32 5, %v1084
    %v1086 = vrot.slane %v1059, %v1085
    %v1087 = vlaneseq
    %v1088 = vshrl.u32 %v1087, 7
    %v1089 = vsub.s32 6, %v1088
    %v1090 = vrot.slane %v1059, %v1089
    %v1091 = vlaneseq
    %v1092 = vshrl.u32 %v1091, 7
    %v1093 = vsub.s32 7, %v1092
    %v1094 = vrot.slane %v1059, %v1093
    %v1095 = vlaneseq
    %v1096 = vshrl.u32 %v1095, 7
    %v1097 = vsub.s32 0, %v1096
    %v1098 = vrot.slane %v1060, %v1097
    %v1099 = vlaneseq
    %v1100 = vshrl.u32 %v1099, 7
    %v1101 = vsub.s32 1, %v1100
    %v1102 = vrot.slane %v1060, %v1101
    %v1103 = vlaneseq
    %v1104 = vshrl.u32 %v1103, 7
    %v1105 = vsub.s32 2, %v1104
    %v1106 = vrot.slane %v1060, %v1105
    %v1107 = vlaneseq
    %v1108 = vshrl.u32 %v1107, 7
    %v1109 = vsub.s32 3, %v1108
    %v1110 = vrot.slane %v1060, %v1109
    %1123 = vmatprep.subr.bf16.mxu0 %v964
    %1124 = vmatpush1.bf16.msra.mxu0 %v963
    %1125 = vmatprep.subr.bf16.mxu0 %v976
    %1126 = vmatpush1.bf16.msra.mxu0 %v975
    %1127 = vmatprep.subr.bf16.mxu0 %v988
    %1128 = vmatpush1.bf16.msra.mxu0 %v987
    %1129 = vmatprep.subr.bf16.mxu0 %v1000
    %1130 = vmatpush1.bf16.msra.mxu0 %v999
    %1131 = vmatprep.subr.bf16.mxu0 %v1012
    %1132 = vmatpush1.bf16.msra.mxu0 %v1011
    %1133 = vmatprep.subr.bf16.mxu0 %v1024
    %1134 = vmatpush1.bf16.msra.mxu0 %v1023
    %1135 = vmatprep.subr.bf16.mxu0 %v1036
    %1136 = vmatpush1.bf16.msra.mxu0 %v1035
    %1137 = vmatprep.subr.bf16.mxu0 %v1048
    %1138 = vmatpush1.bf16.msra.mxu0 %v1047
    %1139 = vmatprep.subr.bf16.mxu0 0
    %1140 = vmatpush1.bf16.msra.mxu0 0
    %1141 = vmatprep.subr.bf16.mxu0 0
    %1142 = vmatpush1.bf16.msra.mxu0 0
    %1143 = vmatprep.subr.bf16.mxu0 0
    %1144 = vmatpush1.bf16.msra.mxu0 0
    %1145 = vmatprep.subr.bf16.mxu0 0
    %1146 = vmatpush1.bf16.msra.mxu0 0
    %1147 = vmatprep.subr.bf16.mxu0 0
    %1148 = vmatpush1.bf16.msra.mxu0 0
    %1149 = vmatprep.subr.bf16.mxu0 0
    %1150 = vmatpush1.bf16.msra.mxu0 0
    %1151 = vmatprep.subr.bf16.mxu0 0
    %1152 = vmatpush1.bf16.msra.mxu0 0
    %1153 = vmatprep.subr.bf16.mxu0 0
    %1154 = vmatpush1.bf16.msra.mxu0 0
    %1155 = vmatprep.mubr.bf16.mxu0 0
    %1156 = vmatmul.mubr.bf16.gmra.mrb[0].mxu0 %v962
    %v1157 = vpop.f32.mrb[0].mxu0
    %v1158 = vadd.f32 %v1066, %v1157
    %v1159 = vpop.f32.mrb[0].mxu0
    %v1160 = vadd.f32 %v1070, %v1159
    %v1161 = vpop.f32.mrb[0].mxu0
    %v1162 = vpop.f32.mrb[0].mxu0
    %1163 = vdwg.mxu0
    %1164 = vmatprep.subr.bf16.mxu0 %v966
    %1165 = vmatpush1.bf16.msra.mxu0 %v965
    %1166 = vmatprep.subr.bf16.mxu0 %v978
    %1167 = vmatpush1.bf16.msra.mxu0 %v977
    %1168 = vmatprep.subr.bf16.mxu0 %v990
    %1169 = vmatpush1.bf16.msra.mxu0 %v989
    %1170 = vmatprep.subr.bf16.mxu0 %v1002
    %1171 = vmatpush1.bf16.msra.mxu0 %v1001
    %1172 = vmatprep.subr.bf16.mxu0 %v1014
    %1173 = vmatpush1.bf16.msra.mxu0 %v1013
    %1174 = vmatprep.subr.bf16.mxu0 %v1026
    %1175 = vmatpush1.bf16.msra.mxu0 %v1025
    %1176 = vmatprep.subr.bf16.mxu0 %v1038
    %1177 = vmatpush1.bf16.msra.mxu0 %v1037
    %1178 = vmatprep.subr.bf16.mxu0 %v1050
    %1179 = vmatpush1.bf16.msra.mxu0 %v1049
    %1180 = vmatprep.subr.bf16.mxu0 0
    %1181 = vmatpush1.bf16.msra.mxu0 0
    %1182 = vmatprep.subr.bf16.mxu0 0
    %1183 = vmatpush1.bf16.msra.mxu0 0
    %1184 = vmatprep.subr.bf16.mxu0 0
    %1185 = vmatpush1.bf16.msra.mxu0 0
    %1186 = vmatprep.subr.bf16.mxu0 0
    %1187 = vmatpush1.bf16.msra.mxu0 0
    %1188 = vmatprep.subr.bf16.mxu0 0
    %1189 = vmatpush1.bf16.msra.mxu0 0
    %1190 = vmatprep.subr.bf16.mxu0 0
    %1191 = vmatpush1.bf16.msra.mxu0 0
    %1192 = vmatprep.subr.bf16.mxu0 0
    %1193 = vmatpush1.bf16.msra.mxu0 0
    %1194 = vmatprep.subr.bf16.mxu0 0
    %1195 = vmatpush1.bf16.msra.mxu0 0
    %1196 = vmatprep.mubr.bf16.mxu0 0
    %1197 = vmatmul.mubr.bf16.gmra.mrb[0].mxu0 %v962
    %v1198 = vpop.f32.mrb[0].mxu0
    %v1199 = vadd.f32 %v1074, %v1198
    %v1200 = vpop.f32.mrb[0].mxu0
    %v1201 = vadd.f32 %v1078, %v1200
    %v1202 = vpop.f32.mrb[0].mxu0
    %v1203 = vpop.f32.mrb[0].mxu0
    %1204 = vdwg.mxu0
    %1205 = vmatprep.subr.bf16.mxu0 %v968
    %1206 = vmatpush1.bf16.msra.mxu0 %v967
    %1207 = vmatprep.subr.bf16.mxu0 %v980
    %1208 = vmatpush1.bf16.msra.mxu0 %v979
    %1209 = vmatprep.subr.bf16.mxu0 %v992
    %1210 = vmatpush1.bf16.msra.mxu0 %v991
    %1211 = vmatprep.subr.bf16.mxu0 %v1004
    %1212 = vmatpush1.bf16.msra.mxu0 %v1003
    %1213 = vmatprep.subr.bf16.mxu0 %v1016
    %1214 = vmatpush1.bf16.msra.mxu0 %v1015
    %1215 = vmatprep.subr.bf16.mxu0 %v1028
    %1216 = vmatpush1.bf16.msra.mxu0 %v1027
    %1217 = vmatprep.subr.bf16.mxu0 %v1040
    %1218 = vmatpush1.bf16.msra.mxu0 %v1039
    %1219 = vmatprep.subr.bf16.mxu0 %v1052
    %1220 = vmatpush1.bf16.msra.mxu0 %v1051
    %1221 = vmatprep.subr.bf16.mxu0 0
    %1222 = vmatpush1.bf16.msra.mxu0 0
    %1223 = vmatprep.subr.bf16.mxu0 0
    %1224 = vmatpush1.bf16.msra.mxu0 0
    %1225 = vmatprep.subr.bf16.mxu0 0
    %1226 = vmatpush1.bf16.msra.mxu0 0
    %1227 = vmatprep.subr.bf16.mxu0 0
    %1228 = vmatpush1.bf16.msra.mxu0 0
    %1229 = vmatprep.subr.bf16.mxu0 0
    %1230 = vmatpush1.bf16.msra.mxu0 0
    %1231 = vmatprep.subr.bf16.mxu0 0
    %1232 = vmatpush1.bf16.msra.mxu0 0
    %1233 = vmatprep.subr.bf16.mxu0 0
    %1234 = vmatpush1.bf16.msra.mxu0 0
    %1235 = vmatprep.subr.bf16.mxu0 0
    %1236 = vmatpush1.bf16.msra.mxu0 0
    %1237 = vmatprep.mubr.bf16.mxu0 0
    %1238 = vmatmul.mubr.bf16.gmra.mrb[0].mxu0 %v962
    %v1239 = vpop.f32.mrb[0].mxu0
    %v1240 = vadd.f32 %v1082, %v1239
    %v1241 = vpop.f32.mrb[0].mxu0
    %v1242 = vadd.f32 %v1086, %v1241
    %v1243 = vpop.f32.mrb[0].mxu0
    %v1244 = vpop.f32.mrb[0].mxu0
    %1245 = vdwg.mxu0
    %1246 = vmatprep.subr.bf16.mxu0 %v970
    %1247 = vmatpush1.bf16.msra.mxu0 %v969
    %1248 = vmatprep.subr.bf16.mxu0 %v982
    %1249 = vmatpush1.bf16.msra.mxu0 %v981
    %1250 = vmatprep.subr.bf16.mxu0 %v994
    %1251 = vmatpush1.bf16.msra.mxu0 %v993
    %1252 = vmatprep.subr.bf16.mxu0 %v1006
    %1253 = vmatpush1.bf16.msra.mxu0 %v1005
    %1254 = vmatprep.subr.bf16.mxu0 %v1018
    %1255 = vmatpush1.bf16.msra.mxu0 %v1017
    %1256 = vmatprep.subr.bf16.mxu0 %v1030
    %1257 = vmatpush1.bf16.msra.mxu0 %v1029
    %1258 = vmatprep.subr.bf16.mxu0 %v1042
    %1259 = vmatpush1.bf16.msra.mxu0 %v1041
    %1260 = vmatprep.subr.bf16.mxu0 %v1054
    %1261 = vmatpush1.bf16.msra.mxu0 %v1053
    %1262 = vmatprep.subr.bf16.mxu0 0
    %1263 = vmatpush1.bf16.msra.mxu0 0
    %1264 = vmatprep.subr.bf16.mxu0 0
    %1265 = vmatpush1.bf16.msra.mxu0 0
    %1266 = vmatprep.subr.bf16.mxu0 0
    %1267 = vmatpush1.bf16.msra.mxu0 0
    %1268 = vmatprep.subr.bf16.mxu0 0
    %1269 = vmatpush1.bf16.msra.mxu0 0
    %1270 = vmatprep.subr.bf16.mxu0 0
    %1271 = vmatpush1.bf16.msra.mxu0 0
    %1272 = vmatprep.subr.bf16.mxu0 0
    %1273 = vmatpush1.bf16.msra.mxu0 0
    %1274 = vmatprep.subr.bf16.mxu0 0
    %1275 = vmatpush1.bf16.msra.mxu0 0
    %1276 = vmatprep.subr.bf16.mxu0 0
    %1277 = vmatpush1.bf16.msra.mxu0 0
    %1278 = vmatprep.mubr.bf16.mxu0 0
    %1279 = vmatmul.mubr.bf16.gmra.mrb[0].mxu0 %v962
    %v1280 = vpop.f32.mrb[0].mxu0
    %v1281 = vadd.f32 %v1090, %v1280
    %v1282 = vpop.f32.mrb[0].mxu0
    %v1283 = vadd.f32 %v1094, %v1282
    %v1284 = vpop.f32.mrb[0].mxu0
    %v1285 = vpop.f32.mrb[0].mxu0
    %1286 = vdwg.mxu0
    %1287 = vmatprep.subr.bf16.mxu0 %v972
    %1288 = vmatpush1.bf16.msra.mxu0 %v971
    %1289 = vmatprep.subr.bf16.mxu0 %v984
    %1290 = vmatpush1.bf16.msra.mxu0 %v983
    %1291 = vmatprep.subr.bf16.mxu0 %v996
    %1292 = vmatpush1.bf16.msra.mxu0 %v995
    %1293 = vmatprep.subr.bf16.mxu0 %v1008
    %1294 = vmatpush1.bf16.msra.mxu0 %v1007
    %1295 = vmatprep.subr.bf16.mxu0 %v1020
    %1296 = vmatpush1.bf16.msra.mxu0 %v1019
    %1297 = vmatprep.subr.bf16.mxu0 %v1032
    %1298 = vmatpush1.bf16.msra.mxu0 %v1031
    %1299 = vmatprep.subr.bf16.mxu0 %v1044
    %1300 = vmatpush1.bf16.msra.mxu0 %v1043
    %1301 = vmatprep.subr.bf16.mxu0 %v1056
    %1302 = vmatpush1.bf16.msra.mxu0 %v1055
    %1303 = vmatprep.subr.bf16.mxu0 0
    %1304 = vmatpush1.bf16.msra.mxu0 0
    %1305 = vmatprep.subr.bf16.mxu0 0
    %1306 = vmatpush1.bf16.msra.mxu0 0
    %1307 = vmatprep.subr.bf16.mxu0 0
    %1308 = vmatpush1.bf16.msra.mxu0 0
    %1309 = vmatprep.subr.bf16.mxu0 0
    %1310 = vmatpush1.bf16.msra.mxu0 0
    %1311 = vmatprep.subr.bf16.mxu0 0
    %1312 = vmatpush1.bf16.msra.mxu0 0
    %1313 = vmatprep.subr.bf16.mxu0 0
    %1314 = vmatpush1.bf16.msra.mxu0 0
    %1315 = vmatprep.subr.bf16.mxu0 0
    %1316 = vmatpush1.bf16.msra.mxu0 0
    %1317 = vmatprep.subr.bf16.mxu0 0
    %1318 = vmatpush1.bf16.msra.mxu0 0
    %1319 = vmatprep.mubr.bf16.mxu0 0
    %1320 = vmatmul.mubr.bf16.gmra.mrb[0].mxu0 %v962
    %v1321 = vpop.f32.mrb[0].mxu0
    %v1322 = vadd.f32 %v1098, %v1321
    %v1323 = vpop.f32.mrb[0].mxu0
    %v1324 = vadd.f32 %v1102, %v1323
    %v1325 = vpop.f32.mrb[0].mxu0
    %v1326 = vpop.f32.mrb[0].mxu0
    %1327 = vdwg.mxu0
    %1328 = vmatprep.subr.bf16.mxu0 %v974
    %1329 = vmatpush1.bf16.msra.mxu0 %v973
    %1330 = vmatprep.subr.bf16.mxu0 %v986
    %1331 = vmatpush1.bf16.msra.mxu0 %v985
    %1332 = vmatprep.subr.bf16.mxu0 %v998
    %1333 = vmatpush1.bf16.msra.mxu0 %v997
    %1334 = vmatprep.subr.bf16.mxu0 %v1010
    %1335 = vmatpush1.bf16.msra.mxu0 %v1009
    %1336 = vmatprep.subr.bf16.mxu0 %v1022
    %1337 = vmatpush1.bf16.msra.mxu0 %v1021
    %1338 = vmatprep.subr.bf16.mxu0 %v1034
    %1339 = vmatpush1.bf16.msra.mxu0 %v1033
    %1340 = vmatprep.subr.bf16.mxu0 %v1046
    %1341 = vmatpush1.bf16.msra.mxu0 %v1045
    %1342 = vmatprep.subr.bf16.mxu0 %v1058
    %1343 = vmatpush1.bf16.msra.mxu0 %v1057
    %1344 = vmatprep.subr.bf16.mxu0 0
    %1345 = vmatpush1.bf16.msra.mxu0 0
    %1346 = vmatprep.subr.bf16.mxu0 0
    %1347 = vmatpush1.bf16.msra.mxu0 0
    %1348 = vmatprep.subr.bf16.mxu0 0
    %1349 = vmatpush1.bf16.msra.mxu0 0
    %1350 = vmatprep.subr.bf16.mxu0 0
    %1351 = vmatpush1.bf16.msra.mxu0 0
    %1352 = vmatprep.subr.bf16.mxu0 0
    %1353 = vmatpush1.bf16.msra.mxu0 0
    %1354 = vmatprep.subr.bf16.mxu0 0
    %1355 = vmatpush1.bf16.msra.mxu0 0
    %1356 = vmatprep.subr.bf16.mxu0 0
    %1357 = vmatpush1.bf16.msra.mxu0 0
    %1358 = vmatprep.subr.bf16.mxu0 0
    %1359 = vmatpush1.bf16.msra.mxu0 0
    %1360 = vmatprep.mubr.bf16.mxu0 0
    %1361 = vmatmul.mubr.bf16.gmra.mrb[0].mxu0 %v962
    %v1362 = vpop.f32.mrb[0].mxu0
    %v1363 = vadd.f32 %v1106, %v1362
    %v1364 = vpop.f32.mrb[0].mxu0
    %v1365 = vadd.f32 %v1110, %v1364
    %v1366 = vpop.f32.mrb[0].mxu0
    %v1367 = vpop.f32.mrb[0].mxu0
    %1368 = vdwg.mxu0
    %v1369 = vstv %s909
    %v1370 = vmul.f32 %v1369, %v392
    %v1371 = vstv %s910
    %v1372 = vmul.f32 %v1371, %v1158
    %v1373 = vadd.f32 %v1370, %v1372
    %v1374 = vmax.f32 %v1160, 0.0
    %v1375 = vstv %s911
    %v1376 = vmul.f32 %v1375, %v1374
    %v1377 = vadd.f32 %v1373, %v1376
    %v1378 = vtanh.pop %v1199
    %v1379 = vstv %s912
    %v1380 = vmul.f32 %v1379, %v1378
    %v1381 = vadd.f32 %v1377, %v1380
    %v1382 = vadd.f32 %v869, %v1381
    %v1383 = vstv %s913
    %v1384 = vmul.f32 %v1383, %v392
    %v1385 = vstv %s914
    %v1386 = vmul.f32 %v1385, %v1201
    %v1387 = vadd.f32 %v1384, %v1386
    %v1388 = vmax.f32 %v1240, 0.0
    %v1389 = vstv %s915
    %v1390 = vmul.f32 %v1389, %v1388
    %v1391 = vadd.f32 %v1387, %v1390
    %v1392 = vtanh.pop %v1242
    %v1393 = vstv %s916
    %v1394 = vmul.f32 %v1393, %v1392
    %v1395 = vadd.f32 %v1391, %v1394
    %v1396 = vadd.f32 %v882, %v1395
    %v1397 = vstv %s917
    %v1398 = vmul.f32 %v1397, %v392
    %v1399 = vstv %s918
    %v1400 = vmul.f32 %v1399, %v1281
    %v1401 = vadd.f32 %v1398, %v1400
    %v1402 = vmax.f32 %v1283, 0.0
    %v1403 = vstv %s919
    %v1404 = vmul.f32 %v1403, %v1402
    %v1405 = vadd.f32 %v1401, %v1404
    %v1406 = vtanh.pop %v1322
    %v1407 = vstv %s920
    %v1408 = vmul.f32 %v1407, %v1406
    %v1409 = vadd.f32 %v1405, %v1408
    %v1410 = vadd.f32 %v895, %v1409
    %v1411 = vstv %s921
    %v1412 = vmul.f32 %v1411, %v392
    %v1413 = vstv %s922
    %v1414 = vmul.f32 %v1413, %v1324
    %v1415 = vadd.f32 %v1412, %v1414
    %v1416 = vmax.f32 %v1363, 0.0
    %v1417 = vstv %s923
    %v1418 = vmul.f32 %v1417, %v1416
    %v1419 = vadd.f32 %v1415, %v1418
    %v1420 = vtanh.pop %v1365
    %v1421 = vstv %s924
    %v1422 = vmul.f32 %v1421, %v1420
    %v1423 = vadd.f32 %v1419, %v1422
    %v1424 = vadd.f32 %v908, %v1423
    %1425 = vst [vmem:[#allocation15] sm:$0xff] %v1382
    %s1426 = sld [smem:[#allocation4 + $0x15]]
    %s1427 = sld [smem:[#allocation4 + $0x16]]
    %s1428 = sld [smem:[#allocation4 + $0x17]]
    %s1429 = sld [smem:[#allocation4 + $0x18]]
    %s1430 = sld [smem:[#allocation4 + $0x24]]
    %s1431 = sld [smem:[#allocation4 + $0x25]]
    %s1432 = sld [smem:[#allocation4 + $0x26]]
    %s1433 = sld [smem:[#allocation4 + $0x27]]
    %s1434 = sld [smem:[#allocation4 + $0x38]]
    %s1435 = sld [smem:[#allocation4 + $0x39]]
    %s1436 = sld [smem:[#allocation4 + $0x3a]]
    %s1437 = sld [smem:[#allocation4 + $0x3b]]
    %s1438 = smul.u32 %s409, 10
    %s1439 = sshll.u32 %s1438, 4
    %1440 = dma.done [#allocation3], %s1439
    %s1441 = scalar_lea.hbm %s6, 2176
    %s1443 = sshll.u32 1, 14
    %s1444 = sxor.u32 4294967295, %s1443
    %s1446 = sadd.s32 2, %s105
    %s1448 = sshll.u32 7, 26
    %s1449 = sxor.u32 4294967295, %s1448
    %s1450 = sand.u32 0, %s1449
    %s1451 = sshll.u32 %s1446, 26
    %s1452 = sor.u32 %s1450, %s1451
    %s1453 = sshll.u32 %s414, 4
    %s1454 = int_to_ptr.vmem [resolvable:$true] %s1453
    %1457 = sst [smem:[#allocation23]] 5632
    %s1458 = scalar_lea.smem [#allocation23], 1
    %1459 = sst [smem:[%s1458]] 1536
    %s1460 = scalar_lea.smem [#allocation23], 2
    %1461 = sst [smem:[%s1460]] 6
    %s1462 = scalar_lea.smem [#allocation23], 3
    %1463 = sst [smem:[%s1462]] 64
    %s1464 = scalar_lea.smem [#allocation23], 4
    %1465 = sst [smem:[%s1464]] 128
    %s1466 = scalar_lea.smem [#allocation23], 5
    %1467 = sst [smem:[%s1466]] 2
    %s1468 = scalar_lea.smem [#allocation23], 6
    %1469 = sst [smem:[%s1468]] 2816
    %s1470 = scalar_lea.smem [#allocation23], 7
    %1471 = sst [smem:[%s1470]] 64
    %s1472 = scalar_lea.smem [#allocation23], 8
    %1473 = sst [smem:[%s1472]] 4
    %1475 = dma.general %s1441, 6144, %s1454, %s415, [#allocation22], [#allocation23], %s1452, 0
    %v1476 = vpack.c.bf16 %v1382, %v1382
    %v1477 = vld [vmem:[#allocation2] sm:$0xff]
    %v1478 = vld [vmem:[#allocation2 + $0x8] sm:$0xff]
    %v1479 = vld [vmem:[#allocation2 + $0x10] sm:$0xff]
    %v1480 = vld [vmem:[#allocation2 + $0x18] sm:$0xff]
    %v1481 = vld [vmem:[#allocation2 + $0x20] sm:$0xff]
    %v1482 = vld [vmem:[#allocation2 + $0x28] sm:$0xff]
    %v1483 = vld [vmem:[#allocation2 + $0x30] sm:$0xff]
    %v1484 = vld [vmem:[#allocation2 + $0x38] sm:$0xff]
    %v1485 = vld [vmem:[#allocation2 + $0x40] sm:$0xff]
    %v1486 = vld [vmem:[#allocation2 + $0x48] sm:$0xff]
    %v1487 = vld [vmem:[#allocation2 + $0x60] sm:$0xff]
    %v1488 = vld [vmem:[#allocation2 + $0x68] sm:$0xff]
    %v1489 = vld [vmem:[#allocation2 + $0x70] sm:$0xff]
    %v1490 = vld [vmem:[#allocation2 + $0x78] sm:$0xff]
    %v1491 = vld [vmem:[#allocation2 + $0x80] sm:$0xff]
    %v1492 = vld [vmem:[#allocation2 + $0x88] sm:$0xff]
    %v1493 = vld [vmem:[#allocation2 + $0x90] sm:$0xff]
    %v1494 = vld [vmem:[#allocation2 + $0x98] sm:$0xff]
    %v1495 = vld [vmem:[#allocation2 + $0xa0] sm:$0xff]
    %v1496 = vld [vmem:[#allocation2 + $0xa8] sm:$0xff]
    %v1497 = vld [vmem:[#allocation2 + $0xc0] sm:$0xff]
    %v1498 = vld [vmem:[#allocation2 + $0xc8] sm:$0xff]
    %v1499 = vld [vmem:[#allocation2 + $0xd0] sm:$0xff]
    %v1500 = vld [vmem:[#allocation2 + $0xd8] sm:$0xff]
    %v1501 = vld [vmem:[#allocation2 + $0xe0] sm:$0xff]
    %v1502 = vld [vmem:[#allocation2 + $0xe8] sm:$0xff]
    %v1503 = vld [vmem:[#allocation2 + $0xf0] sm:$0xff]
    %v1504 = vld [vmem:[#allocation2 + $0xf8] sm:$0xff]
    %v1505 = vld [vmem:[#allocation2 + $0x100] sm:$0xff]
    %v1506 = vld [vmem:[#allocation2 + $0x108] sm:$0xff]
    %v1507 = vld [vmem:[#allocation2 + $0x120] sm:$0xff]
    %v1508 = vld [vmem:[#allocation2 + $0x128] sm:$0xff]
    %v1509 = vld [vmem:[#allocation2 + $0x130] sm:$0xff]
    %v1510 = vld [vmem:[#allocation2 + $0x138] sm:$0xff]
    %v1511 = vld [vmem:[#allocation2 + $0x140] sm:$0xff]
    %v1512 = vld [vmem:[#allocation2 + $0x148] sm:$0xff]
    %v1513 = vld [vmem:[#allocation2 + $0x150] sm:$0xff]
    %v1514 = vld [vmem:[#allocation2 + $0x158] sm:$0xff]
    %v1515 = vld [vmem:[#allocation2 + $0x160] sm:$0xff]
    %v1516 = vld [vmem:[#allocation2 + $0x168] sm:$0xff]
    %v1517 = vld [vmem:[#allocation2 + $0x180] sm:$0xff]
    %v1518 = vld [vmem:[#allocation2 + $0x188] sm:$0xff]
    %v1519 = vld [vmem:[#allocation2 + $0x190] sm:$0xff]
    %v1520 = vld [vmem:[#allocation2 + $0x198] sm:$0xff]
    %v1521 = vld [vmem:[#allocation2 + $0x1a0] sm:$0xff]
    %v1522 = vld [vmem:[#allocation2 + $0x1a8] sm:$0xff]
    %v1523 = vld [vmem:[#allocation2 + $0x1b0] sm:$0xff]
    %v1524 = vld [vmem:[#allocation2 + $0x1b8] sm:$0xff]
    %v1525 = vld [vmem:[#allocation2 + $0x1c0] sm:$0xff]
    %v1526 = vld [vmem:[#allocation2 + $0x1c8] sm:$0xff]
    %v1527 = vld [vmem:[#allocation2 + $0x1e0] sm:$0xff]
    %v1528 = vld [vmem:[#allocation2 + $0x1e8] sm:$0xff]
    %v1529 = vld [vmem:[#allocation2 + $0x1f0] sm:$0xff]
    %v1530 = vld [vmem:[#allocation2 + $0x1f8] sm:$0xff]
    %v1531 = vld [vmem:[#allocation2 + $0x200] sm:$0xff]
    %v1532 = vld [vmem:[#allocation2 + $0x208] sm:$0xff]
    %v1533 = vld [vmem:[#allocation2 + $0x210] sm:$0xff]
    %v1534 = vld [vmem:[#allocation2 + $0x218] sm:$0xff]
    %v1535 = vld [vmem:[#allocation2 + $0x220] sm:$0xff]
    %v1536 = vld [vmem:[#allocation2 + $0x228] sm:$0xff]
    %v1537 = vld [vmem:[#allocation2 + $0x240] sm:$0xff]
    %v1538 = vld [vmem:[#allocation2 + $0x248] sm:$0xff]
    %v1539 = vld [vmem:[#allocation2 + $0x250] sm:$0xff]
    %v1540 = vld [vmem:[#allocation2 + $0x258] sm:$0xff]
    %v1541 = vld [vmem:[#allocation2 + $0x260] sm:$0xff]
    %v1542 = vld [vmem:[#allocation2 + $0x268] sm:$0xff]
    %v1543 = vld [vmem:[#allocation2 + $0x270] sm:$0xff]
    %v1544 = vld [vmem:[#allocation2 + $0x278] sm:$0xff]
    %v1545 = vld [vmem:[#allocation2 + $0x280] sm:$0xff]
    %v1546 = vld [vmem:[#allocation2 + $0x288] sm:$0xff]
    %v1547 = vld [vmem:[#allocation2 + $0x2a0] sm:$0xff]
    %v1548 = vld [vmem:[#allocation2 + $0x2a8] sm:$0xff]
    %v1549 = vld [vmem:[#allocation2 + $0x2b0] sm:$0xff]
    %v1550 = vld [vmem:[#allocation2 + $0x2b8] sm:$0xff]
    %v1551 = vld [vmem:[#allocation2 + $0x2c0] sm:$0xff]
    %v1552 = vld [vmem:[#allocation2 + $0x2c8] sm:$0xff]
    %v1553 = vld [vmem:[#allocation2 + $0x2d0] sm:$0xff]
    %v1554 = vld [vmem:[#allocation2 + $0x2d8] sm:$0xff]
    %v1555 = vld [vmem:[#allocation2 + $0x2e0] sm:$0xff]
    %v1556 = vld [vmem:[#allocation2 + $0x2e8] sm:$0xff]
    %v1557 = vld [vmem:[#allocation14 + $0x18] sm:$0xff]
    %v1558 = vld [vmem:[#allocation14 + $0x20] sm:$0x3]
    %v1561 = vlaneseq
    %v1562 = vshrl.u32 %v1561, 7
    %v1563 = vsub.s32 0, %v1562
    %v1564 = vrot.slane %v1557, %v1563
    %v1565 = vlaneseq
    %v1566 = vshrl.u32 %v1565, 7
    %v1567 = vsub.s32 1, %v1566
    %v1568 = vrot.slane %v1557, %v1567
    %v1569 = vlaneseq
    %v1570 = vshrl.u32 %v1569, 7
    %v1571 = vsub.s32 2, %v1570
    %v1572 = vrot.slane %v1557, %v1571
    %v1573 = vlaneseq
    %v1574 = vshrl.u32 %v1573, 7
    %v1575 = vsub.s32 3, %v1574
    %v1576 = vrot.slane %v1557, %v1575
    %v1577 = vlaneseq
    %v1578 = vshrl.u32 %v1577, 7
    %v1579 = vsub.s32 4, %v1578
    %v1580 = vrot.slane %v1557, %v1579
    %v1581 = vlaneseq
    %v1582 = vshrl.u32 %v1581, 7
    %v1583 = vsub.s32 5, %v1582
    %v1584 = vrot.slane %v1557, %v1583
    %v1585 = vlaneseq
    %v1586 = vshrl.u32 %v1585, 7
    %v1587 = vsub.s32 6, %v1586
    %v1588 = vrot.slane %v1557, %v1587
    %v1589 = vlaneseq
    %v1590 = vshrl.u32 %v1589, 7
    %v1591 = vsub.s32 7, %v1590
    %v1592 = vrot.slane %v1557, %v1591
    %v1593 = vlaneseq
    %v1594 = vshrl.u32 %v1593, 7
    %v1595 = vsub.s32 0, %v1594
    %v1596 = vrot.slane %v1558, %v1595
    %1606 = vmatprep.subr.bf16.mxu0 %v1478
    %1607 = vmatpush1.bf16.msra.mxu0 %v1477
    %1608 = vmatprep.subr.bf16.mxu0 %v1488
    %1609 = vmatpush1.bf16.msra.mxu0 %v1487
    %1610 = vmatprep.subr.bf16.mxu0 %v1498
    %1611 = vmatpush1.bf16.msra.mxu0 %v1497
    %1612 = vmatprep.subr.bf16.mxu0 %v1508
    %1613 = vmatpush1.bf16.msra.mxu0 %v1507
    %1614 = vmatprep.subr.bf16.mxu0 %v1518
    %1615 = vmatpush1.bf16.msra.mxu0 %v1517
    %1616 = vmatprep.subr.bf16.mxu0 %v1528
    %1617 = vmatpush1.bf16.msra.mxu0 %v1527
    %1618 = vmatprep.subr.bf16.mxu0 %v1538
    %1619 = vmatpush1.bf16.msra.mxu0 %v1537
    %1620 = vmatprep.subr.bf16.mxu0 %v1548
    %1621 = vmatpush1.bf16.msra.mxu0 %v1547
    %1622 = vmatprep.subr.bf16.mxu0 0
    %1623 = vmatpush1.bf16.msra.mxu0 0
    %1624 = vmatprep.subr.bf16.mxu0 0
    %1625 = vmatpush1.bf16.msra.mxu0 0
    %1626 = vmatprep.subr.bf16.mxu0 0
    %1627 = vmatpush1.bf16.msra.mxu0 0
    %1628 = vmatprep.subr.bf16.mxu0 0
    %1629 = vmatpush1.bf16.msra.mxu0 0
    %1630 = vmatprep.subr.bf16.mxu0 0
    %1631 = vmatpush1.bf16.msra.mxu0 0
    %1632 = vmatprep.subr.bf16.mxu0 0
    %1633 = vmatpush1.bf16.msra.mxu0 0
    %1634 = vmatprep.subr.bf16.mxu0 0
    %1635 = vmatpush1.bf16.msra.mxu0 0
    %1636 = vmatprep.subr.bf16.mxu0 0
    %1637 = vmatpush1.bf16.msra.mxu0 0
    %1638 = vmatprep.mubr.bf16.mxu0 0
    %1639 = vmatmul.mubr.bf16.gmra.mrb[0].mxu0 %v1476
    %v1640 = vpop.f32.mrb[0].mxu0
    %v1641 = vadd.f32 %v1564, %v1640
    %v1642 = vpop.f32.mrb[0].mxu0
    %v1643 = vadd.f32 %v1568, %v1642
    %v1644 = vpop.f32.mrb[0].mxu0
    %v1645 = vpop.f32.mrb[0].mxu0
    %1646 = vdwg.mxu0
    %1647 = vmatprep.subr.bf16.mxu0 %v1480
    %1648 = vmatpush1.bf16.msra.mxu0 %v1479
    %1649 = vmatprep.subr.bf16.mxu0 %v1490
    %1650 = vmatpush1.bf16.msra.mxu0 %v1489
    %1651 = vmatprep.subr.bf16.mxu0 %v1500
    %1652 = vmatpush1.bf16.msra.mxu0 %v1499
    %1653 = vmatprep.subr.bf16.mxu0 %v1510
    %1654 = vmatpush1.bf16.msra.mxu0 %v1509
    %1655 = vmatprep.subr.bf16.mxu0 %v1520
    %1656 = vmatpush1.bf16.msra.mxu0 %v1519
    %1657 = vmatprep.subr.bf16.mxu0 %v1530
    %1658 = vmatpush1.bf16.msra.mxu0 %v1529
    %1659 = vmatprep.subr.bf16.mxu0 %v1540
    %1660 = vmatpush1.bf16.msra.mxu0 %v1539
    %1661 = vmatprep.subr.bf16.mxu0 %v1550
    %1662 = vmatpush1.bf16.msra.mxu0 %v1549
    %1663 = vmatprep.subr.bf16.mxu0 0
    %1664 = vmatpush1.bf16.msra.mxu0 0
    %1665 = vmatprep.subr.bf16.mxu0 0
    %1666 = vmatpush1.bf16.msra.mxu0 0
    %1667 = vmatprep.subr.bf16.mxu0 0
    %1668 = vmatpush1.bf16.msra.mxu0 0
    %1669 = vmatprep.subr.bf16.mxu0 0
    %1670 = vmatpush1.bf16.msra.mxu0 0
    %1671 = vmatprep.subr.bf16.mxu0 0
    %1672 = vmatpush1.bf16.msra.mxu0 0
    %1673 = vmatprep.subr.bf16.mxu0 0
    %1674 = vmatpush1.bf16.msra.mxu0 0
    %1675 = vmatprep.subr.bf16.mxu0 0
    %1676 = vmatpush1.bf16.msra.mxu0 0
    %1677 = vmatprep.subr.bf16.mxu0 0
    %1678 = vmatpush1.bf16.msra.mxu0 0
    %1679 = vmatprep.mubr.bf16.mxu0 0
    %1680 = vmatmul.mubr.bf16.gmra.mrb[0].mxu0 %v1476
    %v1681 = vpop.f32.mrb[0].mxu0
    %v1682 = vadd.f32 %v1572, %v1681
    %v1683 = vpop.f32.mrb[0].mxu0
    %v1684 = vadd.f32 %v1576, %v1683
    %v1685 = vpop.f32.mrb[0].mxu0
    %v1686 = vpop.f32.mrb[0].mxu0
    %1687 = vdwg.mxu0
    %1688 = vmatprep.subr.bf16.mxu0 %v1482
    %1689 = vmatpush1.bf16.msra.mxu0 %v1481
    %1690 = vmatprep.subr.bf16.mxu0 %v1492
    %1691 = vmatpush1.bf16.msra.mxu0 %v1491
    %1692 = vmatprep.subr.bf16.mxu0 %v1502
    %1693 = vmatpush1.bf16.msra.mxu0 %v1501
    %1694 = vmatprep.subr.bf16.mxu0 %v1512
    %1695 = vmatpush1.bf16.msra.mxu0 %v1511
    %1696 = vmatprep.subr.bf16.mxu0 %v1522
    %1697 = vmatpush1.bf16.msra.mxu0 %v1521
    %1698 = vmatprep.subr.bf16.mxu0 %v1532
    %1699 = vmatpush1.bf16.msra.mxu0 %v1531
    %1700 = vmatprep.subr.bf16.mxu0 %v1542
    %1701 = vmatpush1.bf16.msra.mxu0 %v1541
    %1702 = vmatprep.subr.bf16.mxu0 %v1552
    %1703 = vmatpush1.bf16.msra.mxu0 %v1551
    %1704 = vmatprep.subr.bf16.mxu0 0
    %1705 = vmatpush1.bf16.msra.mxu0 0
    %1706 = vmatprep.subr.bf16.mxu0 0
    %1707 = vmatpush1.bf16.msra.mxu0 0
    %1708 = vmatprep.subr.bf16.mxu0 0
    %1709 = vmatpush1.bf16.msra.mxu0 0
    %1710 = vmatprep.subr.bf16.mxu0 0
    %1711 = vmatpush1.bf16.msra.mxu0 0
    %1712 = vmatprep.subr.bf16.mxu0 0
    %1713 = vmatpush1.bf16.msra.mxu0 0
    %1714 = vmatprep.subr.bf16.mxu0 0
    %1715 = vmatpush1.bf16.msra.mxu0 0
    %1716 = vmatprep.subr.bf16.mxu0 0
    %1717 = vmatpush1.bf16.msra.mxu0 0
    %1718 = vmatprep.subr.bf16.mxu0 0
    %1719 = vmatpush1.bf16.msra.mxu0 0
    %1720 = vmatprep.mubr.bf16.mxu0 0
    %1721 = vmatmul.mubr.bf16.gmra.mrb[0].mxu0 %v1476
    %v1722 = vpop.f32.mrb[0].mxu0
    %v1723 = vadd.f32 %v1580, %v1722
    %v1724 = vpop.f32.mrb[0].mxu0
    %v1725 = vadd.f32 %v1584, %v1724
    %v1726 = vpop.f32.mrb[0].mxu0
    %v1727 = vpop.f32.mrb[0].mxu0
    %1728 = vdwg.mxu0
    %1729 = vmatprep.subr.bf16.mxu0 %v1484
    %1730 = vmatpush1.bf16.msra.mxu0 %v1483
    %1731 = vmatprep.subr.bf16.mxu0 %v1494
    %1732 = vmatpush1.bf16.msra.mxu0 %v1493
    %1733 = vmatprep.subr.bf16.mxu0 %v1504
    %1734 = vmatpush1.bf16.msra.mxu0 %v1503
    %1735 = vmatprep.subr.bf16.mxu0 %v1514
    %1736 = vmatpush1.bf16.msra.mxu0 %v1513
    %1737 = vmatprep.subr.bf16.mxu0 %v1524
    %1738 = vmatpush1.bf16.msra.mxu0 %v1523
    %1739 = vmatprep.subr.bf16.mxu0 %v1534
    %1740 = vmatpush1.bf16.msra.mxu0 %v1533
    %1741 = vmatprep.subr.bf16.mxu0 %v1544
    %1742 = vmatpush1.bf16.msra.mxu0 %v1543
    %1743 = vmatprep.subr.bf16.mxu0 %v1554
    %1744 = vmatpush1.bf16.msra.mxu0 %v1553
    %1745 = vmatprep.subr.bf16.mxu0 0
    %1746 = vmatpush1.bf16.msra.mxu0 0
    %1747 = vmatprep.subr.bf16.mxu0 0
    %1748 = vmatpush1.bf16.msra.mxu0 0
    %1749 = vmatprep.subr.bf16.mxu0 0
    %1750 = vmatpush1.bf16.msra.mxu0 0
    %1751 = vmatprep.subr.bf16.mxu0 0
    %1752 = vmatpush1.bf16.msra.mxu0 0
    %1753 = vmatprep.subr.bf16.mxu0 0
    %1754 = vmatpush1.bf16.msra.mxu0 0
    %1755 = vmatprep.subr.bf16.mxu0 0
    %1756 = vmatpush1.bf16.msra.mxu0 0
    %1757 = vmatprep.subr.bf16.mxu0 0
    %1758 = vmatpush1.bf16.msra.mxu0 0
    %1759 = vmatprep.subr.bf16.mxu0 0
    %1760 = vmatpush1.bf16.msra.mxu0 0
    %1761 = vmatprep.mubr.bf16.mxu0 0
    %1762 = vmatmul.mubr.bf16.gmra.mrb[0].mxu0 %v1476
    %v1763 = vpop.f32.mrb[0].mxu0
    %v1764 = vadd.f32 %v1588, %v1763
    %v1765 = vpop.f32.mrb[0].mxu0
    %v1766 = vadd.f32 %v1592, %v1765
    %v1767 = vpop.f32.mrb[0].mxu0
    %v1768 = vpop.f32.mrb[0].mxu0
    %1769 = vdwg.mxu0
    %1770 = vmatprep.subr.bf16.mxu0 %v1486
    %1771 = vmatpush1.bf16.msra.mxu0 %v1485
    %1772 = vmatprep.subr.bf16.mxu0 %v1496
    %1773 = vmatpush1.bf16.msra.mxu0 %v1495
    %1774 = vmatprep.subr.bf16.mxu0 %v1506
    %1775 = vmatpush1.bf16.msra.mxu0 %v1505
    %1776 = vmatprep.subr.bf16.mxu0 %v1516
    %1777 = vmatpush1.bf16.msra.mxu0 %v1515
    %1778 = vmatprep.subr.bf16.mxu0 %v1526
    %1779 = vmatpush1.bf16.msra.mxu0 %v1525
    %1780 = vmatprep.subr.bf16.mxu0 %v1536
    %1781 = vmatpush1.bf16.msra.mxu0 %v1535
    %1782 = vmatprep.subr.bf16.mxu0 %v1546
    %1783 = vmatpush1.bf16.msra.mxu0 %v1545
    %1784 = vmatprep.subr.bf16.mxu0 %v1556
    %1785 = vmatpush1.bf16.msra.mxu0 %v1555
    %1786 = vmatprep.subr.bf16.mxu0 0
    %1787 = vmatpush1.bf16.msra.mxu0 0
    %1788 = vmatprep.subr.bf16.mxu0 0
    %1789 = vmatpush1.bf16.msra.mxu0 0
    %1790 = vmatprep.subr.bf16.mxu0 0
    %1791 = vmatpush1.bf16.msra.mxu0 0
    %1792 = vmatprep.subr.bf16.mxu0 0
    %1793 = vmatpush1.bf16.msra.mxu0 0
    %1794 = vmatprep.subr.bf16.mxu0 0
    %1795 = vmatpush1.bf16.msra.mxu0 0
    %1796 = vmatprep.subr.bf16.mxu0 0
    %1797 = vmatpush1.bf16.msra.mxu0 0
    %1798 = vmatprep.subr.bf16.mxu0 0
    %1799 = vmatpush1.bf16.msra.mxu0 0
    %1800 = vmatprep.subr.bf16.mxu0 0
    %1801 = vmatpush1.bf16.msra.mxu0 0
    %1802 = vmatprep.mubr.bf16.mxu0 0
    %1803 = vmatmul.mubr.bf16.gmra.mrb[0].mxu0 %v1476
    %v1804 = vpop.f32.mrb[0].mxu0
    %v1805 = vadd.f32 %v1596, %v1804
    %v1806 = vpop.f32.mrb[0].mxu0
    %v1807 = vpop.f32.mrb[0].mxu0
    %v1808 = vpop.f32.mrb[0].mxu0
    %1809 = vdwg.mxu0
    %v1810 = vstv %s1426
    %v1811 = vmul.f32 %v1810, %v1382
    %v1812 = vstv %s1427
    %v1813 = vmul.f32 %v1812, %v1641
    %v1814 = vadd.f32 %v1811, %v1813
    %v1815 = vmax.f32 %v1643, 0.0
    %v1816 = vstv %s1428
    %v1817 = vmul.f32 %v1816, %v1815
    %v1818 = vadd.f32 %v1814, %v1817
    %v1819 = vtanh.pop %v1682
    %v1820 = vstv %s1429
    %v1821 = vmul.f32 %v1820, %v1819
    %v1822 = vadd.f32 %v1818, %v1821
    %v1823 = vadd.f32 %v1396, %v1822
    %v1824 = vstv %s1430
    %v1825 = vmul.f32 %v1824, %v1382
    %v1826 = vstv %s1431
    %v1827 = vmul.f32 %v1826, %v1684
    %v1828 = vadd.f32 %v1825, %v1827
    %v1829 = vmax.f32 %v1723, 0.0
    %v1830 = vstv %s1432
    %v1831 = vmul.f32 %v1830, %v1829
    %v1832 = vadd.f32 %v1828, %v1831
    %v1833 = vtanh.pop %v1725
    %v1834 = vstv %s1433
    %v1835 = vmul.f32 %v1834, %v1833
    %v1836 = vadd.f32 %v1832, %v1835
    %v1837 = vadd.f32 %v1410, %v1836
    %v1838 = vstv %s1434
    %v1839 = vmul.f32 %v1838, %v1382
    %v1840 = vstv %s1435
    %v1841 = vmul.f32 %v1840, %v1764
    %v1842 = vadd.f32 %v1839, %v1841
    %v1843 = vmax.f32 %v1766, 0.0
    %v1844 = vstv %s1436
    %v1845 = vmul.f32 %v1844, %v1843
    %v1846 = vadd.f32 %v1842, %v1845
    %v1847 = vtanh.pop %v1805
    %v1848 = vstv %s1437
    %v1849 = vmul.f32 %v1848, %v1847
    %v1850 = vadd.f32 %v1846, %v1849
    %v1851 = vadd.f32 %v1424, %v1850
    %1852 = vst [vmem:[#allocation15 + $0x8] sm:$0xff] %v1823
    %s1853 = sld [smem:[#allocation4 + $0x29]]
    %s1854 = sld [smem:[#allocation4 + $0x2a]]
    %s1855 = sld [smem:[#allocation4 + $0x2b]]
    %s1856 = sld [smem:[#allocation4 + $0x2c]]
    %s1857 = sld [smem:[#allocation4 + $0x3d]]
    %s1858 = sld [smem:[#allocation4 + $0x3e]]
    %s1859 = sld [smem:[#allocation4 + $0x3f]]
    %s1860 = sld [smem:[#allocation4 + $0x40]]
    %s1861 = smul.u32 %s409, 6
    %s1862 = sshll.u32 %s1861, 4
    %1863 = dma.done %s415, %s1862
    %s1864 = scalar_lea.hbm %s6, 2560
    %s1866 = sshll.u32 1, 14
    %s1867 = sxor.u32 4294967295, %s1866
    %s1869 = sadd.s32 2, %s105
    %s1871 = sshll.u32 7, 26
    %s1872 = sxor.u32 4294967295, %s1871
    %s1873 = sand.u32 0, %s1872
    %s1874 = sshll.u32 %s1869, 26
    %s1875 = sor.u32 %s1873, %s1874
    %s1876 = sshll.u32 [#allocation2], 4
    %s1877 = int_to_ptr.vmem [resolvable:$true] %s1876
    %1880 = sst [smem:[#allocation25]] 5632
    %s1881 = scalar_lea.smem [#allocation25], 1
    %1882 = sst [smem:[%s1881]] 1536
    %s1883 = scalar_lea.smem [#allocation25], 2
    %1884 = sst [smem:[%s1883]] 4
    %s1885 = scalar_lea.smem [#allocation25], 3
    %1886 = sst [smem:[%s1885]] 64
    %s1887 = scalar_lea.smem [#allocation25], 4
    %1888 = sst [smem:[%s1887]] 128
    %s1889 = scalar_lea.smem [#allocation25], 5
    %1890 = sst [smem:[%s1889]] 2
    %s1891 = scalar_lea.smem [#allocation25], 6
    %1892 = sst [smem:[%s1891]] 2816
    %s1893 = scalar_lea.smem [#allocation25], 7
    %1894 = sst [smem:[%s1893]] 64
    %s1895 = scalar_lea.smem [#allocation25], 8
    %1896 = sst [smem:[%s1895]] 4
    %1898 = dma.general %s1864, 4096, %s1877, [#allocation3], [#allocation24], [#allocation25], %s1875, 0
    %v1899 = vpack.c.bf16 %v1823, %v1823
    %v1900 = vld [vmem:[%s414] sm:$0xff]
    %v1901 = vld [vmem:[%s414 + $0x8] sm:$0xff]
    %v1902 = vld [vmem:[%s414 + $0x10] sm:$0xff]
    %v1903 = vld [vmem:[%s414 + $0x18] sm:$0xff]
    %v1904 = vld [vmem:[%s414 + $0x20] sm:$0xff]
    %v1905 = vld [vmem:[%s414 + $0x28] sm:$0xff]
    %v1906 = vld [vmem:[%s414 + $0x60] sm:$0xff]
    %v1907 = vld [vmem:[%s414 + $0x68] sm:$0xff]
    %v1908 = vld [vmem:[%s414 + $0x70] sm:$0xff]
    %v1909 = vld [vmem:[%s414 + $0x78] sm:$0xff]
    %v1910 = vld [vmem:[%s414 + $0x80] sm:$0xff]
    %v1911 = vld [vmem:[%s414 + $0x88] sm:$0xff]
    %v1912 = vld [vmem:[%s414 + $0xc0] sm:$0xff]
    %v1913 = vld [vmem:[%s414 + $0xc8] sm:$0xff]
    %v1914 = vld [vmem:[%s414 + $0xd0] sm:$0xff]
    %v1915 = vld [vmem:[%s414 + $0xd8] sm:$0xff]
    %v1916 = vld [vmem:[%s414 + $0xe0] sm:$0xff]
    %v1917 = vld [vmem:[%s414 + $0xe8] sm:$0xff]
    %v1918 = vld [vmem:[%s414 + $0x120] sm:$0xff]
    %v1919 = vld [vmem:[%s414 + $0x128] sm:$0xff]
    %v1920 = vld [vmem:[%s414 + $0x130] sm:$0xff]
    %v1921 = vld [vmem:[%s414 + $0x138] sm:$0xff]
    %v1922 = vld [vmem:[%s414 + $0x140] sm:$0xff]
    %v1923 = vld [vmem:[%s414 + $0x148] sm:$0xff]
    %v1924 = vld [vmem:[%s414 + $0x180] sm:$0xff]
    %v1925 = vld [vmem:[%s414 + $0x188] sm:$0xff]
    %v1926 = vld [vmem:[%s414 + $0x190] sm:$0xff]
    %v1927 = vld [vmem:[%s414 + $0x198] sm:$0xff]
    %v1928 = vld [vmem:[%s414 + $0x1a0] sm:$0xff]
    %v1929 = vld [vmem:[%s414 + $0x1a8] sm:$0xff]
    %v1930 = vld [vmem:[%s414 + $0x1e0] sm:$0xff]
    %v1931 = vld [vmem:[%s414 + $0x1e8] sm:$0xff]
    %v1932 = vld [vmem:[%s414 + $0x1f0] sm:$0xff]
    %v1933 = vld [vmem:[%s414 + $0x1f8] sm:$0xff]
    %v1934 = vld [vmem:[%s414 + $0x200] sm:$0xff]
    %v1935 = vld [vmem:[%s414 + $0x208] sm:$0xff]
    %v1936 = vld [vmem:[%s414 + $0x240] sm:$0xff]
    %v1937 = vld [vmem:[%s414 + $0x248] sm:$0xff]
    %v1938 = vld [vmem:[%s414 + $0x250] sm:$0xff]
    %v1939 = vld [vmem:[%s414 + $0x258] sm:$0xff]
    %v1940 = vld [vmem:[%s414 + $0x260] sm:$0xff]
    %v1941 = vld [vmem:[%s414 + $0x268] sm:$0xff]
    %v1942 = vld [vmem:[%s414 + $0x2a0] sm:$0xff]
    %v1943 = vld [vmem:[%s414 + $0x2a8] sm:$0xff]
    %v1944 = vld [vmem:[%s414 + $0x2b0] sm:$0xff]
    %v1945 = vld [vmem:[%s414 + $0x2b8] sm:$0xff]
    %v1946 = vld [vmem:[%s414 + $0x2c0] sm:$0xff]
    %v1947 = vld [vmem:[%s414 + $0x2c8] sm:$0xff]
    %v1948 = vld [vmem:[#allocation14 + $0x22] sm:$0x3f]
    %v1950 = vlaneseq
    %v1951 = vshrl.u32 %v1950, 7
    %v1952 = vsub.s32 0, %v1951
    %v1953 = vrot.slane %v1948, %v1952
    %v1954 = vlaneseq
    %v1955 = vshrl.u32 %v1954, 7
    %v1956 = vsub.s32 1, %v1955
    %v1957 = vrot.slane %v1948, %v1956
    %v1958 = vlaneseq
    %v1959 = vshrl.u32 %v1958, 7
    %v1960 = vsub.s32 2, %v1959
    %v1961 = vrot.slane %v1948, %v1960
    %v1962 = vlaneseq
    %v1963 = vshrl.u32 %v1962, 7
    %v1964 = vsub.s32 3, %v1963
    %v1965 = vrot.slane %v1948, %v1964
    %v1966 = vlaneseq
    %v1967 = vshrl.u32 %v1966, 7
    %v1968 = vsub.s32 4, %v1967
    %v1969 = vrot.slane %v1948, %v1968
    %v1970 = vlaneseq
    %v1971 = vshrl.u32 %v1970, 7
    %v1972 = vsub.s32 5, %v1971
    %v1973 = vrot.slane %v1948, %v1972
    %1980 = vmatprep.subr.bf16.mxu0 %v1901
    %1981 = vmatpush1.bf16.msra.mxu0 %v1900
    %1982 = vmatprep.subr.bf16.mxu0 %v1907
    %1983 = vmatpush1.bf16.msra.mxu0 %v1906
    %1984 = vmatprep.subr.bf16.mxu0 %v1913
    %1985 = vmatpush1.bf16.msra.mxu0 %v1912
    %1986 = vmatprep.subr.bf16.mxu0 %v1919
    %1987 = vmatpush1.bf16.msra.mxu0 %v1918
    %1988 = vmatprep.subr.bf16.mxu0 %v1925
    %1989 = vmatpush1.bf16.msra.mxu0 %v1924
    %1990 = vmatprep.subr.bf16.mxu0 %v1931
    %1991 = vmatpush1.bf16.msra.mxu0 %v1930
    %1992 = vmatprep.subr.bf16.mxu0 %v1937
    %1993 = vmatpush1.bf16.msra.mxu0 %v1936
    %1994 = vmatprep.subr.bf16.mxu0 %v1943
    %1995 = vmatpush1.bf16.msra.mxu0 %v1942
    %1996 = vmatprep.subr.bf16.mxu0 0
    %1997 = vmatpush1.bf16.msra.mxu0 0
    %1998 = vmatprep.subr.bf16.mxu0 0
    %1999 = vmatpush1.bf16.msra.mxu0 0
    %2000 = vmatprep.subr.bf16.mxu0 0
    %2001 = vmatpush1.bf16.msra.mxu0 0
    %2002 = vmatprep.subr.bf16.mxu0 0
    %2003 = vmatpush1.bf16.msra.mxu0 0
    %2004 = vmatprep.subr.bf16.mxu0 0
    %2005 = vmatpush1.bf16.msra.mxu0 0
    %2006 = vmatprep.subr.bf16.mxu0 0
    %2007 = vmatpush1.bf16.msra.mxu0 0
    %2008 = vmatprep.subr.bf16.mxu0 0
    %2009 = vmatpush1.bf16.msra.mxu0 0
    %2010 = vmatprep.subr.bf16.mxu0 0
    %2011 = vmatpush1.bf16.msra.mxu0 0
    %2012 = vmatprep.mubr.bf16.mxu0 0
    %2013 = vmatmul.mubr.bf16.gmra.mrb[0].mxu0 %v1899
    %v2014 = vpop.f32.mrb[0].mxu0
    %v2015 = vadd.f32 %v1953, %v2014
    %v2016 = vpop.f32.mrb[0].mxu0
    %v2017 = vadd.f32 %v1957, %v2016
    %v2018 = vpop.f32.mrb[0].mxu0
    %v2019 = vpop.f32.mrb[0].mxu0
    %2020 = vdwg.mxu0
    %2021 = vmatprep.subr.bf16.mxu0 %v1903
    %2022 = vmatpush1.bf16.msra.mxu0 %v1902
    %2023 = vmatprep.subr.bf16.mxu0 %v1909
    %2024 = vmatpush1.bf16.msra.mxu0 %v1908
    %2025 = vmatprep.subr.bf16.mxu0 %v1915
    %2026 = vmatpush1.bf16.msra.mxu0 %v1914
    %2027 = vmatprep.subr.bf16.mxu0 %v1921
    %2028 = vmatpush1.bf16.msra.mxu0 %v1920
    %2029 = vmatprep.subr.bf16.mxu0 %v1927
    %2030 = vmatpush1.bf16.msra.mxu0 %v1926
    %2031 = vmatprep.subr.bf16.mxu0 %v1933
    %2032 = vmatpush1.bf16.msra.mxu0 %v1932
    %2033 = vmatprep.subr.bf16.mxu0 %v1939
    %2034 = vmatpush1.bf16.msra.mxu0 %v1938
    %2035 = vmatprep.subr.bf16.mxu0 %v1945
    %2036 = vmatpush1.bf16.msra.mxu0 %v1944
    %2037 = vmatprep.subr.bf16.mxu0 0
    %2038 = vmatpush1.bf16.msra.mxu0 0
    %2039 = vmatprep.subr.bf16.mxu0 0
    %2040 = vmatpush1.bf16.msra.mxu0 0
    %2041 = vmatprep.subr.bf16.mxu0 0
    %2042 = vmatpush1.bf16.msra.mxu0 0
    %2043 = vmatprep.subr.bf16.mxu0 0
    %2044 = vmatpush1.bf16.msra.mxu0 0
    %2045 = vmatprep.subr.bf16.mxu0 0
    %2046 = vmatpush1.bf16.msra.mxu0 0
    %2047 = vmatprep.subr.bf16.mxu0 0
    %2048 = vmatpush1.bf16.msra.mxu0 0
    %2049 = vmatprep.subr.bf16.mxu0 0
    %2050 = vmatpush1.bf16.msra.mxu0 0
    %2051 = vmatprep.subr.bf16.mxu0 0
    %2052 = vmatpush1.bf16.msra.mxu0 0
    %2053 = vmatprep.mubr.bf16.mxu0 0
    %2054 = vmatmul.mubr.bf16.gmra.mrb[0].mxu0 %v1899
    %v2055 = vpop.f32.mrb[0].mxu0
    %v2056 = vadd.f32 %v1961, %v2055
    %v2057 = vpop.f32.mrb[0].mxu0
    %v2058 = vadd.f32 %v1965, %v2057
    %v2059 = vpop.f32.mrb[0].mxu0
    %v2060 = vpop.f32.mrb[0].mxu0
    %2061 = vdwg.mxu0
    %2062 = vmatprep.subr.bf16.mxu0 %v1905
    %2063 = vmatpush1.bf16.msra.mxu0 %v1904
    %2064 = vmatprep.subr.bf16.mxu0 %v1911
    %2065 = vmatpush1.bf16.msra.mxu0 %v1910
    %2066 = vmatprep.subr.bf16.mxu0 %v1917
    %2067 = vmatpush1.bf16.msra.mxu0 %v1916
    %2068 = vmatprep.subr.bf16.mxu0 %v1923
    %2069 = vmatpush1.bf16.msra.mxu0 %v1922
    %2070 = vmatprep.subr.bf16.mxu0 %v1929
    %2071 = vmatpush1.bf16.msra.mxu0 %v1928
    %2072 = vmatprep.subr.bf16.mxu0 %v1935
    %2073 = vmatpush1.bf16.msra.mxu0 %v1934
    %2074 = vmatprep.subr.bf16.mxu0 %v1941
    %2075 = vmatpush1.bf16.msra.mxu0 %v1940
    %2076 = vmatprep.subr.bf16.mxu0 %v1947
    %2077 = vmatpush1.bf16.msra.mxu0 %v1946
    %2078 = vmatprep.subr.bf16.mxu0 0
    %2079 = vmatpush1.bf16.msra.mxu0 0
    %2080 = vmatprep.subr.bf16.mxu0 0
    %2081 = vmatpush1.bf16.msra.mxu0 0
    %2082 = vmatprep.subr.bf16.mxu0 0
    %2083 = vmatpush1.bf16.msra.mxu0 0
    %2084 = vmatprep.subr.bf16.mxu0 0
    %2085 = vmatpush1.bf16.msra.mxu0 0
    %2086 = vmatprep.subr.bf16.mxu0 0
    %2087 = vmatpush1.bf16.msra.mxu0 0
    %2088 = vmatprep.subr.bf16.mxu0 0
    %2089 = vmatpush1.bf16.msra.mxu0 0
    %2090 = vmatprep.subr.bf16.mxu0 0
    %2091 = vmatpush1.bf16.msra.mxu0 0
    %2092 = vmatprep.subr.bf16.mxu0 0
    %2093 = vmatpush1.bf16.msra.mxu0 0
    %2094 = vmatprep.mubr.bf16.mxu0 0
    %2095 = vmatmul.mubr.bf16.gmra.mrb[0].mxu0 %v1899
    %v2096 = vpop.f32.mrb[0].mxu0
    %v2097 = vadd.f32 %v1969, %v2096
    %v2098 = vpop.f32.mrb[0].mxu0
    %v2099 = vadd.f32 %v1973, %v2098
    %v2100 = vpop.f32.mrb[0].mxu0
    %v2101 = vpop.f32.mrb[0].mxu0
    %2102 = vdwg.mxu0
    %v2103 = vstv %s1853
    %v2104 = vmul.f32 %v2103, %v1823
    %v2105 = vstv %s1854
    %v2106 = vmul.f32 %v2105, %v2015
    %v2107 = vadd.f32 %v2104, %v2106
    %v2108 = vmax.f32 %v2017, 0.0
    %v2109 = vstv %s1855
    %v2110 = vmul.f32 %v2109, %v2108
    %v2111 = vadd.f32 %v2107, %v2110
    %v2112 = vtanh.pop %v2056
    %v2113 = vstv %s1856
    %v2114 = vmul.f32 %v2113, %v2112
    %v2115 = vadd.f32 %v2111, %v2114
    %v2116 = vadd.f32 %v1837, %v2115
    %v2117 = vstv %s1857
    %v2118 = vmul.f32 %v2117, %v1823
    %v2119 = vstv %s1858
    %v2120 = vmul.f32 %v2119, %v2058
    %v2121 = vadd.f32 %v2118, %v2120
    %v2122 = vmax.f32 %v2097, 0.0
    %v2123 = vstv %s1859
    %v2124 = vmul.f32 %v2123, %v2122
    %v2125 = vadd.f32 %v2121, %v2124
    %v2126 = vtanh.pop %v2099
    %v2127 = vstv %s1860
    %v2128 = vmul.f32 %v2127, %v2126
    %v2129 = vadd.f32 %v2125, %v2128
    %v2130 = vadd.f32 %v1851, %v2129
    %2131 = vst [vmem:[#allocation15 + $0x10] sm:$0xff] %v2116
    %s2132 = sld [smem:[#allocation4 + $0x42]]
    %s2133 = sld [smem:[#allocation4 + $0x43]]
    %s2134 = sld [smem:[#allocation4 + $0x44]]
    %s2135 = sld [smem:[#allocation4 + $0x45]]
    %s2136 = smul.u32 %s409, 4
    %s2137 = sshll.u32 %s2136, 4
    %2138 = dma.done [#allocation3], %s2137
    %v2139 = vpack.c.bf16 %v2116, %v2116
    %v2140 = vld [vmem:[#allocation2] sm:$0xff]
    %v2141 = vld [vmem:[#allocation2 + $0x8] sm:$0xff]
    %v2142 = vld [vmem:[#allocation2 + $0x10] sm:$0xff]
    %v2143 = vld [vmem:[#allocation2 + $0x18] sm:$0xff]
    %v2144 = vld [vmem:[#allocation2 + $0x60] sm:$0xff]
    %v2145 = vld [vmem:[#allocation2 + $0x68] sm:$0xff]
    %v2146 = vld [vmem:[#allocation2 + $0x70] sm:$0xff]
    %v2147 = vld [vmem:[#allocation2 + $0x78] sm:$0xff]
    %v2148 = vld [vmem:[#allocation2 + $0xc0] sm:$0xff]
    %v2149 = vld [vmem:[#allocation2 + $0xc8] sm:$0xff]
    %v2150 = vld [vmem:[#allocation2 + $0xd0] sm:$0xff]
    %v2151 = vld [vmem:[#allocation2 + $0xd8] sm:$0xff]
    %v2152 = vld [vmem:[#allocation2 + $0x120] sm:$0xff]
    %v2153 = vld [vmem:[#allocation2 + $0x128] sm:$0xff]
    %v2154 = vld [vmem:[#allocation2 + $0x130] sm:$0xff]
    %v2155 = vld [vmem:[#allocation2 + $0x138] sm:$0xff]
    %v2156 = vld [vmem:[#allocation2 + $0x180] sm:$0xff]
    %v2157 = vld [vmem:[#allocation2 + $0x188] sm:$0xff]
    %v2158 = vld [vmem:[#allocation2 + $0x190] sm:$0xff]
    %v2159 = vld [vmem:[#allocation2 + $0x198] sm:$0xff]
    %v2160 = vld [vmem:[#allocation2 + $0x1e0] sm:$0xff]
    %v2161 = vld [vmem:[#allocation2 + $0x1e8] sm:$0xff]
    %v2162 = vld [vmem:[#allocation2 + $0x1f0] sm:$0xff]
    %v2163 = vld [vmem:[#allocation2 + $0x1f8] sm:$0xff]
    %v2164 = vld [vmem:[#allocation2 + $0x240] sm:$0xff]
    %v2165 = vld [vmem:[#allocation2 + $0x248] sm:$0xff]
    %v2166 = vld [vmem:[#allocation2 + $0x250] sm:$0xff]
    %v2167 = vld [vmem:[#allocation2 + $0x258] sm:$0xff]
    %v2168 = vld [vmem:[#allocation2 + $0x2a0] sm:$0xff]
    %v2169 = vld [vmem:[#allocation2 + $0x2a8] sm:$0xff]
    %v2170 = vld [vmem:[#allocation2 + $0x2b0] sm:$0xff]
    %v2171 = vld [vmem:[#allocation2 + $0x2b8] sm:$0xff]
    %v2172 = vld [vmem:[#allocation14 + $0x28] sm:$0xf]
    %v2174 = vlaneseq
    %v2175 = vshrl.u32 %v2174, 7
    %v2176 = vsub.s32 0, %v2175
    %v2177 = vrot.slane %v2172, %v2176
    %v2178 = vlaneseq
    %v2179 = vshrl.u32 %v2178, 7
    %v2180 = vsub.s32 1, %v2179
    %v2181 = vrot.slane %v2172, %v2180
    %v2182 = vlaneseq
    %v2183 = vshrl.u32 %v2182, 7
    %v2184 = vsub.s32 2, %v2183
    %v2185 = vrot.slane %v2172, %v2184
    %2189 = vmatprep.subr.bf16.mxu0 %v2141
    %2190 = vmatpush1.bf16.msra.mxu0 %v2140
    %2191 = vmatprep.subr.bf16.mxu0 %v2145
    %2192 = vmatpush1.bf16.msra.mxu0 %v2144
    %2193 = vmatprep.subr.bf16.mxu0 %v2149
    %2194 = vmatpush1.bf16.msra.mxu0 %v2148
    %2195 = vmatprep.subr.bf16.mxu0 %v2153
    %2196 = vmatpush1.bf16.msra.mxu0 %v2152
    %2197 = vmatprep.subr.bf16.mxu0 %v2157
    %2198 = vmatpush1.bf16.msra.mxu0 %v2156
    %2199 = vmatprep.subr.bf16.mxu0 %v2161
    %2200 = vmatpush1.bf16.msra.mxu0 %v2160
    %2201 = vmatprep.subr.bf16.mxu0 %v2165
    %2202 = vmatpush1.bf16.msra.mxu0 %v2164
    %2203 = vmatprep.subr.bf16.mxu0 %v2169
    %2204 = vmatpush1.bf16.msra.mxu0 %v2168
    %2205 = vmatprep.subr.bf16.mxu0 0
    %2206 = vmatpush1.bf16.msra.mxu0 0
    %2207 = vmatprep.subr.bf16.mxu0 0
    %2208 = vmatpush1.bf16.msra.mxu0 0
    %2209 = vmatprep.subr.bf16.mxu0 0
    %2210 = vmatpush1.bf16.msra.mxu0 0
    %2211 = vmatprep.subr.bf16.mxu0 0
    %2212 = vmatpush1.bf16.msra.mxu0 0
    %2213 = vmatprep.subr.bf16.mxu0 0
    %2214 = vmatpush1.bf16.msra.mxu0 0
    %2215 = vmatprep.subr.bf16.mxu0 0
    %2216 = vmatpush1.bf16.msra.mxu0 0
    %2217 = vmatprep.subr.bf16.mxu0 0
    %2218 = vmatpush1.bf16.msra.mxu0 0
    %2219 = vmatprep.subr.bf16.mxu0 0
    %2220 = vmatpush1.bf16.msra.mxu0 0
    %2221 = vmatprep.mubr.bf16.mxu0 0
    %2222 = vmatmul.mubr.bf16.gmra.mrb[0].mxu0 %v2139
    %v2223 = vpop.f32.mrb[0].mxu0
    %v2224 = vadd.f32 %v2177, %v2223
    %v2225 = vpop.f32.mrb[0].mxu0
    %v2226 = vadd.f32 %v2181, %v2225
    %v2227 = vpop.f32.mrb[0].mxu0
    %v2228 = vpop.f32.mrb[0].mxu0
    %2229 = vdwg.mxu0
    %2230 = vmatprep.subr.bf16.mxu0 %v2143
    %2231 = vmatpush1.bf16.msra.mxu0 %v2142
    %2232 = vmatprep.subr.bf16.mxu0 %v2147
    %2233 = vmatpush1.bf16.msra.mxu0 %v2146
    %2234 = vmatprep.subr.bf16.mxu0 %v2151
    %2235 = vmatpush1.bf16.msra.mxu0 %v2150
    %2236 = vmatprep.subr.bf16.mxu0 %v2155
    %2237 = vmatpush1.bf16.msra.mxu0 %v2154
    %2238 = vmatprep.subr.bf16.mxu0 %v2159
    %2239 = vmatpush1.bf16.msra.mxu0 %v2158
    %2240 = vmatprep.subr.bf16.mxu0 %v2163
    %2241 = vmatpush1.bf16.msra.mxu0 %v2162
    %2242 = vmatprep.subr.bf16.mxu0 %v2167
    %2243 = vmatpush1.bf16.msra.mxu0 %v2166
    %2244 = vmatprep.subr.bf16.mxu0 %v2171
    %2245 = vmatpush1.bf16.msra.mxu0 %v2170
    %2246 = vmatprep.subr.bf16.mxu0 0
    %2247 = vmatpush1.bf16.msra.mxu0 0
    %2248 = vmatprep.subr.bf16.mxu0 0
    %2249 = vmatpush1.bf16.msra.mxu0 0
    %2250 = vmatprep.subr.bf16.mxu0 0
    %2251 = vmatpush1.bf16.msra.mxu0 0
    %2252 = vmatprep.subr.bf16.mxu0 0
    %2253 = vmatpush1.bf16.msra.mxu0 0
    %2254 = vmatprep.subr.bf16.mxu0 0
    %2255 = vmatpush1.bf16.msra.mxu0 0
    %2256 = vmatprep.subr.bf16.mxu0 0
    %2257 = vmatpush1.bf16.msra.mxu0 0
    %2258 = vmatprep.subr.bf16.mxu0 0
    %2259 = vmatpush1.bf16.msra.mxu0 0
    %2260 = vmatprep.subr.bf16.mxu0 0
    %2261 = vmatpush1.bf16.msra.mxu0 0
    %2262 = vmatprep.mubr.bf16.mxu0 0
    %2263 = vmatmul.mubr.bf16.gmra.mrb[0].mxu0 %v2139
    %v2264 = vpop.f32.mrb[0].mxu0
    %v2265 = vadd.f32 %v2185, %v2264
    %v2266 = vpop.f32.mrb[0].mxu0
    %v2267 = vpop.f32.mrb[0].mxu0
    %v2268 = vpop.f32.mrb[0].mxu0
    %2269 = vdwg.mxu0
    %v2270 = vstv %s2132
    %v2271 = vmul.f32 %v2270, %v2116
    %v2272 = vstv %s2133
    %v2273 = vmul.f32 %v2272, %v2224
    %v2274 = vadd.f32 %v2271, %v2273
    %v2275 = vmax.f32 %v2226, 0.0
    %v2276 = vstv %s2134
    %v2277 = vmul.f32 %v2276, %v2275
    %v2278 = vadd.f32 %v2274, %v2277
    %v2279 = vtanh.pop %v2265
    %v2280 = vstv %s2135
    %v2281 = vmul.f32 %v2280, %v2279
    %v2282 = vadd.f32 %v2278, %v2281
    %v2283 = vadd.f32 %v2130, %v2282
    %2284 = vst [vmem:[#allocation15 + $0x18] sm:$0xff] %v2283
    // Predicated region
    $region50: #{search_cell_forward.1} parent=1 // pred_check
      _
    $region51: #{search_cell_forward.1} parent=1 // pred_check_branch
      %2286 = sbr.rel (0) target = $region53
    $region52: #{search_cell_forward.1} parent=1 // pred_region
      %s2288 = ssub.s32 512, 512
      %2289 = vsyncadd [#allocation6], %s2288
      %s2291 = sshll.u32 [#allocation15], 4
      %s2292 = int_to_ptr.vmem [resolvable:$true] %s2291
      %2294 = dma.vmem_to_hbm [thread:$0]  %s2292, 512, %s7, [#allocation6]
    $region53: #{search_cell_forward.1} parent=1 // pred_fallthru
      _
    // Predicated region
    $region54: #{search_cell_forward.1} parent=1 // pred_check
      _
    $region55: #{search_cell_forward.1} parent=1 // pred_check_branch
      %2296 = sbr.rel (0) target = $region57
    $region56: #{search_cell_forward.1} parent=1 // pred_region
      %2297 = dma.done [#allocation6], 512
    $region57: #{search_cell_forward.1} parent=1 // pred_fallthru
      _
    %2298 = vsyncpa [#allocation5], 1
    %2299 = vsyncpa [#allocation10], 1
    %2300 = vsyncpa [#allocation13], 1
    %2301 = vsyncpa [#allocation6], 1
    %2302 = vsyncpa [#allocation7], 1
  %2303 = vsyncmov [#allocation3]
  %s2304 = vpop.sfrf %2303
  %p2305 = scmp.eq.s32.totalorder %s2304, 0
  %p2306 = pneg %p2305
  %2308 = shalt.err (%p2306)
  %s2309 = scalar_lea.sflag [#allocation3], 1
  %2310 = vsyncmov %s2309
  %s2311 = vpop.sfrf %2310
  %p2312 = scmp.eq.s32.totalorder %s2311, 0
  %p2313 = pneg %p2312
  %2315 = shalt.err (%p2313)

</llo_original>
